<compile_context>
chip_gen: v6e
topology: v6e:2x2x1
jax: 0.10.0
libtpu: 0.0.40
codegen_flags: <defaults>
</compile_context>

<pallas_src>
import functools

import jax
import jax.numpy as jnp
from jax.experimental import pallas as pl
from jax.experimental.pallas import tpu as pltpu

# Keep the pure-JAX reference matmuls at full f32 so the parity check is tight.
jax.config.update("jax_default_matmul_precision", "highest")


# ----------------------------- Pallas kernel ------------------------------ #

def _kan_layer_compute(xT, knotsT, invT, w_stackedT, biasT, *, k,
                       use_bf16_mxu=False):
    """One KAN layer on an in-VMEM activation tile, feature-major.

    xT:         (n_in_p, B) f32   -- batch on lanes
    knotsT:     (n_in_p, M)       -- extended knots per input, M = G + 2k
    invT:       (k, n_in_p, M)    -- invT[p-1, :, i] = 1/(t[i+p]-t[i])
    w_stackedT: (n_out_p, (n_basis+1)*n_in_p) = [W_base ; coef]^T
    biasT:      (n_out_p, 1)
    returns     (n_out_p, B) f32
    """
    M = knotsT.shape[1]
    n_basis = M - 1 - k

    # Knot columns stay (n_in, 1); the lane broadcast against (n_in, B) happens
    # inside each elementwise op (no full-tile knot broadcasts materialized).
    kb = [knotsT[:, i:i + 1] for i in range(M)]

    # Order-0 indicator basis (half-open intervals; matches _ref_forward).
    basis = [
        jnp.where((xT >= kb[i]) & (xT < kb[i + 1]), 1.0, 0.0).astype(jnp.float32)
        for i in range(M - 1)
    ]

    # Cox-de Boor recursion with precomputed reciprocal spans (no divides).
    for p in range(1, k + 1):
        new_basis = []
        for i in range(M - 1 - p):
            inv_l = invT[p - 1, :, i:i + 1]          # (n_in, 1)
            inv_r = invT[p - 1, :, i + 1:i + 2]      # (n_in, 1)
            left = (xT - kb[i]) * inv_l * basis[i]
            right = (kb[i + p + 1] - xT) * inv_r * basis[i + 1]
            new_basis.append(left + right)
        basis = new_basis
    assert len(basis) == n_basis

    # Fused feature block along sublanes: [silu(x); B_0; ...; B_{n_basis-1}].
    # Every piece has n_in_p (multiple of 8) rows -> 8-aligned concat.
    base = xT * jax.nn.sigmoid(xT)                       # SiLU (EUP path)
    featT = jnp.concatenate([base] + basis, axis=0)      # (K, B)

    if use_bf16_mxu:
        acc = jnp.dot(w_stackedT.astype(jnp.bfloat16),
                      featT.astype(jnp.bfloat16),
                      preferred_element_type=jnp.float32)
    else:
        acc = jnp.dot(w_stackedT, featT, preferred_element_type=jnp.float32)

    return acc + biasT


def _kan_network_kernel(*refs, k, num_layers, use_bf16_mxu):
    """Whole-network forward on one batch tile (transposed activations).

    refs = (xT_ref,
            [knotsT_ref, invT_ref, wT_ref, biasT_ref] * num_layers,
            outT_ref)
    """
    x_ref = refs[0]
    out_ref = refs[1 + 4 * num_layers]

    h = x_ref[...].astype(jnp.float32)                   # (n_in_p, B)
    for l in range(num_layers):
        knots = refs[1 + 4 * l][...]
        inv = refs[2 + 4 * l][...]
        w = refs[3 + 4 * l][...]
        bias = refs[4 + 4 * l][...]
        h = _kan_layer_compute(h, knots, inv, w, bias, k=k,
                               use_bf16_mxu=use_bf16_mxu)
    out_ref[...] = h.astype(out_ref.dtype)


# ------------------------------- wrapper ----------------------------------- #

def _round_up(x, m):
    return ((x + m - 1) // m) * m


def _choose_batch_tiling(batch, max_tile=2048):
    """Lane-dense batch tile (multiple of 128); >=2 grid steps when possible."""
    b128 = _round_up(batch, 128)
    if b128 <= 128:
        tile = 128
    else:
        tile = min(max_tile, _round_up(b128 // 2, 128))
    total = _round_up(b128, tile)
    return tile, total


def _compute_inv_spans_T(grid_ext, k):
    """(k, n_in, M) with [p-1, :, i] = 1/(grid[i+p]-grid[i]) (0 if degenerate)."""
    levels = []
    for p in range(1, k + 1):
        span = grid_ext[p:, :] - grid_ext[:-p, :]              # (M-p, n_in)
        inv = jnp.where(span == 0, 0.0, 1.0 / jnp.where(span == 0, 1.0, span))
        inv = jnp.pad(inv, ((0, p), (0, 0)))                   # (M, n_in)
        levels.append(inv.T)                                   # (n_in, M)
    return jnp.stack(levels, axis=0).astype(jnp.float32)       # (k, n_in, M)


def kan_forward(x, params, *, k, use_bf16_mxu=False, max_tile=2048):
    """Fused forward over all KAN layers in a single pallas_call.

    x: (B, n[0]) f32.
    params: list of (grid_ext (M, n_in), w_base (n_in, n_out),
                     coef (n_basis, n_in, n_out), bias (1, n_out)).
    """
    batch, n0 = x.shape
    num_layers = len(params)

    b_tile, b_total = _choose_batch_tiling(batch, max_tile)
    n0_p = _round_up(n0, 8)

    # Transposed, feature/batch-padded input: (n0_p, b_total).
    xT = jnp.pad(x.astype(jnp.float32).T,
                 ((0, n0_p - n0), (0, b_total - batch)))

    kernel_inputs = [xT]
    in_specs = [pl.BlockSpec((n0_p, b_tile), lambda b: (0, b))]

    n_out_last = None
    n_out_last_p = None
    for grid_ext, w_base, coef, bias in params:
        n_basis, n_in, n_out = coef.shape
        n_in_p = _round_up(n_in, 8)
        n_out_p = _round_up(n_out, 8)
        n_out_last, n_out_last_p = n_out, n_out_p

        # Pad features to multiples of 8 (zero weight rows/cols -> padded
        # features contribute exactly 0; padded knots copied from edge so the
        # spline math stays finite).
        grid_p = jnp.pad(grid_ext, ((0, 0), (0, n_in_p - n_in)), mode="edge")
        knotsT = grid_p.T.astype(jnp.float32)                   # (n_in_p, M)
        invT = _compute_inv_spans_T(grid_p, k)                  # (k, n_in_p, M)
        w_base_p = jnp.pad(w_base, ((0, n_in_p - n_in), (0, n_out_p - n_out)))
        coef_p = jnp.pad(coef, ((0, 0), (0, n_in_p - n_in), (0, n_out_p - n_out)))
        bias_p = jnp.pad(bias, ((0, 0), (0, n_out_p - n_out)))

        # Stacked weight matching featT row order [silu ; basis_0 ; ...].
        w_stacked = jnp.concatenate(
            [w_base_p, coef_p.reshape(n_basis * n_in_p, n_out_p)], axis=0)
        w_stackedT = w_stacked.T.astype(jnp.float32)            # (n_out_p, K)
        biasT = bias_p.T.astype(jnp.float32)                    # (n_out_p, 1)

        kernel_inputs += [knotsT, invT, w_stackedT, biasT]
        # Full-extent blocks with constant index maps: DMA'd once, then kept
        # VMEM-resident across all batch-grid steps (weights are tiny).
        in_specs += [
            pl.BlockSpec(knotsT.shape, lambda b: (0, 0)),
            pl.BlockSpec(invT.shape, lambda b: (0, 0, 0)),
            pl.BlockSpec(w_stackedT.shape, lambda b: (0, 0)),
            pl.BlockSpec(biasT.shape, lambda b: (0, 0)),
        ]

    kernel = functools.partial(_kan_network_kernel, k=k,
                               num_layers=num_layers,
                               use_bf16_mxu=use_bf16_mxu)

    outT = pl.pallas_call(
        kernel,
        out_shape=jax.ShapeDtypeStruct((n_out_last_p, b_total), jnp.float32),
        grid=(b_total // b_tile,),
        in_specs=in_specs,
        out_specs=pl.BlockSpec((n_out_last_p, b_tile), lambda b: (0, b)),
        compiler_params=pltpu.CompilerParams(
            dimension_semantics=("parallel",),      # megacore-shard batch axis
            vmem_limit_bytes=32 * 1024 * 1024,      # safe on v5e/v6e/v7x
        ),
    )(*kernel_inputs)

    # Back to batch-major, strip feature/batch padding.
    return outT.T[:batch, :n_out_last].astype(x.dtype)


# --------------------------- parameter setup ------------------------------- #

def init_kan_network(key, n, grid_points, grid_range, k):
    """Deterministic synthetic parameters mirroring KANNetwork.__init__ shapes."""
    grid = jnp.linspace(grid_range[0], grid_range[-1], grid_points)    # (G,)
    h = (grid_range[-1] - grid_range[0]) / (grid_points - 1)
    left = grid[0] - h * jnp.arange(k, 0, -1, dtype=jnp.float32)
    right = grid[-1] + h * jnp.arange(1, k + 1, dtype=jnp.float32)
    grid_ext_1d = jnp.concatenate([left, grid, right]).astype(jnp.float32)  # (G+2k,)
    n_basis = grid_points + k - 1

    params = []
    for nin, nout in zip(n[:-1], n[1:]):
        key, k1, k2, k3 = jax.random.split(key, 4)
        grid_ext = jnp.tile(grid_ext_1d[:, None], (1, nin))            # (M, nin)
        w_base = (jax.random.normal(k1, (nin, nout), jnp.float32)
                  / jnp.sqrt(jnp.float32(nin)))
        coef = 0.1 * jax.random.normal(k2, (n_basis, nin, nout), jnp.float32)
        bias = 0.01 * jax.random.normal(k3, (1, nout), jnp.float32)
        params.append((grid_ext, w_base, coef, bias))
    return params


# -------------------------- pure-JAX reference ----------------------------- #

def _ref_forward(x, params, k):
    # NOTE: half-open order-0 intervals (x >= t_i & x < t_{i+1}); an input
    # exactly at the right grid boundary gets a zero spline basis (base+bias
    # only), matching the kernel.
    for grid_ext, w_base, coef, bias in params:
        M = grid_ext.shape[0]
        base = jax.nn.silu(x)
        acc = base @ w_base
        knots = [grid_ext[i:i + 1, :] for i in range(M)]
        basis = [jnp.where((x >= knots[i]) & (x < knots[i + 1]), 1.0, 0.0)
                 for i in range(M - 1)]
        for p in range(1, k + 1):
            basis = [
                (x - knots[i]) / (knots[i + p] - knots[i]) * basis[i]
                + (knots[i + p + 1] - x)
                / (knots[i + p + 1] - knots[i + 1]) * basis[i + 1]
                for i in range(M - 1 - p)
            ]
        for m in range(len(basis)):
            acc = acc + basis[m] @ coef[m]
        x = acc + bias
    return x


# --------------------------------- main ------------------------------------ #

if __name__ == "__main__":
    key = jax.random.PRNGKey(0)
    n = [4, 32, 16]                 # KANNetwork(n=[4,32,16], ...)
    grid_points = 8
    grid_range = (-1.0, 1.0)
    k = 3
    batch = 8

    key, xkey = jax.random.split(key)
    x = jax.random.uniform(xkey, (batch, n[0]), jnp.float32,
                           minval=-1.0, maxval=1.0)
    params = init_kan_network(key, n, grid_points, grid_range, k)

    out = kan_forward(x, params, k=k)
    out = jax.block_until_ready(out)

    ref = _ref_forward(x, params, k)
    assert out.shape == (batch, n[-1])
    assert bool(jnp.allclose(out, ref, atol=2e-4, rtol=2e-4)), "mismatch vs reference"

    print("KERNEL_OK")
</pallas_src>

<mosaic_0001>
module attributes {stable_mosaic.version = 11 : i64} {
  func.func @_kan_network_kernel(%arg0: i32, %arg1: memref<8x128xf32, #tpu.memory_space<vmem>>, %arg2: memref<8x14xf32, #tpu.memory_space<vmem>>, %arg3: memref<3x8x14xf32, #tpu.memory_space<vmem>>, %arg4: memref<32x88xf32, #tpu.memory_space<vmem>>, %arg5: memref<32x1xf32, #tpu.memory_space<vmem>>, %arg6: memref<32x14xf32, #tpu.memory_space<vmem>>, %arg7: memref<3x32x14xf32, #tpu.memory_space<vmem>>, %arg8: memref<16x352xf32, #tpu.memory_space<vmem>>, %arg9: memref<16x1xf32, #tpu.memory_space<vmem>>, %arg10: memref<16x128xf32, #tpu.memory_space<vmem>>) attributes {dimension_semantics = [#tpu.dimension_semantics<parallel>], iteration_bounds = array<i64: 1>, scalar_prefetch = 0 : i64, scratch_operands = 0 : i64, tpu.core_type = #tpu.core_type<tc>, window_params = [{transform_indices = @transform_0, window_bounds = array<i64: 8, 128>}, {pipeline_mode = #tpu.pipeline_mode<synchronous>, transform_indices = @transform_1, window_bounds = array<i64: 8, 14>}, {pipeline_mode = #tpu.pipeline_mode<synchronous>, transform_indices = @transform_2, window_bounds = array<i64: 3, 8, 14>}, {pipeline_mode = #tpu.pipeline_mode<synchronous>, transform_indices = @transform_3, window_bounds = array<i64: 32, 88>}, {pipeline_mode = #tpu.pipeline_mode<synchronous>, transform_indices = @transform_4, window_bounds = array<i64: 32, 1>}, {pipeline_mode = #tpu.pipeline_mode<synchronous>, transform_indices = @transform_5, window_bounds = array<i64: 32, 14>}, {pipeline_mode = #tpu.pipeline_mode<synchronous>, transform_indices = @transform_6, window_bounds = array<i64: 3, 32, 14>}, {pipeline_mode = #tpu.pipeline_mode<synchronous>, transform_indices = @transform_7, window_bounds = array<i64: 16, 352>}, {pipeline_mode = #tpu.pipeline_mode<synchronous>, transform_indices = @transform_8, window_bounds = array<i64: 16, 1>}, {transform_indices = @transform_9, window_bounds = array<i64: 16, 128>}]} {
    %c0 = arith.constant 0 : index
    %c0_0 = arith.constant 0 : index
    %0 = vector.load %arg1[%c0, %c0_0] : memref<8x128xf32, #tpu.memory_space<vmem>>, vector<8x128xf32>
    %c0_1 = arith.constant 0 : index
    %c0_2 = arith.constant 0 : index
    %1 = vector.load %arg2[%c0_1, %c0_2] : memref<8x14xf32, #tpu.memory_space<vmem>>, vector<8x14xf32>
    %c0_3 = arith.constant 0 : index
    %c0_4 = arith.constant 0 : index
    %c0_5 = arith.constant 0 : index
    %2 = vector.load %arg3[%c0_3, %c0_4, %c0_5] : memref<3x8x14xf32, #tpu.memory_space<vmem>>, vector<3x8x14xf32>
    %c0_6 = arith.constant 0 : index
    %c0_7 = arith.constant 0 : index
    %3 = vector.load %arg4[%c0_6, %c0_7] : memref<32x88xf32, #tpu.memory_space<vmem>>, vector<32x88xf32>
    %c0_8 = arith.constant 0 : index
    %c0_9 = arith.constant 0 : index
    %4 = vector.load %arg5[%c0_8, %c0_9] : memref<32x1xf32, #tpu.memory_space<vmem>>, vector<32x1xf32>
    %5 = vector.extract_strided_slice %1 {offsets = [0, 0], sizes = [8, 1], strides = [1, 1]} : vector<8x14xf32> to vector<8x1xf32>
    %6 = vector.extract_strided_slice %1 {offsets = [0, 1], sizes = [8, 1], strides = [1, 1]} : vector<8x14xf32> to vector<8x1xf32>
    %7 = vector.extract_strided_slice %1 {offsets = [0, 2], sizes = [8, 1], strides = [1, 1]} : vector<8x14xf32> to vector<8x1xf32>
    %8 = vector.extract_strided_slice %1 {offsets = [0, 3], sizes = [8, 1], strides = [1, 1]} : vector<8x14xf32> to vector<8x1xf32>
    %9 = vector.extract_strided_slice %1 {offsets = [0, 4], sizes = [8, 1], strides = [1, 1]} : vector<8x14xf32> to vector<8x1xf32>
    %10 = vector.extract_strided_slice %1 {offsets = [0, 5], sizes = [8, 1], strides = [1, 1]} : vector<8x14xf32> to vector<8x1xf32>
    %11 = vector.extract_strided_slice %1 {offsets = [0, 6], sizes = [8, 1], strides = [1, 1]} : vector<8x14xf32> to vector<8x1xf32>
    %12 = vector.extract_strided_slice %1 {offsets = [0, 7], sizes = [8, 1], strides = [1, 1]} : vector<8x14xf32> to vector<8x1xf32>
    %13 = vector.extract_strided_slice %1 {offsets = [0, 8], sizes = [8, 1], strides = [1, 1]} : vector<8x14xf32> to vector<8x1xf32>
    %14 = vector.extract_strided_slice %1 {offsets = [0, 9], sizes = [8, 1], strides = [1, 1]} : vector<8x14xf32> to vector<8x1xf32>
    %15 = vector.extract_strided_slice %1 {offsets = [0, 10], sizes = [8, 1], strides = [1, 1]} : vector<8x14xf32> to vector<8x1xf32>
    %16 = vector.extract_strided_slice %1 {offsets = [0, 11], sizes = [8, 1], strides = [1, 1]} : vector<8x14xf32> to vector<8x1xf32>
    %17 = vector.extract_strided_slice %1 {offsets = [0, 12], sizes = [8, 1], strides = [1, 1]} : vector<8x14xf32> to vector<8x1xf32>
    %18 = vector.extract_strided_slice %1 {offsets = [0, 13], sizes = [8, 1], strides = [1, 1]} : vector<8x14xf32> to vector<8x1xf32>
    %19 = vector.broadcast %5 : vector<8x1xf32> to vector<8x128xf32>
    %20 = arith.cmpf oge, %0, %19 : vector<8x128xf32>
    %21 = vector.broadcast %6 : vector<8x1xf32> to vector<8x128xf32>
    %22 = arith.cmpf olt, %0, %21 : vector<8x128xf32>
    %23 = arith.andi %20, %22 : vector<8x128xi1>
    %cst = arith.constant 1.000000e+00 : f32
    %cst_10 = arith.constant 0.000000e+00 : f32
    %24 = vector.broadcast %cst : f32 to vector<8x128xf32>
    %25 = vector.broadcast %cst_10 : f32 to vector<8x128xf32>
    %26 = arith.select %23, %24, %25 : vector<8x128xi1>, vector<8x128xf32>
    %27 = vector.broadcast %6 : vector<8x1xf32> to vector<8x128xf32>
    %28 = arith.cmpf oge, %0, %27 : vector<8x128xf32>
    %29 = vector.broadcast %7 : vector<8x1xf32> to vector<8x128xf32>
    %30 = arith.cmpf olt, %0, %29 : vector<8x128xf32>
    %31 = arith.andi %28, %30 : vector<8x128xi1>
    %cst_11 = arith.constant 1.000000e+00 : f32
    %cst_12 = arith.constant 0.000000e+00 : f32
    %32 = vector.broadcast %cst_11 : f32 to vector<8x128xf32>
    %33 = vector.broadcast %cst_12 : f32 to vector<8x128xf32>
    %34 = arith.select %31, %32, %33 : vector<8x128xi1>, vector<8x128xf32>
    %35 = vector.broadcast %7 : vector<8x1xf32> to vector<8x128xf32>
    %36 = arith.cmpf oge, %0, %35 : vector<8x128xf32>
    %37 = vector.broadcast %8 : vector<8x1xf32> to vector<8x128xf32>
    %38 = arith.cmpf olt, %0, %37 : vector<8x128xf32>
    %39 = arith.andi %36, %38 : vector<8x128xi1>
    %cst_13 = arith.constant 1.000000e+00 : f32
    %cst_14 = arith.constant 0.000000e+00 : f32
    %40 = vector.broadcast %cst_13 : f32 to vector<8x128xf32>
    %41 = vector.broadcast %cst_14 : f32 to vector<8x128xf32>
    %42 = arith.select %39, %40, %41 : vector<8x128xi1>, vector<8x128xf32>
    %43 = vector.broadcast %8 : vector<8x1xf32> to vector<8x128xf32>
    %44 = arith.cmpf oge, %0, %43 : vector<8x128xf32>
    %45 = vector.broadcast %9 : vector<8x1xf32> to vector<8x128xf32>
    %46 = arith.cmpf olt, %0, %45 : vector<8x128xf32>
    %47 = arith.andi %44, %46 : vector<8x128xi1>
    %cst_15 = arith.constant 1.000000e+00 : f32
    %cst_16 = arith.constant 0.000000e+00 : f32
    %48 = vector.broadcast %cst_15 : f32 to vector<8x128xf32>
    %49 = vector.broadcast %cst_16 : f32 to vector<8x128xf32>
    %50 = arith.select %47, %48, %49 : vector<8x128xi1>, vector<8x128xf32>
    %51 = vector.broadcast %9 : vector<8x1xf32> to vector<8x128xf32>
    %52 = arith.cmpf oge, %0, %51 : vector<8x128xf32>
    %53 = vector.broadcast %10 : vector<8x1xf32> to vector<8x128xf32>
    %54 = arith.cmpf olt, %0, %53 : vector<8x128xf32>
    %55 = arith.andi %52, %54 : vector<8x128xi1>
    %cst_17 = arith.constant 1.000000e+00 : f32
    %cst_18 = arith.constant 0.000000e+00 : f32
    %56 = vector.broadcast %cst_17 : f32 to vector<8x128xf32>
    %57 = vector.broadcast %cst_18 : f32 to vector<8x128xf32>
    %58 = arith.select %55, %56, %57 : vector<8x128xi1>, vector<8x128xf32>
    %59 = vector.broadcast %10 : vector<8x1xf32> to vector<8x128xf32>
    %60 = arith.cmpf oge, %0, %59 : vector<8x128xf32>
    %61 = vector.broadcast %11 : vector<8x1xf32> to vector<8x128xf32>
    %62 = arith.cmpf olt, %0, %61 : vector<8x128xf32>
    %63 = arith.andi %60, %62 : vector<8x128xi1>
    %cst_19 = arith.constant 1.000000e+00 : f32
    %cst_20 = arith.constant 0.000000e+00 : f32
    %64 = vector.broadcast %cst_19 : f32 to vector<8x128xf32>
    %65 = vector.broadcast %cst_20 : f32 to vector<8x128xf32>
    %66 = arith.select %63, %64, %65 : vector<8x128xi1>, vector<8x128xf32>
    %67 = vector.broadcast %11 : vector<8x1xf32> to vector<8x128xf32>
    %68 = arith.cmpf oge, %0, %67 : vector<8x128xf32>
    %69 = vector.broadcast %12 : vector<8x1xf32> to vector<8x128xf32>
    %70 = arith.cmpf olt, %0, %69 : vector<8x128xf32>
    %71 = arith.andi %68, %70 : vector<8x128xi1>
    %cst_21 = arith.constant 1.000000e+00 : f32
    %cst_22 = arith.constant 0.000000e+00 : f32
    %72 = vector.broadcast %cst_21 : f32 to vector<8x128xf32>
    %73 = vector.broadcast %cst_22 : f32 to vector<8x128xf32>
    %74 = arith.select %71, %72, %73 : vector<8x128xi1>, vector<8x128xf32>
    %75 = vector.broadcast %12 : vector<8x1xf32> to vector<8x128xf32>
    %76 = arith.cmpf oge, %0, %75 : vector<8x128xf32>
    %77 = vector.broadcast %13 : vector<8x1xf32> to vector<8x128xf32>
    %78 = arith.cmpf olt, %0, %77 : vector<8x128xf32>
    %79 = arith.andi %76, %78 : vector<8x128xi1>
    %cst_23 = arith.constant 1.000000e+00 : f32
    %cst_24 = arith.constant 0.000000e+00 : f32
    %80 = vector.broadcast %cst_23 : f32 to vector<8x128xf32>
    %81 = vector.broadcast %cst_24 : f32 to vector<8x128xf32>
    %82 = arith.select %79, %80, %81 : vector<8x128xi1>, vector<8x128xf32>
    %83 = vector.broadcast %13 : vector<8x1xf32> to vector<8x128xf32>
    %84 = arith.cmpf oge, %0, %83 : vector<8x128xf32>
    %85 = vector.broadcast %14 : vector<8x1xf32> to vector<8x128xf32>
    %86 = arith.cmpf olt, %0, %85 : vector<8x128xf32>
    %87 = arith.andi %84, %86 : vector<8x128xi1>
    %cst_25 = arith.constant 1.000000e+00 : f32
    %cst_26 = arith.constant 0.000000e+00 : f32
    %88 = vector.broadcast %cst_25 : f32 to vector<8x128xf32>
    %89 = vector.broadcast %cst_26 : f32 to vector<8x128xf32>
    %90 = arith.select %87, %88, %89 : vector<8x128xi1>, vector<8x128xf32>
    %91 = vector.broadcast %14 : vector<8x1xf32> to vector<8x128xf32>
    %92 = arith.cmpf oge, %0, %91 : vector<8x128xf32>
    %93 = vector.broadcast %15 : vector<8x1xf32> to vector<8x128xf32>
    %94 = arith.cmpf olt, %0, %93 : vector<8x128xf32>
    %95 = arith.andi %92, %94 : vector<8x128xi1>
    %cst_27 = arith.constant 1.000000e+00 : f32
    %cst_28 = arith.constant 0.000000e+00 : f32
    %96 = vector.broadcast %cst_27 : f32 to vector<8x128xf32>
    %97 = vector.broadcast %cst_28 : f32 to vector<8x128xf32>
    %98 = arith.select %95, %96, %97 : vector<8x128xi1>, vector<8x128xf32>
    %99 = vector.broadcast %15 : vector<8x1xf32> to vector<8x128xf32>
    %100 = arith.cmpf oge, %0, %99 : vector<8x128xf32>
    %101 = vector.broadcast %16 : vector<8x1xf32> to vector<8x128xf32>
    %102 = arith.cmpf olt, %0, %101 : vector<8x128xf32>
    %103 = arith.andi %100, %102 : vector<8x128xi1>
    %cst_29 = arith.constant 1.000000e+00 : f32
    %cst_30 = arith.constant 0.000000e+00 : f32
    %104 = vector.broadcast %cst_29 : f32 to vector<8x128xf32>
    %105 = vector.broadcast %cst_30 : f32 to vector<8x128xf32>
    %106 = arith.select %103, %104, %105 : vector<8x128xi1>, vector<8x128xf32>
    %107 = vector.broadcast %16 : vector<8x1xf32> to vector<8x128xf32>
    %108 = arith.cmpf oge, %0, %107 : vector<8x128xf32>
    %109 = vector.broadcast %17 : vector<8x1xf32> to vector<8x128xf32>
    %110 = arith.cmpf olt, %0, %109 : vector<8x128xf32>
    %111 = arith.andi %108, %110 : vector<8x128xi1>
    %cst_31 = arith.constant 1.000000e+00 : f32
    %cst_32 = arith.constant 0.000000e+00 : f32
    %112 = vector.broadcast %cst_31 : f32 to vector<8x128xf32>
    %113 = vector.broadcast %cst_32 : f32 to vector<8x128xf32>
    %114 = arith.select %111, %112, %113 : vector<8x128xi1>, vector<8x128xf32>
    %115 = vector.broadcast %17 : vector<8x1xf32> to vector<8x128xf32>
    %116 = arith.cmpf oge, %0, %115 : vector<8x128xf32>
    %117 = vector.broadcast %18 : vector<8x1xf32> to vector<8x128xf32>
    %118 = arith.cmpf olt, %0, %117 : vector<8x128xf32>
    %119 = arith.andi %116, %118 : vector<8x128xi1>
    %cst_33 = arith.constant 1.000000e+00 : f32
    %cst_34 = arith.constant 0.000000e+00 : f32
    %120 = vector.broadcast %cst_33 : f32 to vector<8x128xf32>
    %121 = vector.broadcast %cst_34 : f32 to vector<8x128xf32>
    %122 = arith.select %119, %120, %121 : vector<8x128xi1>, vector<8x128xf32>
    %123 = vector.extract_strided_slice %2 {offsets = [0, 0, 0], sizes = [1, 8, 1], strides = [1, 1, 1]} : vector<3x8x14xf32> to vector<1x8x1xf32>
    %124 = vector.shape_cast %123 : vector<1x8x1xf32> to vector<8x1xf32>
    %125 = vector.extract_strided_slice %2 {offsets = [0, 0, 1], sizes = [1, 8, 1], strides = [1, 1, 1]} : vector<3x8x14xf32> to vector<1x8x1xf32>
    %126 = vector.shape_cast %125 : vector<1x8x1xf32> to vector<8x1xf32>
    %127 = vector.broadcast %5 : vector<8x1xf32> to vector<8x128xf32>
    %128 = arith.subf %0, %127 : vector<8x128xf32>
    %129 = vector.broadcast %124 : vector<8x1xf32> to vector<8x128xf32>
    %130 = arith.mulf %128, %129 : vector<8x128xf32>
    %131 = arith.mulf %130, %26 : vector<8x128xf32>
    %132 = vector.broadcast %7 : vector<8x1xf32> to vector<8x128xf32>
    %133 = arith.subf %132, %0 : vector<8x128xf32>
    %134 = vector.broadcast %126 : vector<8x1xf32> to vector<8x128xf32>
    %135 = arith.mulf %133, %134 : vector<8x128xf32>
    %136 = arith.mulf %135, %34 : vector<8x128xf32>
    %137 = arith.addf %131, %136 : vector<8x128xf32>
    %138 = vector.extract_strided_slice %2 {offsets = [0, 0, 1], sizes = [1, 8, 1], strides = [1, 1, 1]} : vector<3x8x14xf32> to vector<1x8x1xf32>
    %139 = vector.shape_cast %138 : vector<1x8x1xf32> to vector<8x1xf32>
    %140 = vector.extract_strided_slice %2 {offsets = [0, 0, 2], sizes = [1, 8, 1], strides = [1, 1, 1]} : vector<3x8x14xf32> to vector<1x8x1xf32>
    %141 = vector.shape_cast %140 : vector<1x8x1xf32> to vector<8x1xf32>
    %142 = vector.broadcast %6 : vector<8x1xf32> to vector<8x128xf32>
    %143 = arith.subf %0, %142 : vector<8x128xf32>
    %144 = vector.broadcast %139 : vector<8x1xf32> to vector<8x128xf32>
    %145 = arith.mulf %143, %144 : vector<8x128xf32>
    %146 = arith.mulf %145, %34 : vector<8x128xf32>
    %147 = vector.broadcast %8 : vector<8x1xf32> to vector<8x128xf32>
    %148 = arith.subf %147, %0 : vector<8x128xf32>
    %149 = vector.broadcast %141 : vector<8x1xf32> to vector<8x128xf32>
    %150 = arith.mulf %148, %149 : vector<8x128xf32>
    %151 = arith.mulf %150, %42 : vector<8x128xf32>
    %152 = arith.addf %146, %151 : vector<8x128xf32>
    %153 = vector.extract_strided_slice %2 {offsets = [0, 0, 2], sizes = [1, 8, 1], strides = [1, 1, 1]} : vector<3x8x14xf32> to vector<1x8x1xf32>
    %154 = vector.shape_cast %153 : vector<1x8x1xf32> to vector<8x1xf32>
    %155 = vector.extract_strided_slice %2 {offsets = [0, 0, 3], sizes = [1, 8, 1], strides = [1, 1, 1]} : vector<3x8x14xf32> to vector<1x8x1xf32>
    %156 = vector.shape_cast %155 : vector<1x8x1xf32> to vector<8x1xf32>
    %157 = vector.broadcast %7 : vector<8x1xf32> to vector<8x128xf32>
    %158 = arith.subf %0, %157 : vector<8x128xf32>
    %159 = vector.broadcast %154 : vector<8x1xf32> to vector<8x128xf32>
    %160 = arith.mulf %158, %159 : vector<8x128xf32>
    %161 = arith.mulf %160, %42 : vector<8x128xf32>
    %162 = vector.broadcast %9 : vector<8x1xf32> to vector<8x128xf32>
    %163 = arith.subf %162, %0 : vector<8x128xf32>
    %164 = vector.broadcast %156 : vector<8x1xf32> to vector<8x128xf32>
    %165 = arith.mulf %163, %164 : vector<8x128xf32>
    %166 = arith.mulf %165, %50 : vector<8x128xf32>
    %167 = arith.addf %161, %166 : vector<8x128xf32>
    %168 = vector.extract_strided_slice %2 {offsets = [0, 0, 3], sizes = [1, 8, 1], strides = [1, 1, 1]} : vector<3x8x14xf32> to vector<1x8x1xf32>
    %169 = vector.shape_cast %168 : vector<1x8x1xf32> to vector<8x1xf32>
    %170 = vector.extract_strided_slice %2 {offsets = [0, 0, 4], sizes = [1, 8, 1], strides = [1, 1, 1]} : vector<3x8x14xf32> to vector<1x8x1xf32>
    %171 = vector.shape_cast %170 : vector<1x8x1xf32> to vector<8x1xf32>
    %172 = vector.broadcast %8 : vector<8x1xf32> to vector<8x128xf32>
    %173 = arith.subf %0, %172 : vector<8x128xf32>
    %174 = vector.broadcast %169 : vector<8x1xf32> to vector<8x128xf32>
    %175 = arith.mulf %173, %174 : vector<8x128xf32>
    %176 = arith.mulf %175, %50 : vector<8x128xf32>
    %177 = vector.broadcast %10 : vector<8x1xf32> to vector<8x128xf32>
    %178 = arith.subf %177, %0 : vector<8x128xf32>
    %179 = vector.broadcast %171 : vector<8x1xf32> to vector<8x128xf32>
    %180 = arith.mulf %178, %179 : vector<8x128xf32>
    %181 = arith.mulf %180, %58 : vector<8x128xf32>
    %182 = arith.addf %176, %181 : vector<8x128xf32>
    %183 = vector.extract_strided_slice %2 {offsets = [0, 0, 4], sizes = [1, 8, 1], strides = [1, 1, 1]} : vector<3x8x14xf32> to vector<1x8x1xf32>
    %184 = vector.shape_cast %183 : vector<1x8x1xf32> to vector<8x1xf32>
    %185 = vector.extract_strided_slice %2 {offsets = [0, 0, 5], sizes = [1, 8, 1], strides = [1, 1, 1]} : vector<3x8x14xf32> to vector<1x8x1xf32>
    %186 = vector.shape_cast %185 : vector<1x8x1xf32> to vector<8x1xf32>
    %187 = vector.broadcast %9 : vector<8x1xf32> to vector<8x128xf32>
    %188 = arith.subf %0, %187 : vector<8x128xf32>
    %189 = vector.broadcast %184 : vector<8x1xf32> to vector<8x128xf32>
    %190 = arith.mulf %188, %189 : vector<8x128xf32>
    %191 = arith.mulf %190, %58 : vector<8x128xf32>
    %192 = vector.broadcast %11 : vector<8x1xf32> to vector<8x128xf32>
    %193 = arith.subf %192, %0 : vector<8x128xf32>
    %194 = vector.broadcast %186 : vector<8x1xf32> to vector<8x128xf32>
    %195 = arith.mulf %193, %194 : vector<8x128xf32>
    %196 = arith.mulf %195, %66 : vector<8x128xf32>
    %197 = arith.addf %191, %196 : vector<8x128xf32>
    %198 = vector.extract_strided_slice %2 {offsets = [0, 0, 5], sizes = [1, 8, 1], strides = [1, 1, 1]} : vector<3x8x14xf32> to vector<1x8x1xf32>
    %199 = vector.shape_cast %198 : vector<1x8x1xf32> to vector<8x1xf32>
    %200 = vector.extract_strided_slice %2 {offsets = [0, 0, 6], sizes = [1, 8, 1], strides = [1, 1, 1]} : vector<3x8x14xf32> to vector<1x8x1xf32>
    %201 = vector.shape_cast %200 : vector<1x8x1xf32> to vector<8x1xf32>
    %202 = vector.broadcast %10 : vector<8x1xf32> to vector<8x128xf32>
    %203 = arith.subf %0, %202 : vector<8x128xf32>
    %204 = vector.broadcast %199 : vector<8x1xf32> to vector<8x128xf32>
    %205 = arith.mulf %203, %204 : vector<8x128xf32>
    %206 = arith.mulf %205, %66 : vector<8x128xf32>
    %207 = vector.broadcast %12 : vector<8x1xf32> to vector<8x128xf32>
    %208 = arith.subf %207, %0 : vector<8x128xf32>
    %209 = vector.broadcast %201 : vector<8x1xf32> to vector<8x128xf32>
    %210 = arith.mulf %208, %209 : vector<8x128xf32>
    %211 = arith.mulf %210, %74 : vector<8x128xf32>
    %212 = arith.addf %206, %211 : vector<8x128xf32>
    %213 = vector.extract_strided_slice %2 {offsets = [0, 0, 6], sizes = [1, 8, 1], strides = [1, 1, 1]} : vector<3x8x14xf32> to vector<1x8x1xf32>
    %214 = vector.shape_cast %213 : vector<1x8x1xf32> to vector<8x1xf32>
    %215 = vector.extract_strided_slice %2 {offsets = [0, 0, 7], sizes = [1, 8, 1], strides = [1, 1, 1]} : vector<3x8x14xf32> to vector<1x8x1xf32>
    %216 = vector.shape_cast %215 : vector<1x8x1xf32> to vector<8x1xf32>
    %217 = vector.broadcast %11 : vector<8x1xf32> to vector<8x128xf32>
    %218 = arith.subf %0, %217 : vector<8x128xf32>
    %219 = vector.broadcast %214 : vector<8x1xf32> to vector<8x128xf32>
    %220 = arith.mulf %218, %219 : vector<8x128xf32>
    %221 = arith.mulf %220, %74 : vector<8x128xf32>
    %222 = vector.broadcast %13 : vector<8x1xf32> to vector<8x128xf32>
    %223 = arith.subf %222, %0 : vector<8x128xf32>
    %224 = vector.broadcast %216 : vector<8x1xf32> to vector<8x128xf32>
    %225 = arith.mulf %223, %224 : vector<8x128xf32>
    %226 = arith.mulf %225, %82 : vector<8x128xf32>
    %227 = arith.addf %221, %226 : vector<8x128xf32>
    %228 = vector.extract_strided_slice %2 {offsets = [0, 0, 7], sizes = [1, 8, 1], strides = [1, 1, 1]} : vector<3x8x14xf32> to vector<1x8x1xf32>
    %229 = vector.shape_cast %228 : vector<1x8x1xf32> to vector<8x1xf32>
    %230 = vector.extract_strided_slice %2 {offsets = [0, 0, 8], sizes = [1, 8, 1], strides = [1, 1, 1]} : vector<3x8x14xf32> to vector<1x8x1xf32>
    %231 = vector.shape_cast %230 : vector<1x8x1xf32> to vector<8x1xf32>
    %232 = vector.broadcast %12 : vector<8x1xf32> to vector<8x128xf32>
    %233 = arith.subf %0, %232 : vector<8x128xf32>
    %234 = vector.broadcast %229 : vector<8x1xf32> to vector<8x128xf32>
    %235 = arith.mulf %233, %234 : vector<8x128xf32>
    %236 = arith.mulf %235, %82 : vector<8x128xf32>
    %237 = vector.broadcast %14 : vector<8x1xf32> to vector<8x128xf32>
    %238 = arith.subf %237, %0 : vector<8x128xf32>
    %239 = vector.broadcast %231 : vector<8x1xf32> to vector<8x128xf32>
    %240 = arith.mulf %238, %239 : vector<8x128xf32>
    %241 = arith.mulf %240, %90 : vector<8x128xf32>
    %242 = arith.addf %236, %241 : vector<8x128xf32>
    %243 = vector.extract_strided_slice %2 {offsets = [0, 0, 8], sizes = [1, 8, 1], strides = [1, 1, 1]} : vector<3x8x14xf32> to vector<1x8x1xf32>
    %244 = vector.shape_cast %243 : vector<1x8x1xf32> to vector<8x1xf32>
    %245 = vector.extract_strided_slice %2 {offsets = [0, 0, 9], sizes = [1, 8, 1], strides = [1, 1, 1]} : vector<3x8x14xf32> to vector<1x8x1xf32>
    %246 = vector.shape_cast %245 : vector<1x8x1xf32> to vector<8x1xf32>
    %247 = vector.broadcast %13 : vector<8x1xf32> to vector<8x128xf32>
    %248 = arith.subf %0, %247 : vector<8x128xf32>
    %249 = vector.broadcast %244 : vector<8x1xf32> to vector<8x128xf32>
    %250 = arith.mulf %248, %249 : vector<8x128xf32>
    %251 = arith.mulf %250, %90 : vector<8x128xf32>
    %252 = vector.broadcast %15 : vector<8x1xf32> to vector<8x128xf32>
    %253 = arith.subf %252, %0 : vector<8x128xf32>
    %254 = vector.broadcast %246 : vector<8x1xf32> to vector<8x128xf32>
    %255 = arith.mulf %253, %254 : vector<8x128xf32>
    %256 = arith.mulf %255, %98 : vector<8x128xf32>
    %257 = arith.addf %251, %256 : vector<8x128xf32>
    %258 = vector.extract_strided_slice %2 {offsets = [0, 0, 9], sizes = [1, 8, 1], strides = [1, 1, 1]} : vector<3x8x14xf32> to vector<1x8x1xf32>
    %259 = vector.shape_cast %258 : vector<1x8x1xf32> to vector<8x1xf32>
    %260 = vector.extract_strided_slice %2 {offsets = [0, 0, 10], sizes = [1, 8, 1], strides = [1, 1, 1]} : vector<3x8x14xf32> to vector<1x8x1xf32>
    %261 = vector.shape_cast %260 : vector<1x8x1xf32> to vector<8x1xf32>
    %262 = vector.broadcast %14 : vector<8x1xf32> to vector<8x128xf32>
    %263 = arith.subf %0, %262 : vector<8x128xf32>
    %264 = vector.broadcast %259 : vector<8x1xf32> to vector<8x128xf32>
    %265 = arith.mulf %263, %264 : vector<8x128xf32>
    %266 = arith.mulf %265, %98 : vector<8x128xf32>
    %267 = vector.broadcast %16 : vector<8x1xf32> to vector<8x128xf32>
    %268 = arith.subf %267, %0 : vector<8x128xf32>
    %269 = vector.broadcast %261 : vector<8x1xf32> to vector<8x128xf32>
    %270 = arith.mulf %268, %269 : vector<8x128xf32>
    %271 = arith.mulf %270, %106 : vector<8x128xf32>
    %272 = arith.addf %266, %271 : vector<8x128xf32>
    %273 = vector.extract_strided_slice %2 {offsets = [0, 0, 10], sizes = [1, 8, 1], strides = [1, 1, 1]} : vector<3x8x14xf32> to vector<1x8x1xf32>
    %274 = vector.shape_cast %273 : vector<1x8x1xf32> to vector<8x1xf32>
    %275 = vector.extract_strided_slice %2 {offsets = [0, 0, 11], sizes = [1, 8, 1], strides = [1, 1, 1]} : vector<3x8x14xf32> to vector<1x8x1xf32>
    %276 = vector.shape_cast %275 : vector<1x8x1xf32> to vector<8x1xf32>
    %277 = vector.broadcast %15 : vector<8x1xf32> to vector<8x128xf32>
    %278 = arith.subf %0, %277 : vector<8x128xf32>
    %279 = vector.broadcast %274 : vector<8x1xf32> to vector<8x128xf32>
    %280 = arith.mulf %278, %279 : vector<8x128xf32>
    %281 = arith.mulf %280, %106 : vector<8x128xf32>
    %282 = vector.broadcast %17 : vector<8x1xf32> to vector<8x128xf32>
    %283 = arith.subf %282, %0 : vector<8x128xf32>
    %284 = vector.broadcast %276 : vector<8x1xf32> to vector<8x128xf32>
    %285 = arith.mulf %283, %284 : vector<8x128xf32>
    %286 = arith.mulf %285, %114 : vector<8x128xf32>
    %287 = arith.addf %281, %286 : vector<8x128xf32>
    %288 = vector.extract_strided_slice %2 {offsets = [0, 0, 11], sizes = [1, 8, 1], strides = [1, 1, 1]} : vector<3x8x14xf32> to vector<1x8x1xf32>
    %289 = vector.shape_cast %288 : vector<1x8x1xf32> to vector<8x1xf32>
    %290 = vector.extract_strided_slice %2 {offsets = [0, 0, 12], sizes = [1, 8, 1], strides = [1, 1, 1]} : vector<3x8x14xf32> to vector<1x8x1xf32>
    %291 = vector.shape_cast %290 : vector<1x8x1xf32> to vector<8x1xf32>
    %292 = vector.broadcast %16 : vector<8x1xf32> to vector<8x128xf32>
    %293 = arith.subf %0, %292 : vector<8x128xf32>
    %294 = vector.broadcast %289 : vector<8x1xf32> to vector<8x128xf32>
    %295 = arith.mulf %293, %294 : vector<8x128xf32>
    %296 = arith.mulf %295, %114 : vector<8x128xf32>
    %297 = vector.broadcast %18 : vector<8x1xf32> to vector<8x128xf32>
    %298 = arith.subf %297, %0 : vector<8x128xf32>
    %299 = vector.broadcast %291 : vector<8x1xf32> to vector<8x128xf32>
    %300 = arith.mulf %298, %299 : vector<8x128xf32>
    %301 = arith.mulf %300, %122 : vector<8x128xf32>
    %302 = arith.addf %296, %301 : vector<8x128xf32>
    %303 = vector.extract_strided_slice %2 {offsets = [1, 0, 0], sizes = [1, 8, 1], strides = [1, 1, 1]} : vector<3x8x14xf32> to vector<1x8x1xf32>
    %304 = vector.shape_cast %303 : vector<1x8x1xf32> to vector<8x1xf32>
    %305 = vector.extract_strided_slice %2 {offsets = [1, 0, 1], sizes = [1, 8, 1], strides = [1, 1, 1]} : vector<3x8x14xf32> to vector<1x8x1xf32>
    %306 = vector.shape_cast %305 : vector<1x8x1xf32> to vector<8x1xf32>
    %307 = vector.broadcast %5 : vector<8x1xf32> to vector<8x128xf32>
    %308 = arith.subf %0, %307 : vector<8x128xf32>
    %309 = vector.broadcast %304 : vector<8x1xf32> to vector<8x128xf32>
    %310 = arith.mulf %308, %309 : vector<8x128xf32>
    %311 = arith.mulf %310, %137 : vector<8x128xf32>
    %312 = vector.broadcast %8 : vector<8x1xf32> to vector<8x128xf32>
    %313 = arith.subf %312, %0 : vector<8x128xf32>
    %314 = vector.broadcast %306 : vector<8x1xf32> to vector<8x128xf32>
    %315 = arith.mulf %313, %314 : vector<8x128xf32>
    %316 = arith.mulf %315, %152 : vector<8x128xf32>
    %317 = arith.addf %311, %316 : vector<8x128xf32>
    %318 = vector.extract_strided_slice %2 {offsets = [1, 0, 1], sizes = [1, 8, 1], strides = [1, 1, 1]} : vector<3x8x14xf32> to vector<1x8x1xf32>
    %319 = vector.shape_cast %318 : vector<1x8x1xf32> to vector<8x1xf32>
    %320 = vector.extract_strided_slice %2 {offsets = [1, 0, 2], sizes = [1, 8, 1], strides = [1, 1, 1]} : vector<3x8x14xf32> to vector<1x8x1xf32>
    %321 = vector.shape_cast %320 : vector<1x8x1xf32> to vector<8x1xf32>
    %322 = vector.broadcast %6 : vector<8x1xf32> to vector<8x128xf32>
    %323 = arith.subf %0, %322 : vector<8x128xf32>
    %324 = vector.broadcast %319 : vector<8x1xf32> to vector<8x128xf32>
    %325 = arith.mulf %323, %324 : vector<8x128xf32>
    %326 = arith.mulf %325, %152 : vector<8x128xf32>
    %327 = vector.broadcast %9 : vector<8x1xf32> to vector<8x128xf32>
    %328 = arith.subf %327, %0 : vector<8x128xf32>
    %329 = vector.broadcast %321 : vector<8x1xf32> to vector<8x128xf32>
    %330 = arith.mulf %328, %329 : vector<8x128xf32>
    %331 = arith.mulf %330, %167 : vector<8x128xf32>
    %332 = arith.addf %326, %331 : vector<8x128xf32>
    %333 = vector.extract_strided_slice %2 {offsets = [1, 0, 2], sizes = [1, 8, 1], strides = [1, 1, 1]} : vector<3x8x14xf32> to vector<1x8x1xf32>
    %334 = vector.shape_cast %333 : vector<1x8x1xf32> to vector<8x1xf32>
    %335 = vector.extract_strided_slice %2 {offsets = [1, 0, 3], sizes = [1, 8, 1], strides = [1, 1, 1]} : vector<3x8x14xf32> to vector<1x8x1xf32>
    %336 = vector.shape_cast %335 : vector<1x8x1xf32> to vector<8x1xf32>
    %337 = vector.broadcast %7 : vector<8x1xf32> to vector<8x128xf32>
    %338 = arith.subf %0, %337 : vector<8x128xf32>
    %339 = vector.broadcast %334 : vector<8x1xf32> to vector<8x128xf32>
    %340 = arith.mulf %338, %339 : vector<8x128xf32>
    %341 = arith.mulf %340, %167 : vector<8x128xf32>
    %342 = vector.broadcast %10 : vector<8x1xf32> to vector<8x128xf32>
    %343 = arith.subf %342, %0 : vector<8x128xf32>
    %344 = vector.broadcast %336 : vector<8x1xf32> to vector<8x128xf32>
    %345 = arith.mulf %343, %344 : vector<8x128xf32>
    %346 = arith.mulf %345, %182 : vector<8x128xf32>
    %347 = arith.addf %341, %346 : vector<8x128xf32>
    %348 = vector.extract_strided_slice %2 {offsets = [1, 0, 3], sizes = [1, 8, 1], strides = [1, 1, 1]} : vector<3x8x14xf32> to vector<1x8x1xf32>
    %349 = vector.shape_cast %348 : vector<1x8x1xf32> to vector<8x1xf32>
    %350 = vector.extract_strided_slice %2 {offsets = [1, 0, 4], sizes = [1, 8, 1], strides = [1, 1, 1]} : vector<3x8x14xf32> to vector<1x8x1xf32>
    %351 = vector.shape_cast %350 : vector<1x8x1xf32> to vector<8x1xf32>
    %352 = vector.broadcast %8 : vector<8x1xf32> to vector<8x128xf32>
    %353 = arith.subf %0, %352 : vector<8x128xf32>
    %354 = vector.broadcast %349 : vector<8x1xf32> to vector<8x128xf32>
    %355 = arith.mulf %353, %354 : vector<8x128xf32>
    %356 = arith.mulf %355, %182 : vector<8x128xf32>
    %357 = vector.broadcast %11 : vector<8x1xf32> to vector<8x128xf32>
    %358 = arith.subf %357, %0 : vector<8x128xf32>
    %359 = vector.broadcast %351 : vector<8x1xf32> to vector<8x128xf32>
    %360 = arith.mulf %358, %359 : vector<8x128xf32>
    %361 = arith.mulf %360, %197 : vector<8x128xf32>
    %362 = arith.addf %356, %361 : vector<8x128xf32>
    %363 = vector.extract_strided_slice %2 {offsets = [1, 0, 4], sizes = [1, 8, 1], strides = [1, 1, 1]} : vector<3x8x14xf32> to vector<1x8x1xf32>
    %364 = vector.shape_cast %363 : vector<1x8x1xf32> to vector<8x1xf32>
    %365 = vector.extract_strided_slice %2 {offsets = [1, 0, 5], sizes = [1, 8, 1], strides = [1, 1, 1]} : vector<3x8x14xf32> to vector<1x8x1xf32>
    %366 = vector.shape_cast %365 : vector<1x8x1xf32> to vector<8x1xf32>
    %367 = vector.broadcast %9 : vector<8x1xf32> to vector<8x128xf32>
    %368 = arith.subf %0, %367 : vector<8x128xf32>
    %369 = vector.broadcast %364 : vector<8x1xf32> to vector<8x128xf32>
    %370 = arith.mulf %368, %369 : vector<8x128xf32>
    %371 = arith.mulf %370, %197 : vector<8x128xf32>
    %372 = vector.broadcast %12 : vector<8x1xf32> to vector<8x128xf32>
    %373 = arith.subf %372, %0 : vector<8x128xf32>
    %374 = vector.broadcast %366 : vector<8x1xf32> to vector<8x128xf32>
    %375 = arith.mulf %373, %374 : vector<8x128xf32>
    %376 = arith.mulf %375, %212 : vector<8x128xf32>
    %377 = arith.addf %371, %376 : vector<8x128xf32>
    %378 = vector.extract_strided_slice %2 {offsets = [1, 0, 5], sizes = [1, 8, 1], strides = [1, 1, 1]} : vector<3x8x14xf32> to vector<1x8x1xf32>
    %379 = vector.shape_cast %378 : vector<1x8x1xf32> to vector<8x1xf32>
    %380 = vector.extract_strided_slice %2 {offsets = [1, 0, 6], sizes = [1, 8, 1], strides = [1, 1, 1]} : vector<3x8x14xf32> to vector<1x8x1xf32>
    %381 = vector.shape_cast %380 : vector<1x8x1xf32> to vector<8x1xf32>
    %382 = vector.broadcast %10 : vector<8x1xf32> to vector<8x128xf32>
    %383 = arith.subf %0, %382 : vector<8x128xf32>
    %384 = vector.broadcast %379 : vector<8x1xf32> to vector<8x128xf32>
    %385 = arith.mulf %383, %384 : vector<8x128xf32>
    %386 = arith.mulf %385, %212 : vector<8x128xf32>
    %387 = vector.broadcast %13 : vector<8x1xf32> to vector<8x128xf32>
    %388 = arith.subf %387, %0 : vector<8x128xf32>
    %389 = vector.broadcast %381 : vector<8x1xf32> to vector<8x128xf32>
    %390 = arith.mulf %388, %389 : vector<8x128xf32>
    %391 = arith.mulf %390, %227 : vector<8x128xf32>
    %392 = arith.addf %386, %391 : vector<8x128xf32>
    %393 = vector.extract_strided_slice %2 {offsets = [1, 0, 6], sizes = [1, 8, 1], strides = [1, 1, 1]} : vector<3x8x14xf32> to vector<1x8x1xf32>
    %394 = vector.shape_cast %393 : vector<1x8x1xf32> to vector<8x1xf32>
    %395 = vector.extract_strided_slice %2 {offsets = [1, 0, 7], sizes = [1, 8, 1], strides = [1, 1, 1]} : vector<3x8x14xf32> to vector<1x8x1xf32>
    %396 = vector.shape_cast %395 : vector<1x8x1xf32> to vector<8x1xf32>
    %397 = vector.broadcast %11 : vector<8x1xf32> to vector<8x128xf32>
    %398 = arith.subf %0, %397 : vector<8x128xf32>
    %399 = vector.broadcast %394 : vector<8x1xf32> to vector<8x128xf32>
    %400 = arith.mulf %398, %399 : vector<8x128xf32>
    %401 = arith.mulf %400, %227 : vector<8x128xf32>
    %402 = vector.broadcast %14 : vector<8x1xf32> to vector<8x128xf32>
    %403 = arith.subf %402, %0 : vector<8x128xf32>
    %404 = vector.broadcast %396 : vector<8x1xf32> to vector<8x128xf32>
    %405 = arith.mulf %403, %404 : vector<8x128xf32>
    %406 = arith.mulf %405, %242 : vector<8x128xf32>
    %407 = arith.addf %401, %406 : vector<8x128xf32>
    %408 = vector.extract_strided_slice %2 {offsets = [1, 0, 7], sizes = [1, 8, 1], strides = [1, 1, 1]} : vector<3x8x14xf32> to vector<1x8x1xf32>
    %409 = vector.shape_cast %408 : vector<1x8x1xf32> to vector<8x1xf32>
    %410 = vector.extract_strided_slice %2 {offsets = [1, 0, 8], sizes = [1, 8, 1], strides = [1, 1, 1]} : vector<3x8x14xf32> to vector<1x8x1xf32>
    %411 = vector.shape_cast %410 : vector<1x8x1xf32> to vector<8x1xf32>
    %412 = vector.broadcast %12 : vector<8x1xf32> to vector<8x128xf32>
    %413 = arith.subf %0, %412 : vector<8x128xf32>
    %414 = vector.broadcast %409 : vector<8x1xf32> to vector<8x128xf32>
    %415 = arith.mulf %413, %414 : vector<8x128xf32>
    %416 = arith.mulf %415, %242 : vector<8x128xf32>
    %417 = vector.broadcast %15 : vector<8x1xf32> to vector<8x128xf32>
    %418 = arith.subf %417, %0 : vector<8x128xf32>
    %419 = vector.broadcast %411 : vector<8x1xf32> to vector<8x128xf32>
    %420 = arith.mulf %418, %419 : vector<8x128xf32>
    %421 = arith.mulf %420, %257 : vector<8x128xf32>
    %422 = arith.addf %416, %421 : vector<8x128xf32>
    %423 = vector.extract_strided_slice %2 {offsets = [1, 0, 8], sizes = [1, 8, 1], strides = [1, 1, 1]} : vector<3x8x14xf32> to vector<1x8x1xf32>
    %424 = vector.shape_cast %423 : vector<1x8x1xf32> to vector<8x1xf32>
    %425 = vector.extract_strided_slice %2 {offsets = [1, 0, 9], sizes = [1, 8, 1], strides = [1, 1, 1]} : vector<3x8x14xf32> to vector<1x8x1xf32>
    %426 = vector.shape_cast %425 : vector<1x8x1xf32> to vector<8x1xf32>
    %427 = vector.broadcast %13 : vector<8x1xf32> to vector<8x128xf32>
    %428 = arith.subf %0, %427 : vector<8x128xf32>
    %429 = vector.broadcast %424 : vector<8x1xf32> to vector<8x128xf32>
    %430 = arith.mulf %428, %429 : vector<8x128xf32>
    %431 = arith.mulf %430, %257 : vector<8x128xf32>
    %432 = vector.broadcast %16 : vector<8x1xf32> to vector<8x128xf32>
    %433 = arith.subf %432, %0 : vector<8x128xf32>
    %434 = vector.broadcast %426 : vector<8x1xf32> to vector<8x128xf32>
    %435 = arith.mulf %433, %434 : vector<8x128xf32>
    %436 = arith.mulf %435, %272 : vector<8x128xf32>
    %437 = arith.addf %431, %436 : vector<8x128xf32>
    %438 = vector.extract_strided_slice %2 {offsets = [1, 0, 9], sizes = [1, 8, 1], strides = [1, 1, 1]} : vector<3x8x14xf32> to vector<1x8x1xf32>
    %439 = vector.shape_cast %438 : vector<1x8x1xf32> to vector<8x1xf32>
    %440 = vector.extract_strided_slice %2 {offsets = [1, 0, 10], sizes = [1, 8, 1], strides = [1, 1, 1]} : vector<3x8x14xf32> to vector<1x8x1xf32>
    %441 = vector.shape_cast %440 : vector<1x8x1xf32> to vector<8x1xf32>
    %442 = vector.broadcast %14 : vector<8x1xf32> to vector<8x128xf32>
    %443 = arith.subf %0, %442 : vector<8x128xf32>
    %444 = vector.broadcast %439 : vector<8x1xf32> to vector<8x128xf32>
    %445 = arith.mulf %443, %444 : vector<8x128xf32>
    %446 = arith.mulf %445, %272 : vector<8x128xf32>
    %447 = vector.broadcast %17 : vector<8x1xf32> to vector<8x128xf32>
    %448 = arith.subf %447, %0 : vector<8x128xf32>
    %449 = vector.broadcast %441 : vector<8x1xf32> to vector<8x128xf32>
    %450 = arith.mulf %448, %449 : vector<8x128xf32>
    %451 = arith.mulf %450, %287 : vector<8x128xf32>
    %452 = arith.addf %446, %451 : vector<8x128xf32>
    %453 = vector.extract_strided_slice %2 {offsets = [1, 0, 10], sizes = [1, 8, 1], strides = [1, 1, 1]} : vector<3x8x14xf32> to vector<1x8x1xf32>
    %454 = vector.shape_cast %453 : vector<1x8x1xf32> to vector<8x1xf32>
    %455 = vector.extract_strided_slice %2 {offsets = [1, 0, 11], sizes = [1, 8, 1], strides = [1, 1, 1]} : vector<3x8x14xf32> to vector<1x8x1xf32>
    %456 = vector.shape_cast %455 : vector<1x8x1xf32> to vector<8x1xf32>
    %457 = vector.broadcast %15 : vector<8x1xf32> to vector<8x128xf32>
    %458 = arith.subf %0, %457 : vector<8x128xf32>
    %459 = vector.broadcast %454 : vector<8x1xf32> to vector<8x128xf32>
    %460 = arith.mulf %458, %459 : vector<8x128xf32>
    %461 = arith.mulf %460, %287 : vector<8x128xf32>
    %462 = vector.broadcast %18 : vector<8x1xf32> to vector<8x128xf32>
    %463 = arith.subf %462, %0 : vector<8x128xf32>
    %464 = vector.broadcast %456 : vector<8x1xf32> to vector<8x128xf32>
    %465 = arith.mulf %463, %464 : vector<8x128xf32>
    %466 = arith.mulf %465, %302 : vector<8x128xf32>
    %467 = arith.addf %461, %466 : vector<8x128xf32>
    %468 = vector.extract_strided_slice %2 {offsets = [2, 0, 0], sizes = [1, 8, 1], strides = [1, 1, 1]} : vector<3x8x14xf32> to vector<1x8x1xf32>
    %469 = vector.shape_cast %468 : vector<1x8x1xf32> to vector<8x1xf32>
    %470 = vector.extract_strided_slice %2 {offsets = [2, 0, 1], sizes = [1, 8, 1], strides = [1, 1, 1]} : vector<3x8x14xf32> to vector<1x8x1xf32>
    %471 = vector.shape_cast %470 : vector<1x8x1xf32> to vector<8x1xf32>
    %472 = vector.broadcast %5 : vector<8x1xf32> to vector<8x128xf32>
    %473 = arith.subf %0, %472 : vector<8x128xf32>
    %474 = vector.broadcast %469 : vector<8x1xf32> to vector<8x128xf32>
    %475 = arith.mulf %473, %474 : vector<8x128xf32>
    %476 = arith.mulf %475, %317 : vector<8x128xf32>
    %477 = vector.broadcast %9 : vector<8x1xf32> to vector<8x128xf32>
    %478 = arith.subf %477, %0 : vector<8x128xf32>
    %479 = vector.broadcast %471 : vector<8x1xf32> to vector<8x128xf32>
    %480 = arith.mulf %478, %479 : vector<8x128xf32>
    %481 = arith.mulf %480, %332 : vector<8x128xf32>
    %482 = arith.addf %476, %481 : vector<8x128xf32>
    %483 = vector.extract_strided_slice %2 {offsets = [2, 0, 1], sizes = [1, 8, 1], strides = [1, 1, 1]} : vector<3x8x14xf32> to vector<1x8x1xf32>
    %484 = vector.shape_cast %483 : vector<1x8x1xf32> to vector<8x1xf32>
    %485 = vector.extract_strided_slice %2 {offsets = [2, 0, 2], sizes = [1, 8, 1], strides = [1, 1, 1]} : vector<3x8x14xf32> to vector<1x8x1xf32>
    %486 = vector.shape_cast %485 : vector<1x8x1xf32> to vector<8x1xf32>
    %487 = vector.broadcast %6 : vector<8x1xf32> to vector<8x128xf32>
    %488 = arith.subf %0, %487 : vector<8x128xf32>
    %489 = vector.broadcast %484 : vector<8x1xf32> to vector<8x128xf32>
    %490 = arith.mulf %488, %489 : vector<8x128xf32>
    %491 = arith.mulf %490, %332 : vector<8x128xf32>
    %492 = vector.broadcast %10 : vector<8x1xf32> to vector<8x128xf32>
    %493 = arith.subf %492, %0 : vector<8x128xf32>
    %494 = vector.broadcast %486 : vector<8x1xf32> to vector<8x128xf32>
    %495 = arith.mulf %493, %494 : vector<8x128xf32>
    %496 = arith.mulf %495, %347 : vector<8x128xf32>
    %497 = arith.addf %491, %496 : vector<8x128xf32>
    %498 = vector.extract_strided_slice %2 {offsets = [2, 0, 2], sizes = [1, 8, 1], strides = [1, 1, 1]} : vector<3x8x14xf32> to vector<1x8x1xf32>
    %499 = vector.shape_cast %498 : vector<1x8x1xf32> to vector<8x1xf32>
    %500 = vector.extract_strided_slice %2 {offsets = [2, 0, 3], sizes = [1, 8, 1], strides = [1, 1, 1]} : vector<3x8x14xf32> to vector<1x8x1xf32>
    %501 = vector.shape_cast %500 : vector<1x8x1xf32> to vector<8x1xf32>
    %502 = vector.broadcast %7 : vector<8x1xf32> to vector<8x128xf32>
    %503 = arith.subf %0, %502 : vector<8x128xf32>
    %504 = vector.broadcast %499 : vector<8x1xf32> to vector<8x128xf32>
    %505 = arith.mulf %503, %504 : vector<8x128xf32>
    %506 = arith.mulf %505, %347 : vector<8x128xf32>
    %507 = vector.broadcast %11 : vector<8x1xf32> to vector<8x128xf32>
    %508 = arith.subf %507, %0 : vector<8x128xf32>
    %509 = vector.broadcast %501 : vector<8x1xf32> to vector<8x128xf32>
    %510 = arith.mulf %508, %509 : vector<8x128xf32>
    %511 = arith.mulf %510, %362 : vector<8x128xf32>
    %512 = arith.addf %506, %511 : vector<8x128xf32>
    %513 = vector.extract_strided_slice %2 {offsets = [2, 0, 3], sizes = [1, 8, 1], strides = [1, 1, 1]} : vector<3x8x14xf32> to vector<1x8x1xf32>
    %514 = vector.shape_cast %513 : vector<1x8x1xf32> to vector<8x1xf32>
    %515 = vector.extract_strided_slice %2 {offsets = [2, 0, 4], sizes = [1, 8, 1], strides = [1, 1, 1]} : vector<3x8x14xf32> to vector<1x8x1xf32>
    %516 = vector.shape_cast %515 : vector<1x8x1xf32> to vector<8x1xf32>
    %517 = vector.broadcast %8 : vector<8x1xf32> to vector<8x128xf32>
    %518 = arith.subf %0, %517 : vector<8x128xf32>
    %519 = vector.broadcast %514 : vector<8x1xf32> to vector<8x128xf32>
    %520 = arith.mulf %518, %519 : vector<8x128xf32>
    %521 = arith.mulf %520, %362 : vector<8x128xf32>
    %522 = vector.broadcast %12 : vector<8x1xf32> to vector<8x128xf32>
    %523 = arith.subf %522, %0 : vector<8x128xf32>
    %524 = vector.broadcast %516 : vector<8x1xf32> to vector<8x128xf32>
    %525 = arith.mulf %523, %524 : vector<8x128xf32>
    %526 = arith.mulf %525, %377 : vector<8x128xf32>
    %527 = arith.addf %521, %526 : vector<8x128xf32>
    %528 = vector.extract_strided_slice %2 {offsets = [2, 0, 4], sizes = [1, 8, 1], strides = [1, 1, 1]} : vector<3x8x14xf32> to vector<1x8x1xf32>
    %529 = vector.shape_cast %528 : vector<1x8x1xf32> to vector<8x1xf32>
    %530 = vector.extract_strided_slice %2 {offsets = [2, 0, 5], sizes = [1, 8, 1], strides = [1, 1, 1]} : vector<3x8x14xf32> to vector<1x8x1xf32>
    %531 = vector.shape_cast %530 : vector<1x8x1xf32> to vector<8x1xf32>
    %532 = vector.broadcast %9 : vector<8x1xf32> to vector<8x128xf32>
    %533 = arith.subf %0, %532 : vector<8x128xf32>
    %534 = vector.broadcast %529 : vector<8x1xf32> to vector<8x128xf32>
    %535 = arith.mulf %533, %534 : vector<8x128xf32>
    %536 = arith.mulf %535, %377 : vector<8x128xf32>
    %537 = vector.broadcast %13 : vector<8x1xf32> to vector<8x128xf32>
    %538 = arith.subf %537, %0 : vector<8x128xf32>
    %539 = vector.broadcast %531 : vector<8x1xf32> to vector<8x128xf32>
    %540 = arith.mulf %538, %539 : vector<8x128xf32>
    %541 = arith.mulf %540, %392 : vector<8x128xf32>
    %542 = arith.addf %536, %541 : vector<8x128xf32>
    %543 = vector.extract_strided_slice %2 {offsets = [2, 0, 5], sizes = [1, 8, 1], strides = [1, 1, 1]} : vector<3x8x14xf32> to vector<1x8x1xf32>
    %544 = vector.shape_cast %543 : vector<1x8x1xf32> to vector<8x1xf32>
    %545 = vector.extract_strided_slice %2 {offsets = [2, 0, 6], sizes = [1, 8, 1], strides = [1, 1, 1]} : vector<3x8x14xf32> to vector<1x8x1xf32>
    %546 = vector.shape_cast %545 : vector<1x8x1xf32> to vector<8x1xf32>
    %547 = vector.broadcast %10 : vector<8x1xf32> to vector<8x128xf32>
    %548 = arith.subf %0, %547 : vector<8x128xf32>
    %549 = vector.broadcast %544 : vector<8x1xf32> to vector<8x128xf32>
    %550 = arith.mulf %548, %549 : vector<8x128xf32>
    %551 = arith.mulf %550, %392 : vector<8x128xf32>
    %552 = vector.broadcast %14 : vector<8x1xf32> to vector<8x128xf32>
    %553 = arith.subf %552, %0 : vector<8x128xf32>
    %554 = vector.broadcast %546 : vector<8x1xf32> to vector<8x128xf32>
    %555 = arith.mulf %553, %554 : vector<8x128xf32>
    %556 = arith.mulf %555, %407 : vector<8x128xf32>
    %557 = arith.addf %551, %556 : vector<8x128xf32>
    %558 = vector.extract_strided_slice %2 {offsets = [2, 0, 6], sizes = [1, 8, 1], strides = [1, 1, 1]} : vector<3x8x14xf32> to vector<1x8x1xf32>
    %559 = vector.shape_cast %558 : vector<1x8x1xf32> to vector<8x1xf32>
    %560 = vector.extract_strided_slice %2 {offsets = [2, 0, 7], sizes = [1, 8, 1], strides = [1, 1, 1]} : vector<3x8x14xf32> to vector<1x8x1xf32>
    %561 = vector.shape_cast %560 : vector<1x8x1xf32> to vector<8x1xf32>
    %562 = vector.broadcast %11 : vector<8x1xf32> to vector<8x128xf32>
    %563 = arith.subf %0, %562 : vector<8x128xf32>
    %564 = vector.broadcast %559 : vector<8x1xf32> to vector<8x128xf32>
    %565 = arith.mulf %563, %564 : vector<8x128xf32>
    %566 = arith.mulf %565, %407 : vector<8x128xf32>
    %567 = vector.broadcast %15 : vector<8x1xf32> to vector<8x128xf32>
    %568 = arith.subf %567, %0 : vector<8x128xf32>
    %569 = vector.broadcast %561 : vector<8x1xf32> to vector<8x128xf32>
    %570 = arith.mulf %568, %569 : vector<8x128xf32>
    %571 = arith.mulf %570, %422 : vector<8x128xf32>
    %572 = arith.addf %566, %571 : vector<8x128xf32>
    %573 = vector.extract_strided_slice %2 {offsets = [2, 0, 7], sizes = [1, 8, 1], strides = [1, 1, 1]} : vector<3x8x14xf32> to vector<1x8x1xf32>
    %574 = vector.shape_cast %573 : vector<1x8x1xf32> to vector<8x1xf32>
    %575 = vector.extract_strided_slice %2 {offsets = [2, 0, 8], sizes = [1, 8, 1], strides = [1, 1, 1]} : vector<3x8x14xf32> to vector<1x8x1xf32>
    %576 = vector.shape_cast %575 : vector<1x8x1xf32> to vector<8x1xf32>
    %577 = vector.broadcast %12 : vector<8x1xf32> to vector<8x128xf32>
    %578 = arith.subf %0, %577 : vector<8x128xf32>
    %579 = vector.broadcast %574 : vector<8x1xf32> to vector<8x128xf32>
    %580 = arith.mulf %578, %579 : vector<8x128xf32>
    %581 = arith.mulf %580, %422 : vector<8x128xf32>
    %582 = vector.broadcast %16 : vector<8x1xf32> to vector<8x128xf32>
    %583 = arith.subf %582, %0 : vector<8x128xf32>
    %584 = vector.broadcast %576 : vector<8x1xf32> to vector<8x128xf32>
    %585 = arith.mulf %583, %584 : vector<8x128xf32>
    %586 = arith.mulf %585, %437 : vector<8x128xf32>
    %587 = arith.addf %581, %586 : vector<8x128xf32>
    %588 = vector.extract_strided_slice %2 {offsets = [2, 0, 8], sizes = [1, 8, 1], strides = [1, 1, 1]} : vector<3x8x14xf32> to vector<1x8x1xf32>
    %589 = vector.shape_cast %588 : vector<1x8x1xf32> to vector<8x1xf32>
    %590 = vector.extract_strided_slice %2 {offsets = [2, 0, 9], sizes = [1, 8, 1], strides = [1, 1, 1]} : vector<3x8x14xf32> to vector<1x8x1xf32>
    %591 = vector.shape_cast %590 : vector<1x8x1xf32> to vector<8x1xf32>
    %592 = vector.broadcast %13 : vector<8x1xf32> to vector<8x128xf32>
    %593 = arith.subf %0, %592 : vector<8x128xf32>
    %594 = vector.broadcast %589 : vector<8x1xf32> to vector<8x128xf32>
    %595 = arith.mulf %593, %594 : vector<8x128xf32>
    %596 = arith.mulf %595, %437 : vector<8x128xf32>
    %597 = vector.broadcast %17 : vector<8x1xf32> to vector<8x128xf32>
    %598 = arith.subf %597, %0 : vector<8x128xf32>
    %599 = vector.broadcast %591 : vector<8x1xf32> to vector<8x128xf32>
    %600 = arith.mulf %598, %599 : vector<8x128xf32>
    %601 = arith.mulf %600, %452 : vector<8x128xf32>
    %602 = arith.addf %596, %601 : vector<8x128xf32>
    %603 = vector.extract_strided_slice %2 {offsets = [2, 0, 9], sizes = [1, 8, 1], strides = [1, 1, 1]} : vector<3x8x14xf32> to vector<1x8x1xf32>
    %604 = vector.shape_cast %603 : vector<1x8x1xf32> to vector<8x1xf32>
    %605 = vector.extract_strided_slice %2 {offsets = [2, 0, 10], sizes = [1, 8, 1], strides = [1, 1, 1]} : vector<3x8x14xf32> to vector<1x8x1xf32>
    %606 = vector.shape_cast %605 : vector<1x8x1xf32> to vector<8x1xf32>
    %607 = vector.broadcast %14 : vector<8x1xf32> to vector<8x128xf32>
    %608 = arith.subf %0, %607 : vector<8x128xf32>
    %609 = vector.broadcast %604 : vector<8x1xf32> to vector<8x128xf32>
    %610 = arith.mulf %608, %609 : vector<8x128xf32>
    %611 = arith.mulf %610, %452 : vector<8x128xf32>
    %612 = vector.broadcast %18 : vector<8x1xf32> to vector<8x128xf32>
    %613 = arith.subf %612, %0 : vector<8x128xf32>
    %614 = vector.broadcast %606 : vector<8x1xf32> to vector<8x128xf32>
    %615 = arith.mulf %613, %614 : vector<8x128xf32>
    %616 = arith.mulf %615, %467 : vector<8x128xf32>
    %617 = arith.addf %611, %616 : vector<8x128xf32>
    %618 = arith.negf %0 : vector<8x128xf32>
    %619 = math.exp %618 : vector<8x128xf32>
    %cst_35 = arith.constant 1.000000e+00 : f32
    %620 = vector.broadcast %cst_35 : f32 to vector<8x128xf32>
    %621 = arith.addf %620, %619 : vector<8x128xf32>
    %622 = arith.divf %620, %621 : vector<8x128xf32>
    %623 = arith.mulf %0, %622 : vector<8x128xf32>
    %624 = tpu.concatenate %623, %482, %497, %512, %527, %542, %557, %572, %587, %602, %617 in 0 : vector<8x128xf32>, vector<8x128xf32>, vector<8x128xf32>, vector<8x128xf32>, vector<8x128xf32>, vector<8x128xf32>, vector<8x128xf32>, vector<8x128xf32>, vector<8x128xf32>, vector<8x128xf32>, vector<8x128xf32> -> vector<88x128xf32>
    %cst_36 = arith.constant dense<0.000000e+00> : vector<32x128xf32>
    %625 = tpu.matmul %3, %624, %cst_36 {dimension_numbers = #tpu.dot_dimension_numbers<[1], [0], [0], [1], [0, 0, 1, 1], [], []>, precision = #tpu.contract_precision<fp32>} : vector<32x88xf32>, vector<88x128xf32>, vector<32x128xf32> -> vector<32x128xf32>
    %626 = vector.broadcast %4 : vector<32x1xf32> to vector<32x128xf32>
    %627 = arith.addf %625, %626 : vector<32x128xf32>
    %c0_37 = arith.constant 0 : index
    %c0_38 = arith.constant 0 : index
    %628 = vector.load %arg6[%c0_37, %c0_38] : memref<32x14xf32, #tpu.memory_space<vmem>>, vector<32x14xf32>
    %c0_39 = arith.constant 0 : index
    %c0_40 = arith.constant 0 : index
    %c0_41 = arith.constant 0 : index
    %629 = vector.load %arg7[%c0_39, %c0_40, %c0_41] : memref<3x32x14xf32, #tpu.memory_space<vmem>>, vector<3x32x14xf32>
    %c0_42 = arith.constant 0 : index
    %c0_43 = arith.constant 0 : index
    %630 = vector.load %arg8[%c0_42, %c0_43] : memref<16x352xf32, #tpu.memory_space<vmem>>, vector<16x352xf32>
    %c0_44 = arith.constant 0 : index
    %c0_45 = arith.constant 0 : index
    %631 = vector.load %arg9[%c0_44, %c0_45] : memref<16x1xf32, #tpu.memory_space<vmem>>, vector<16x1xf32>
    %632 = vector.extract_strided_slice %628 {offsets = [0, 0], sizes = [32, 1], strides = [1, 1]} : vector<32x14xf32> to vector<32x1xf32>
    %633 = vector.extract_strided_slice %628 {offsets = [0, 1], sizes = [32, 1], strides = [1, 1]} : vector<32x14xf32> to vector<32x1xf32>
    %634 = vector.extract_strided_slice %628 {offsets = [0, 2], sizes = [32, 1], strides = [1, 1]} : vector<32x14xf32> to vector<32x1xf32>
    %635 = vector.extract_strided_slice %628 {offsets = [0, 3], sizes = [32, 1], strides = [1, 1]} : vector<32x14xf32> to vector<32x1xf32>
    %636 = vector.extract_strided_slice %628 {offsets = [0, 4], sizes = [32, 1], strides = [1, 1]} : vector<32x14xf32> to vector<32x1xf32>
    %637 = vector.extract_strided_slice %628 {offsets = [0, 5], sizes = [32, 1], strides = [1, 1]} : vector<32x14xf32> to vector<32x1xf32>
    %638 = vector.extract_strided_slice %628 {offsets = [0, 6], sizes = [32, 1], strides = [1, 1]} : vector<32x14xf32> to vector<32x1xf32>
    %639 = vector.extract_strided_slice %628 {offsets = [0, 7], sizes = [32, 1], strides = [1, 1]} : vector<32x14xf32> to vector<32x1xf32>
    %640 = vector.extract_strided_slice %628 {offsets = [0, 8], sizes = [32, 1], strides = [1, 1]} : vector<32x14xf32> to vector<32x1xf32>
    %641 = vector.extract_strided_slice %628 {offsets = [0, 9], sizes = [32, 1], strides = [1, 1]} : vector<32x14xf32> to vector<32x1xf32>
    %642 = vector.extract_strided_slice %628 {offsets = [0, 10], sizes = [32, 1], strides = [1, 1]} : vector<32x14xf32> to vector<32x1xf32>
    %643 = vector.extract_strided_slice %628 {offsets = [0, 11], sizes = [32, 1], strides = [1, 1]} : vector<32x14xf32> to vector<32x1xf32>
    %644 = vector.extract_strided_slice %628 {offsets = [0, 12], sizes = [32, 1], strides = [1, 1]} : vector<32x14xf32> to vector<32x1xf32>
    %645 = vector.extract_strided_slice %628 {offsets = [0, 13], sizes = [32, 1], strides = [1, 1]} : vector<32x14xf32> to vector<32x1xf32>
    %646 = vector.broadcast %632 : vector<32x1xf32> to vector<32x128xf32>
    %647 = arith.cmpf oge, %627, %646 : vector<32x128xf32>
    %648 = vector.broadcast %633 : vector<32x1xf32> to vector<32x128xf32>
    %649 = arith.cmpf olt, %627, %648 : vector<32x128xf32>
    %650 = arith.andi %647, %649 : vector<32x128xi1>
    %cst_46 = arith.constant 1.000000e+00 : f32
    %cst_47 = arith.constant 0.000000e+00 : f32
    %651 = vector.broadcast %cst_46 : f32 to vector<32x128xf32>
    %652 = vector.broadcast %cst_47 : f32 to vector<32x128xf32>
    %653 = arith.select %650, %651, %652 : vector<32x128xi1>, vector<32x128xf32>
    %654 = vector.broadcast %633 : vector<32x1xf32> to vector<32x128xf32>
    %655 = arith.cmpf oge, %627, %654 : vector<32x128xf32>
    %656 = vector.broadcast %634 : vector<32x1xf32> to vector<32x128xf32>
    %657 = arith.cmpf olt, %627, %656 : vector<32x128xf32>
    %658 = arith.andi %655, %657 : vector<32x128xi1>
    %cst_48 = arith.constant 1.000000e+00 : f32
    %cst_49 = arith.constant 0.000000e+00 : f32
    %659 = vector.broadcast %cst_48 : f32 to vector<32x128xf32>
    %660 = vector.broadcast %cst_49 : f32 to vector<32x128xf32>
    %661 = arith.select %658, %659, %660 : vector<32x128xi1>, vector<32x128xf32>
    %662 = vector.broadcast %634 : vector<32x1xf32> to vector<32x128xf32>
    %663 = arith.cmpf oge, %627, %662 : vector<32x128xf32>
    %664 = vector.broadcast %635 : vector<32x1xf32> to vector<32x128xf32>
    %665 = arith.cmpf olt, %627, %664 : vector<32x128xf32>
    %666 = arith.andi %663, %665 : vector<32x128xi1>
    %cst_50 = arith.constant 1.000000e+00 : f32
    %cst_51 = arith.constant 0.000000e+00 : f32
    %667 = vector.broadcast %cst_50 : f32 to vector<32x128xf32>
    %668 = vector.broadcast %cst_51 : f32 to vector<32x128xf32>
    %669 = arith.select %666, %667, %668 : vector<32x128xi1>, vector<32x128xf32>
    %670 = vector.broadcast %635 : vector<32x1xf32> to vector<32x128xf32>
    %671 = arith.cmpf oge, %627, %670 : vector<32x128xf32>
    %672 = vector.broadcast %636 : vector<32x1xf32> to vector<32x128xf32>
    %673 = arith.cmpf olt, %627, %672 : vector<32x128xf32>
    %674 = arith.andi %671, %673 : vector<32x128xi1>
    %cst_52 = arith.constant 1.000000e+00 : f32
    %cst_53 = arith.constant 0.000000e+00 : f32
    %675 = vector.broadcast %cst_52 : f32 to vector<32x128xf32>
    %676 = vector.broadcast %cst_53 : f32 to vector<32x128xf32>
    %677 = arith.select %674, %675, %676 : vector<32x128xi1>, vector<32x128xf32>
    %678 = vector.broadcast %636 : vector<32x1xf32> to vector<32x128xf32>
    %679 = arith.cmpf oge, %627, %678 : vector<32x128xf32>
    %680 = vector.broadcast %637 : vector<32x1xf32> to vector<32x128xf32>
    %681 = arith.cmpf olt, %627, %680 : vector<32x128xf32>
    %682 = arith.andi %679, %681 : vector<32x128xi1>
    %cst_54 = arith.constant 1.000000e+00 : f32
    %cst_55 = arith.constant 0.000000e+00 : f32
    %683 = vector.broadcast %cst_54 : f32 to vector<32x128xf32>
    %684 = vector.broadcast %cst_55 : f32 to vector<32x128xf32>
    %685 = arith.select %682, %683, %684 : vector<32x128xi1>, vector<32x128xf32>
    %686 = vector.broadcast %637 : vector<32x1xf32> to vector<32x128xf32>
    %687 = arith.cmpf oge, %627, %686 : vector<32x128xf32>
    %688 = vector.broadcast %638 : vector<32x1xf32> to vector<32x128xf32>
    %689 = arith.cmpf olt, %627, %688 : vector<32x128xf32>
    %690 = arith.andi %687, %689 : vector<32x128xi1>
    %cst_56 = arith.constant 1.000000e+00 : f32
    %cst_57 = arith.constant 0.000000e+00 : f32
    %691 = vector.broadcast %cst_56 : f32 to vector<32x128xf32>
    %692 = vector.broadcast %cst_57 : f32 to vector<32x128xf32>
    %693 = arith.select %690, %691, %692 : vector<32x128xi1>, vector<32x128xf32>
    %694 = vector.broadcast %638 : vector<32x1xf32> to vector<32x128xf32>
    %695 = arith.cmpf oge, %627, %694 : vector<32x128xf32>
    %696 = vector.broadcast %639 : vector<32x1xf32> to vector<32x128xf32>
    %697 = arith.cmpf olt, %627, %696 : vector<32x128xf32>
    %698 = arith.andi %695, %697 : vector<32x128xi1>
    %cst_58 = arith.constant 1.000000e+00 : f32
    %cst_59 = arith.constant 0.000000e+00 : f32
    %699 = vector.broadcast %cst_58 : f32 to vector<32x128xf32>
    %700 = vector.broadcast %cst_59 : f32 to vector<32x128xf32>
    %701 = arith.select %698, %699, %700 : vector<32x128xi1>, vector<32x128xf32>
    %702 = vector.broadcast %639 : vector<32x1xf32> to vector<32x128xf32>
    %703 = arith.cmpf oge, %627, %702 : vector<32x128xf32>
    %704 = vector.broadcast %640 : vector<32x1xf32> to vector<32x128xf32>
    %705 = arith.cmpf olt, %627, %704 : vector<32x128xf32>
    %706 = arith.andi %703, %705 : vector<32x128xi1>
    %cst_60 = arith.constant 1.000000e+00 : f32
    %cst_61 = arith.constant 0.000000e+00 : f32
    %707 = vector.broadcast %cst_60 : f32 to vector<32x128xf32>
    %708 = vector.broadcast %cst_61 : f32 to vector<32x128xf32>
    %709 = arith.select %706, %707, %708 : vector<32x128xi1>, vector<32x128xf32>
    %710 = vector.broadcast %640 : vector<32x1xf32> to vector<32x128xf32>
    %711 = arith.cmpf oge, %627, %710 : vector<32x128xf32>
    %712 = vector.broadcast %641 : vector<32x1xf32> to vector<32x128xf32>
    %713 = arith.cmpf olt, %627, %712 : vector<32x128xf32>
    %714 = arith.andi %711, %713 : vector<32x128xi1>
    %cst_62 = arith.constant 1.000000e+00 : f32
    %cst_63 = arith.constant 0.000000e+00 : f32
    %715 = vector.broadcast %cst_62 : f32 to vector<32x128xf32>
    %716 = vector.broadcast %cst_63 : f32 to vector<32x128xf32>
    %717 = arith.select %714, %715, %716 : vector<32x128xi1>, vector<32x128xf32>
    %718 = vector.broadcast %641 : vector<32x1xf32> to vector<32x128xf32>
    %719 = arith.cmpf oge, %627, %718 : vector<32x128xf32>
    %720 = vector.broadcast %642 : vector<32x1xf32> to vector<32x128xf32>
    %721 = arith.cmpf olt, %627, %720 : vector<32x128xf32>
    %722 = arith.andi %719, %721 : vector<32x128xi1>
    %cst_64 = arith.constant 1.000000e+00 : f32
    %cst_65 = arith.constant 0.000000e+00 : f32
    %723 = vector.broadcast %cst_64 : f32 to vector<32x128xf32>
    %724 = vector.broadcast %cst_65 : f32 to vector<32x128xf32>
    %725 = arith.select %722, %723, %724 : vector<32x128xi1>, vector<32x128xf32>
    %726 = vector.broadcast %642 : vector<32x1xf32> to vector<32x128xf32>
    %727 = arith.cmpf oge, %627, %726 : vector<32x128xf32>
    %728 = vector.broadcast %643 : vector<32x1xf32> to vector<32x128xf32>
    %729 = arith.cmpf olt, %627, %728 : vector<32x128xf32>
    %730 = arith.andi %727, %729 : vector<32x128xi1>
    %cst_66 = arith.constant 1.000000e+00 : f32
    %cst_67 = arith.constant 0.000000e+00 : f32
    %731 = vector.broadcast %cst_66 : f32 to vector<32x128xf32>
    %732 = vector.broadcast %cst_67 : f32 to vector<32x128xf32>
    %733 = arith.select %730, %731, %732 : vector<32x128xi1>, vector<32x128xf32>
    %734 = vector.broadcast %643 : vector<32x1xf32> to vector<32x128xf32>
    %735 = arith.cmpf oge, %627, %734 : vector<32x128xf32>
    %736 = vector.broadcast %644 : vector<32x1xf32> to vector<32x128xf32>
    %737 = arith.cmpf olt, %627, %736 : vector<32x128xf32>
    %738 = arith.andi %735, %737 : vector<32x128xi1>
    %cst_68 = arith.constant 1.000000e+00 : f32
    %cst_69 = arith.constant 0.000000e+00 : f32
    %739 = vector.broadcast %cst_68 : f32 to vector<32x128xf32>
    %740 = vector.broadcast %cst_69 : f32 to vector<32x128xf32>
    %741 = arith.select %738, %739, %740 : vector<32x128xi1>, vector<32x128xf32>
    %742 = vector.broadcast %644 : vector<32x1xf32> to vector<32x128xf32>
    %743 = arith.cmpf oge, %627, %742 : vector<32x128xf32>
    %744 = vector.broadcast %645 : vector<32x1xf32> to vector<32x128xf32>
    %745 = arith.cmpf olt, %627, %744 : vector<32x128xf32>
    %746 = arith.andi %743, %745 : vector<32x128xi1>
    %cst_70 = arith.constant 1.000000e+00 : f32
    %cst_71 = arith.constant 0.000000e+00 : f32
    %747 = vector.broadcast %cst_70 : f32 to vector<32x128xf32>
    %748 = vector.broadcast %cst_71 : f32 to vector<32x128xf32>
    %749 = arith.select %746, %747, %748 : vector<32x128xi1>, vector<32x128xf32>
    %750 = vector.extract_strided_slice %629 {offsets = [0, 0, 0], sizes = [1, 32, 1], strides = [1, 1, 1]} : vector<3x32x14xf32> to vector<1x32x1xf32>
    %751 = vector.shape_cast %750 : vector<1x32x1xf32> to vector<32x1xf32>
    %752 = vector.extract_strided_slice %629 {offsets = [0, 0, 1], sizes = [1, 32, 1], strides = [1, 1, 1]} : vector<3x32x14xf32> to vector<1x32x1xf32>
    %753 = vector.shape_cast %752 : vector<1x32x1xf32> to vector<32x1xf32>
    %754 = vector.broadcast %632 : vector<32x1xf32> to vector<32x128xf32>
    %755 = arith.subf %627, %754 : vector<32x128xf32>
    %756 = vector.broadcast %751 : vector<32x1xf32> to vector<32x128xf32>
    %757 = arith.mulf %755, %756 : vector<32x128xf32>
    %758 = arith.mulf %757, %653 : vector<32x128xf32>
    %759 = vector.broadcast %634 : vector<32x1xf32> to vector<32x128xf32>
    %760 = arith.subf %759, %627 : vector<32x128xf32>
    %761 = vector.broadcast %753 : vector<32x1xf32> to vector<32x128xf32>
    %762 = arith.mulf %760, %761 : vector<32x128xf32>
    %763 = arith.mulf %762, %661 : vector<32x128xf32>
    %764 = arith.addf %758, %763 : vector<32x128xf32>
    %765 = vector.extract_strided_slice %629 {offsets = [0, 0, 1], sizes = [1, 32, 1], strides = [1, 1, 1]} : vector<3x32x14xf32> to vector<1x32x1xf32>
    %766 = vector.shape_cast %765 : vector<1x32x1xf32> to vector<32x1xf32>
    %767 = vector.extract_strided_slice %629 {offsets = [0, 0, 2], sizes = [1, 32, 1], strides = [1, 1, 1]} : vector<3x32x14xf32> to vector<1x32x1xf32>
    %768 = vector.shape_cast %767 : vector<1x32x1xf32> to vector<32x1xf32>
    %769 = vector.broadcast %633 : vector<32x1xf32> to vector<32x128xf32>
    %770 = arith.subf %627, %769 : vector<32x128xf32>
    %771 = vector.broadcast %766 : vector<32x1xf32> to vector<32x128xf32>
    %772 = arith.mulf %770, %771 : vector<32x128xf32>
    %773 = arith.mulf %772, %661 : vector<32x128xf32>
    %774 = vector.broadcast %635 : vector<32x1xf32> to vector<32x128xf32>
    %775 = arith.subf %774, %627 : vector<32x128xf32>
    %776 = vector.broadcast %768 : vector<32x1xf32> to vector<32x128xf32>
    %777 = arith.mulf %775, %776 : vector<32x128xf32>
    %778 = arith.mulf %777, %669 : vector<32x128xf32>
    %779 = arith.addf %773, %778 : vector<32x128xf32>
    %780 = vector.extract_strided_slice %629 {offsets = [0, 0, 2], sizes = [1, 32, 1], strides = [1, 1, 1]} : vector<3x32x14xf32> to vector<1x32x1xf32>
    %781 = vector.shape_cast %780 : vector<1x32x1xf32> to vector<32x1xf32>
    %782 = vector.extract_strided_slice %629 {offsets = [0, 0, 3], sizes = [1, 32, 1], strides = [1, 1, 1]} : vector<3x32x14xf32> to vector<1x32x1xf32>
    %783 = vector.shape_cast %782 : vector<1x32x1xf32> to vector<32x1xf32>
    %784 = vector.broadcast %634 : vector<32x1xf32> to vector<32x128xf32>
    %785 = arith.subf %627, %784 : vector<32x128xf32>
    %786 = vector.broadcast %781 : vector<32x1xf32> to vector<32x128xf32>
    %787 = arith.mulf %785, %786 : vector<32x128xf32>
    %788 = arith.mulf %787, %669 : vector<32x128xf32>
    %789 = vector.broadcast %636 : vector<32x1xf32> to vector<32x128xf32>
    %790 = arith.subf %789, %627 : vector<32x128xf32>
    %791 = vector.broadcast %783 : vector<32x1xf32> to vector<32x128xf32>
    %792 = arith.mulf %790, %791 : vector<32x128xf32>
    %793 = arith.mulf %792, %677 : vector<32x128xf32>
    %794 = arith.addf %788, %793 : vector<32x128xf32>
    %795 = vector.extract_strided_slice %629 {offsets = [0, 0, 3], sizes = [1, 32, 1], strides = [1, 1, 1]} : vector<3x32x14xf32> to vector<1x32x1xf32>
    %796 = vector.shape_cast %795 : vector<1x32x1xf32> to vector<32x1xf32>
    %797 = vector.extract_strided_slice %629 {offsets = [0, 0, 4], sizes = [1, 32, 1], strides = [1, 1, 1]} : vector<3x32x14xf32> to vector<1x32x1xf32>
    %798 = vector.shape_cast %797 : vector<1x32x1xf32> to vector<32x1xf32>
    %799 = vector.broadcast %635 : vector<32x1xf32> to vector<32x128xf32>
    %800 = arith.subf %627, %799 : vector<32x128xf32>
    %801 = vector.broadcast %796 : vector<32x1xf32> to vector<32x128xf32>
    %802 = arith.mulf %800, %801 : vector<32x128xf32>
    %803 = arith.mulf %802, %677 : vector<32x128xf32>
    %804 = vector.broadcast %637 : vector<32x1xf32> to vector<32x128xf32>
    %805 = arith.subf %804, %627 : vector<32x128xf32>
    %806 = vector.broadcast %798 : vector<32x1xf32> to vector<32x128xf32>
    %807 = arith.mulf %805, %806 : vector<32x128xf32>
    %808 = arith.mulf %807, %685 : vector<32x128xf32>
    %809 = arith.addf %803, %808 : vector<32x128xf32>
    %810 = vector.extract_strided_slice %629 {offsets = [0, 0, 4], sizes = [1, 32, 1], strides = [1, 1, 1]} : vector<3x32x14xf32> to vector<1x32x1xf32>
    %811 = vector.shape_cast %810 : vector<1x32x1xf32> to vector<32x1xf32>
    %812 = vector.extract_strided_slice %629 {offsets = [0, 0, 5], sizes = [1, 32, 1], strides = [1, 1, 1]} : vector<3x32x14xf32> to vector<1x32x1xf32>
    %813 = vector.shape_cast %812 : vector<1x32x1xf32> to vector<32x1xf32>
    %814 = vector.broadcast %636 : vector<32x1xf32> to vector<32x128xf32>
    %815 = arith.subf %627, %814 : vector<32x128xf32>
    %816 = vector.broadcast %811 : vector<32x1xf32> to vector<32x128xf32>
    %817 = arith.mulf %815, %816 : vector<32x128xf32>
    %818 = arith.mulf %817, %685 : vector<32x128xf32>
    %819 = vector.broadcast %638 : vector<32x1xf32> to vector<32x128xf32>
    %820 = arith.subf %819, %627 : vector<32x128xf32>
    %821 = vector.broadcast %813 : vector<32x1xf32> to vector<32x128xf32>
    %822 = arith.mulf %820, %821 : vector<32x128xf32>
    %823 = arith.mulf %822, %693 : vector<32x128xf32>
    %824 = arith.addf %818, %823 : vector<32x128xf32>
    %825 = vector.extract_strided_slice %629 {offsets = [0, 0, 5], sizes = [1, 32, 1], strides = [1, 1, 1]} : vector<3x32x14xf32> to vector<1x32x1xf32>
    %826 = vector.shape_cast %825 : vector<1x32x1xf32> to vector<32x1xf32>
    %827 = vector.extract_strided_slice %629 {offsets = [0, 0, 6], sizes = [1, 32, 1], strides = [1, 1, 1]} : vector<3x32x14xf32> to vector<1x32x1xf32>
    %828 = vector.shape_cast %827 : vector<1x32x1xf32> to vector<32x1xf32>
    %829 = vector.broadcast %637 : vector<32x1xf32> to vector<32x128xf32>
    %830 = arith.subf %627, %829 : vector<32x128xf32>
    %831 = vector.broadcast %826 : vector<32x1xf32> to vector<32x128xf32>
    %832 = arith.mulf %830, %831 : vector<32x128xf32>
    %833 = arith.mulf %832, %693 : vector<32x128xf32>
    %834 = vector.broadcast %639 : vector<32x1xf32> to vector<32x128xf32>
    %835 = arith.subf %834, %627 : vector<32x128xf32>
    %836 = vector.broadcast %828 : vector<32x1xf32> to vector<32x128xf32>
    %837 = arith.mulf %835, %836 : vector<32x128xf32>
    %838 = arith.mulf %837, %701 : vector<32x128xf32>
    %839 = arith.addf %833, %838 : vector<32x128xf32>
    %840 = vector.extract_strided_slice %629 {offsets = [0, 0, 6], sizes = [1, 32, 1], strides = [1, 1, 1]} : vector<3x32x14xf32> to vector<1x32x1xf32>
    %841 = vector.shape_cast %840 : vector<1x32x1xf32> to vector<32x1xf32>
    %842 = vector.extract_strided_slice %629 {offsets = [0, 0, 7], sizes = [1, 32, 1], strides = [1, 1, 1]} : vector<3x32x14xf32> to vector<1x32x1xf32>
    %843 = vector.shape_cast %842 : vector<1x32x1xf32> to vector<32x1xf32>
    %844 = vector.broadcast %638 : vector<32x1xf32> to vector<32x128xf32>
    %845 = arith.subf %627, %844 : vector<32x128xf32>
    %846 = vector.broadcast %841 : vector<32x1xf32> to vector<32x128xf32>
    %847 = arith.mulf %845, %846 : vector<32x128xf32>
    %848 = arith.mulf %847, %701 : vector<32x128xf32>
    %849 = vector.broadcast %640 : vector<32x1xf32> to vector<32x128xf32>
    %850 = arith.subf %849, %627 : vector<32x128xf32>
    %851 = vector.broadcast %843 : vector<32x1xf32> to vector<32x128xf32>
    %852 = arith.mulf %850, %851 : vector<32x128xf32>
    %853 = arith.mulf %852, %709 : vector<32x128xf32>
    %854 = arith.addf %848, %853 : vector<32x128xf32>
    %855 = vector.extract_strided_slice %629 {offsets = [0, 0, 7], sizes = [1, 32, 1], strides = [1, 1, 1]} : vector<3x32x14xf32> to vector<1x32x1xf32>
    %856 = vector.shape_cast %855 : vector<1x32x1xf32> to vector<32x1xf32>
    %857 = vector.extract_strided_slice %629 {offsets = [0, 0, 8], sizes = [1, 32, 1], strides = [1, 1, 1]} : vector<3x32x14xf32> to vector<1x32x1xf32>
    %858 = vector.shape_cast %857 : vector<1x32x1xf32> to vector<32x1xf32>
    %859 = vector.broadcast %639 : vector<32x1xf32> to vector<32x128xf32>
    %860 = arith.subf %627, %859 : vector<32x128xf32>
    %861 = vector.broadcast %856 : vector<32x1xf32> to vector<32x128xf32>
    %862 = arith.mulf %860, %861 : vector<32x128xf32>
    %863 = arith.mulf %862, %709 : vector<32x128xf32>
    %864 = vector.broadcast %641 : vector<32x1xf32> to vector<32x128xf32>
    %865 = arith.subf %864, %627 : vector<32x128xf32>
    %866 = vector.broadcast %858 : vector<32x1xf32> to vector<32x128xf32>
    %867 = arith.mulf %865, %866 : vector<32x128xf32>
    %868 = arith.mulf %867, %717 : vector<32x128xf32>
    %869 = arith.addf %863, %868 : vector<32x128xf32>
    %870 = vector.extract_strided_slice %629 {offsets = [0, 0, 8], sizes = [1, 32, 1], strides = [1, 1, 1]} : vector<3x32x14xf32> to vector<1x32x1xf32>
    %871 = vector.shape_cast %870 : vector<1x32x1xf32> to vector<32x1xf32>
    %872 = vector.extract_strided_slice %629 {offsets = [0, 0, 9], sizes = [1, 32, 1], strides = [1, 1, 1]} : vector<3x32x14xf32> to vector<1x32x1xf32>
    %873 = vector.shape_cast %872 : vector<1x32x1xf32> to vector<32x1xf32>
    %874 = vector.broadcast %640 : vector<32x1xf32> to vector<32x128xf32>
    %875 = arith.subf %627, %874 : vector<32x128xf32>
    %876 = vector.broadcast %871 : vector<32x1xf32> to vector<32x128xf32>
    %877 = arith.mulf %875, %876 : vector<32x128xf32>
    %878 = arith.mulf %877, %717 : vector<32x128xf32>
    %879 = vector.broadcast %642 : vector<32x1xf32> to vector<32x128xf32>
    %880 = arith.subf %879, %627 : vector<32x128xf32>
    %881 = vector.broadcast %873 : vector<32x1xf32> to vector<32x128xf32>
    %882 = arith.mulf %880, %881 : vector<32x128xf32>
    %883 = arith.mulf %882, %725 : vector<32x128xf32>
    %884 = arith.addf %878, %883 : vector<32x128xf32>
    %885 = vector.extract_strided_slice %629 {offsets = [0, 0, 9], sizes = [1, 32, 1], strides = [1, 1, 1]} : vector<3x32x14xf32> to vector<1x32x1xf32>
    %886 = vector.shape_cast %885 : vector<1x32x1xf32> to vector<32x1xf32>
    %887 = vector.extract_strided_slice %629 {offsets = [0, 0, 10], sizes = [1, 32, 1], strides = [1, 1, 1]} : vector<3x32x14xf32> to vector<1x32x1xf32>
    %888 = vector.shape_cast %887 : vector<1x32x1xf32> to vector<32x1xf32>
    %889 = vector.broadcast %641 : vector<32x1xf32> to vector<32x128xf32>
    %890 = arith.subf %627, %889 : vector<32x128xf32>
    %891 = vector.broadcast %886 : vector<32x1xf32> to vector<32x128xf32>
    %892 = arith.mulf %890, %891 : vector<32x128xf32>
    %893 = arith.mulf %892, %725 : vector<32x128xf32>
    %894 = vector.broadcast %643 : vector<32x1xf32> to vector<32x128xf32>
    %895 = arith.subf %894, %627 : vector<32x128xf32>
    %896 = vector.broadcast %888 : vector<32x1xf32> to vector<32x128xf32>
    %897 = arith.mulf %895, %896 : vector<32x128xf32>
    %898 = arith.mulf %897, %733 : vector<32x128xf32>
    %899 = arith.addf %893, %898 : vector<32x128xf32>
    %900 = vector.extract_strided_slice %629 {offsets = [0, 0, 10], sizes = [1, 32, 1], strides = [1, 1, 1]} : vector<3x32x14xf32> to vector<1x32x1xf32>
    %901 = vector.shape_cast %900 : vector<1x32x1xf32> to vector<32x1xf32>
    %902 = vector.extract_strided_slice %629 {offsets = [0, 0, 11], sizes = [1, 32, 1], strides = [1, 1, 1]} : vector<3x32x14xf32> to vector<1x32x1xf32>
    %903 = vector.shape_cast %902 : vector<1x32x1xf32> to vector<32x1xf32>
    %904 = vector.broadcast %642 : vector<32x1xf32> to vector<32x128xf32>
    %905 = arith.subf %627, %904 : vector<32x128xf32>
    %906 = vector.broadcast %901 : vector<32x1xf32> to vector<32x128xf32>
    %907 = arith.mulf %905, %906 : vector<32x128xf32>
    %908 = arith.mulf %907, %733 : vector<32x128xf32>
    %909 = vector.broadcast %644 : vector<32x1xf32> to vector<32x128xf32>
    %910 = arith.subf %909, %627 : vector<32x128xf32>
    %911 = vector.broadcast %903 : vector<32x1xf32> to vector<32x128xf32>
    %912 = arith.mulf %910, %911 : vector<32x128xf32>
    %913 = arith.mulf %912, %741 : vector<32x128xf32>
    %914 = arith.addf %908, %913 : vector<32x128xf32>
    %915 = vector.extract_strided_slice %629 {offsets = [0, 0, 11], sizes = [1, 32, 1], strides = [1, 1, 1]} : vector<3x32x14xf32> to vector<1x32x1xf32>
    %916 = vector.shape_cast %915 : vector<1x32x1xf32> to vector<32x1xf32>
    %917 = vector.extract_strided_slice %629 {offsets = [0, 0, 12], sizes = [1, 32, 1], strides = [1, 1, 1]} : vector<3x32x14xf32> to vector<1x32x1xf32>
    %918 = vector.shape_cast %917 : vector<1x32x1xf32> to vector<32x1xf32>
    %919 = vector.broadcast %643 : vector<32x1xf32> to vector<32x128xf32>
    %920 = arith.subf %627, %919 : vector<32x128xf32>
    %921 = vector.broadcast %916 : vector<32x1xf32> to vector<32x128xf32>
    %922 = arith.mulf %920, %921 : vector<32x128xf32>
    %923 = arith.mulf %922, %741 : vector<32x128xf32>
    %924 = vector.broadcast %645 : vector<32x1xf32> to vector<32x128xf32>
    %925 = arith.subf %924, %627 : vector<32x128xf32>
    %926 = vector.broadcast %918 : vector<32x1xf32> to vector<32x128xf32>
    %927 = arith.mulf %925, %926 : vector<32x128xf32>
    %928 = arith.mulf %927, %749 : vector<32x128xf32>
    %929 = arith.addf %923, %928 : vector<32x128xf32>
    %930 = vector.extract_strided_slice %629 {offsets = [1, 0, 0], sizes = [1, 32, 1], strides = [1, 1, 1]} : vector<3x32x14xf32> to vector<1x32x1xf32>
    %931 = vector.shape_cast %930 : vector<1x32x1xf32> to vector<32x1xf32>
    %932 = vector.extract_strided_slice %629 {offsets = [1, 0, 1], sizes = [1, 32, 1], strides = [1, 1, 1]} : vector<3x32x14xf32> to vector<1x32x1xf32>
    %933 = vector.shape_cast %932 : vector<1x32x1xf32> to vector<32x1xf32>
    %934 = vector.broadcast %632 : vector<32x1xf32> to vector<32x128xf32>
    %935 = arith.subf %627, %934 : vector<32x128xf32>
    %936 = vector.broadcast %931 : vector<32x1xf32> to vector<32x128xf32>
    %937 = arith.mulf %935, %936 : vector<32x128xf32>
    %938 = arith.mulf %937, %764 : vector<32x128xf32>
    %939 = vector.broadcast %635 : vector<32x1xf32> to vector<32x128xf32>
    %940 = arith.subf %939, %627 : vector<32x128xf32>
    %941 = vector.broadcast %933 : vector<32x1xf32> to vector<32x128xf32>
    %942 = arith.mulf %940, %941 : vector<32x128xf32>
    %943 = arith.mulf %942, %779 : vector<32x128xf32>
    %944 = arith.addf %938, %943 : vector<32x128xf32>
    %945 = vector.extract_strided_slice %629 {offsets = [1, 0, 1], sizes = [1, 32, 1], strides = [1, 1, 1]} : vector<3x32x14xf32> to vector<1x32x1xf32>
    %946 = vector.shape_cast %945 : vector<1x32x1xf32> to vector<32x1xf32>
    %947 = vector.extract_strided_slice %629 {offsets = [1, 0, 2], sizes = [1, 32, 1], strides = [1, 1, 1]} : vector<3x32x14xf32> to vector<1x32x1xf32>
    %948 = vector.shape_cast %947 : vector<1x32x1xf32> to vector<32x1xf32>
    %949 = vector.broadcast %633 : vector<32x1xf32> to vector<32x128xf32>
    %950 = arith.subf %627, %949 : vector<32x128xf32>
    %951 = vector.broadcast %946 : vector<32x1xf32> to vector<32x128xf32>
    %952 = arith.mulf %950, %951 : vector<32x128xf32>
    %953 = arith.mulf %952, %779 : vector<32x128xf32>
    %954 = vector.broadcast %636 : vector<32x1xf32> to vector<32x128xf32>
    %955 = arith.subf %954, %627 : vector<32x128xf32>
    %956 = vector.broadcast %948 : vector<32x1xf32> to vector<32x128xf32>
    %957 = arith.mulf %955, %956 : vector<32x128xf32>
    %958 = arith.mulf %957, %794 : vector<32x128xf32>
    %959 = arith.addf %953, %958 : vector<32x128xf32>
    %960 = vector.extract_strided_slice %629 {offsets = [1, 0, 2], sizes = [1, 32, 1], strides = [1, 1, 1]} : vector<3x32x14xf32> to vector<1x32x1xf32>
    %961 = vector.shape_cast %960 : vector<1x32x1xf32> to vector<32x1xf32>
    %962 = vector.extract_strided_slice %629 {offsets = [1, 0, 3], sizes = [1, 32, 1], strides = [1, 1, 1]} : vector<3x32x14xf32> to vector<1x32x1xf32>
    %963 = vector.shape_cast %962 : vector<1x32x1xf32> to vector<32x1xf32>
    %964 = vector.broadcast %634 : vector<32x1xf32> to vector<32x128xf32>
    %965 = arith.subf %627, %964 : vector<32x128xf32>
    %966 = vector.broadcast %961 : vector<32x1xf32> to vector<32x128xf32>
    %967 = arith.mulf %965, %966 : vector<32x128xf32>
    %968 = arith.mulf %967, %794 : vector<32x128xf32>
    %969 = vector.broadcast %637 : vector<32x1xf32> to vector<32x128xf32>
    %970 = arith.subf %969, %627 : vector<32x128xf32>
    %971 = vector.broadcast %963 : vector<32x1xf32> to vector<32x128xf32>
    %972 = arith.mulf %970, %971 : vector<32x128xf32>
    %973 = arith.mulf %972, %809 : vector<32x128xf32>
    %974 = arith.addf %968, %973 : vector<32x128xf32>
    %975 = vector.extract_strided_slice %629 {offsets = [1, 0, 3], sizes = [1, 32, 1], strides = [1, 1, 1]} : vector<3x32x14xf32> to vector<1x32x1xf32>
    %976 = vector.shape_cast %975 : vector<1x32x1xf32> to vector<32x1xf32>
    %977 = vector.extract_strided_slice %629 {offsets = [1, 0, 4], sizes = [1, 32, 1], strides = [1, 1, 1]} : vector<3x32x14xf32> to vector<1x32x1xf32>
    %978 = vector.shape_cast %977 : vector<1x32x1xf32> to vector<32x1xf32>
    %979 = vector.broadcast %635 : vector<32x1xf32> to vector<32x128xf32>
    %980 = arith.subf %627, %979 : vector<32x128xf32>
    %981 = vector.broadcast %976 : vector<32x1xf32> to vector<32x128xf32>
    %982 = arith.mulf %980, %981 : vector<32x128xf32>
    %983 = arith.mulf %982, %809 : vector<32x128xf32>
    %984 = vector.broadcast %638 : vector<32x1xf32> to vector<32x128xf32>
    %985 = arith.subf %984, %627 : vector<32x128xf32>
    %986 = vector.broadcast %978 : vector<32x1xf32> to vector<32x128xf32>
    %987 = arith.mulf %985, %986 : vector<32x128xf32>
    %988 = arith.mulf %987, %824 : vector<32x128xf32>
    %989 = arith.addf %983, %988 : vector<32x128xf32>
    %990 = vector.extract_strided_slice %629 {offsets = [1, 0, 4], sizes = [1, 32, 1], strides = [1, 1, 1]} : vector<3x32x14xf32> to vector<1x32x1xf32>
    %991 = vector.shape_cast %990 : vector<1x32x1xf32> to vector<32x1xf32>
    %992 = vector.extract_strided_slice %629 {offsets = [1, 0, 5], sizes = [1, 32, 1], strides = [1, 1, 1]} : vector<3x32x14xf32> to vector<1x32x1xf32>
    %993 = vector.shape_cast %992 : vector<1x32x1xf32> to vector<32x1xf32>
    %994 = vector.broadcast %636 : vector<32x1xf32> to vector<32x128xf32>
    %995 = arith.subf %627, %994 : vector<32x128xf32>
    %996 = vector.broadcast %991 : vector<32x1xf32> to vector<32x128xf32>
    %997 = arith.mulf %995, %996 : vector<32x128xf32>
    %998 = arith.mulf %997, %824 : vector<32x128xf32>
    %999 = vector.broadcast %639 : vector<32x1xf32> to vector<32x128xf32>
    %1000 = arith.subf %999, %627 : vector<32x128xf32>
    %1001 = vector.broadcast %993 : vector<32x1xf32> to vector<32x128xf32>
    %1002 = arith.mulf %1000, %1001 : vector<32x128xf32>
    %1003 = arith.mulf %1002, %839 : vector<32x128xf32>
    %1004 = arith.addf %998, %1003 : vector<32x128xf32>
    %1005 = vector.extract_strided_slice %629 {offsets = [1, 0, 5], sizes = [1, 32, 1], strides = [1, 1, 1]} : vector<3x32x14xf32> to vector<1x32x1xf32>
    %1006 = vector.shape_cast %1005 : vector<1x32x1xf32> to vector<32x1xf32>
    %1007 = vector.extract_strided_slice %629 {offsets = [1, 0, 6], sizes = [1, 32, 1], strides = [1, 1, 1]} : vector<3x32x14xf32> to vector<1x32x1xf32>
    %1008 = vector.shape_cast %1007 : vector<1x32x1xf32> to vector<32x1xf32>
    %1009 = vector.broadcast %637 : vector<32x1xf32> to vector<32x128xf32>
    %1010 = arith.subf %627, %1009 : vector<32x128xf32>
    %1011 = vector.broadcast %1006 : vector<32x1xf32> to vector<32x128xf32>
    %1012 = arith.mulf %1010, %1011 : vector<32x128xf32>
    %1013 = arith.mulf %1012, %839 : vector<32x128xf32>
    %1014 = vector.broadcast %640 : vector<32x1xf32> to vector<32x128xf32>
    %1015 = arith.subf %1014, %627 : vector<32x128xf32>
    %1016 = vector.broadcast %1008 : vector<32x1xf32> to vector<32x128xf32>
    %1017 = arith.mulf %1015, %1016 : vector<32x128xf32>
    %1018 = arith.mulf %1017, %854 : vector<32x128xf32>
    %1019 = arith.addf %1013, %1018 : vector<32x128xf32>
    %1020 = vector.extract_strided_slice %629 {offsets = [1, 0, 6], sizes = [1, 32, 1], strides = [1, 1, 1]} : vector<3x32x14xf32> to vector<1x32x1xf32>
    %1021 = vector.shape_cast %1020 : vector<1x32x1xf32> to vector<32x1xf32>
    %1022 = vector.extract_strided_slice %629 {offsets = [1, 0, 7], sizes = [1, 32, 1], strides = [1, 1, 1]} : vector<3x32x14xf32> to vector<1x32x1xf32>
    %1023 = vector.shape_cast %1022 : vector<1x32x1xf32> to vector<32x1xf32>
    %1024 = vector.broadcast %638 : vector<32x1xf32> to vector<32x128xf32>
    %1025 = arith.subf %627, %1024 : vector<32x128xf32>
    %1026 = vector.broadcast %1021 : vector<32x1xf32> to vector<32x128xf32>
    %1027 = arith.mulf %1025, %1026 : vector<32x128xf32>
    %1028 = arith.mulf %1027, %854 : vector<32x128xf32>
    %1029 = vector.broadcast %641 : vector<32x1xf32> to vector<32x128xf32>
    %1030 = arith.subf %1029, %627 : vector<32x128xf32>
    %1031 = vector.broadcast %1023 : vector<32x1xf32> to vector<32x128xf32>
    %1032 = arith.mulf %1030, %1031 : vector<32x128xf32>
    %1033 = arith.mulf %1032, %869 : vector<32x128xf32>
    %1034 = arith.addf %1028, %1033 : vector<32x128xf32>
    %1035 = vector.extract_strided_slice %629 {offsets = [1, 0, 7], sizes = [1, 32, 1], strides = [1, 1, 1]} : vector<3x32x14xf32> to vector<1x32x1xf32>
    %1036 = vector.shape_cast %1035 : vector<1x32x1xf32> to vector<32x1xf32>
    %1037 = vector.extract_strided_slice %629 {offsets = [1, 0, 8], sizes = [1, 32, 1], strides = [1, 1, 1]} : vector<3x32x14xf32> to vector<1x32x1xf32>
    %1038 = vector.shape_cast %1037 : vector<1x32x1xf32> to vector<32x1xf32>
    %1039 = vector.broadcast %639 : vector<32x1xf32> to vector<32x128xf32>
    %1040 = arith.subf %627, %1039 : vector<32x128xf32>
    %1041 = vector.broadcast %1036 : vector<32x1xf32> to vector<32x128xf32>
    %1042 = arith.mulf %1040, %1041 : vector<32x128xf32>
    %1043 = arith.mulf %1042, %869 : vector<32x128xf32>
    %1044 = vector.broadcast %642 : vector<32x1xf32> to vector<32x128xf32>
    %1045 = arith.subf %1044, %627 : vector<32x128xf32>
    %1046 = vector.broadcast %1038 : vector<32x1xf32> to vector<32x128xf32>
    %1047 = arith.mulf %1045, %1046 : vector<32x128xf32>
    %1048 = arith.mulf %1047, %884 : vector<32x128xf32>
    %1049 = arith.addf %1043, %1048 : vector<32x128xf32>
    %1050 = vector.extract_strided_slice %629 {offsets = [1, 0, 8], sizes = [1, 32, 1], strides = [1, 1, 1]} : vector<3x32x14xf32> to vector<1x32x1xf32>
    %1051 = vector.shape_cast %1050 : vector<1x32x1xf32> to vector<32x1xf32>
    %1052 = vector.extract_strided_slice %629 {offsets = [1, 0, 9], sizes = [1, 32, 1], strides = [1, 1, 1]} : vector<3x32x14xf32> to vector<1x32x1xf32>
    %1053 = vector.shape_cast %1052 : vector<1x32x1xf32> to vector<32x1xf32>
    %1054 = vector.broadcast %640 : vector<32x1xf32> to vector<32x128xf32>
    %1055 = arith.subf %627, %1054 : vector<32x128xf32>
    %1056 = vector.broadcast %1051 : vector<32x1xf32> to vector<32x128xf32>
    %1057 = arith.mulf %1055, %1056 : vector<32x128xf32>
    %1058 = arith.mulf %1057, %884 : vector<32x128xf32>
    %1059 = vector.broadcast %643 : vector<32x1xf32> to vector<32x128xf32>
    %1060 = arith.subf %1059, %627 : vector<32x128xf32>
    %1061 = vector.broadcast %1053 : vector<32x1xf32> to vector<32x128xf32>
    %1062 = arith.mulf %1060, %1061 : vector<32x128xf32>
    %1063 = arith.mulf %1062, %899 : vector<32x128xf32>
    %1064 = arith.addf %1058, %1063 : vector<32x128xf32>
    %1065 = vector.extract_strided_slice %629 {offsets = [1, 0, 9], sizes = [1, 32, 1], strides = [1, 1, 1]} : vector<3x32x14xf32> to vector<1x32x1xf32>
    %1066 = vector.shape_cast %1065 : vector<1x32x1xf32> to vector<32x1xf32>
    %1067 = vector.extract_strided_slice %629 {offsets = [1, 0, 10], sizes = [1, 32, 1], strides = [1, 1, 1]} : vector<3x32x14xf32> to vector<1x32x1xf32>
    %1068 = vector.shape_cast %1067 : vector<1x32x1xf32> to vector<32x1xf32>
    %1069 = vector.broadcast %641 : vector<32x1xf32> to vector<32x128xf32>
    %1070 = arith.subf %627, %1069 : vector<32x128xf32>
    %1071 = vector.broadcast %1066 : vector<32x1xf32> to vector<32x128xf32>
    %1072 = arith.mulf %1070, %1071 : vector<32x128xf32>
    %1073 = arith.mulf %1072, %899 : vector<32x128xf32>
    %1074 = vector.broadcast %644 : vector<32x1xf32> to vector<32x128xf32>
    %1075 = arith.subf %1074, %627 : vector<32x128xf32>
    %1076 = vector.broadcast %1068 : vector<32x1xf32> to vector<32x128xf32>
    %1077 = arith.mulf %1075, %1076 : vector<32x128xf32>
    %1078 = arith.mulf %1077, %914 : vector<32x128xf32>
    %1079 = arith.addf %1073, %1078 : vector<32x128xf32>
    %1080 = vector.extract_strided_slice %629 {offsets = [1, 0, 10], sizes = [1, 32, 1], strides = [1, 1, 1]} : vector<3x32x14xf32> to vector<1x32x1xf32>
    %1081 = vector.shape_cast %1080 : vector<1x32x1xf32> to vector<32x1xf32>
    %1082 = vector.extract_strided_slice %629 {offsets = [1, 0, 11], sizes = [1, 32, 1], strides = [1, 1, 1]} : vector<3x32x14xf32> to vector<1x32x1xf32>
    %1083 = vector.shape_cast %1082 : vector<1x32x1xf32> to vector<32x1xf32>
    %1084 = vector.broadcast %642 : vector<32x1xf32> to vector<32x128xf32>
    %1085 = arith.subf %627, %1084 : vector<32x128xf32>
    %1086 = vector.broadcast %1081 : vector<32x1xf32> to vector<32x128xf32>
    %1087 = arith.mulf %1085, %1086 : vector<32x128xf32>
    %1088 = arith.mulf %1087, %914 : vector<32x128xf32>
    %1089 = vector.broadcast %645 : vector<32x1xf32> to vector<32x128xf32>
    %1090 = arith.subf %1089, %627 : vector<32x128xf32>
    %1091 = vector.broadcast %1083 : vector<32x1xf32> to vector<32x128xf32>
    %1092 = arith.mulf %1090, %1091 : vector<32x128xf32>
    %1093 = arith.mulf %1092, %929 : vector<32x128xf32>
    %1094 = arith.addf %1088, %1093 : vector<32x128xf32>
    %1095 = vector.extract_strided_slice %629 {offsets = [2, 0, 0], sizes = [1, 32, 1], strides = [1, 1, 1]} : vector<3x32x14xf32> to vector<1x32x1xf32>
    %1096 = vector.shape_cast %1095 : vector<1x32x1xf32> to vector<32x1xf32>
    %1097 = vector.extract_strided_slice %629 {offsets = [2, 0, 1], sizes = [1, 32, 1], strides = [1, 1, 1]} : vector<3x32x14xf32> to vector<1x32x1xf32>
    %1098 = vector.shape_cast %1097 : vector<1x32x1xf32> to vector<32x1xf32>
    %1099 = vector.broadcast %632 : vector<32x1xf32> to vector<32x128xf32>
    %1100 = arith.subf %627, %1099 : vector<32x128xf32>
    %1101 = vector.broadcast %1096 : vector<32x1xf32> to vector<32x128xf32>
    %1102 = arith.mulf %1100, %1101 : vector<32x128xf32>
    %1103 = arith.mulf %1102, %944 : vector<32x128xf32>
    %1104 = vector.broadcast %636 : vector<32x1xf32> to vector<32x128xf32>
    %1105 = arith.subf %1104, %627 : vector<32x128xf32>
    %1106 = vector.broadcast %1098 : vector<32x1xf32> to vector<32x128xf32>
    %1107 = arith.mulf %1105, %1106 : vector<32x128xf32>
    %1108 = arith.mulf %1107, %959 : vector<32x128xf32>
    %1109 = arith.addf %1103, %1108 : vector<32x128xf32>
    %1110 = vector.extract_strided_slice %629 {offsets = [2, 0, 1], sizes = [1, 32, 1], strides = [1, 1, 1]} : vector<3x32x14xf32> to vector<1x32x1xf32>
    %1111 = vector.shape_cast %1110 : vector<1x32x1xf32> to vector<32x1xf32>
    %1112 = vector.extract_strided_slice %629 {offsets = [2, 0, 2], sizes = [1, 32, 1], strides = [1, 1, 1]} : vector<3x32x14xf32> to vector<1x32x1xf32>
    %1113 = vector.shape_cast %1112 : vector<1x32x1xf32> to vector<32x1xf32>
    %1114 = vector.broadcast %633 : vector<32x1xf32> to vector<32x128xf32>
    %1115 = arith.subf %627, %1114 : vector<32x128xf32>
    %1116 = vector.broadcast %1111 : vector<32x1xf32> to vector<32x128xf32>
    %1117 = arith.mulf %1115, %1116 : vector<32x128xf32>
    %1118 = arith.mulf %1117, %959 : vector<32x128xf32>
    %1119 = vector.broadcast %637 : vector<32x1xf32> to vector<32x128xf32>
    %1120 = arith.subf %1119, %627 : vector<32x128xf32>
    %1121 = vector.broadcast %1113 : vector<32x1xf32> to vector<32x128xf32>
    %1122 = arith.mulf %1120, %1121 : vector<32x128xf32>
    %1123 = arith.mulf %1122, %974 : vector<32x128xf32>
    %1124 = arith.addf %1118, %1123 : vector<32x128xf32>
    %1125 = vector.extract_strided_slice %629 {offsets = [2, 0, 2], sizes = [1, 32, 1], strides = [1, 1, 1]} : vector<3x32x14xf32> to vector<1x32x1xf32>
    %1126 = vector.shape_cast %1125 : vector<1x32x1xf32> to vector<32x1xf32>
    %1127 = vector.extract_strided_slice %629 {offsets = [2, 0, 3], sizes = [1, 32, 1], strides = [1, 1, 1]} : vector<3x32x14xf32> to vector<1x32x1xf32>
    %1128 = vector.shape_cast %1127 : vector<1x32x1xf32> to vector<32x1xf32>
    %1129 = vector.broadcast %634 : vector<32x1xf32> to vector<32x128xf32>
    %1130 = arith.subf %627, %1129 : vector<32x128xf32>
    %1131 = vector.broadcast %1126 : vector<32x1xf32> to vector<32x128xf32>
    %1132 = arith.mulf %1130, %1131 : vector<32x128xf32>
    %1133 = arith.mulf %1132, %974 : vector<32x128xf32>
    %1134 = vector.broadcast %638 : vector<32x1xf32> to vector<32x128xf32>
    %1135 = arith.subf %1134, %627 : vector<32x128xf32>
    %1136 = vector.broadcast %1128 : vector<32x1xf32> to vector<32x128xf32>
    %1137 = arith.mulf %1135, %1136 : vector<32x128xf32>
    %1138 = arith.mulf %1137, %989 : vector<32x128xf32>
    %1139 = arith.addf %1133, %1138 : vector<32x128xf32>
    %1140 = vector.extract_strided_slice %629 {offsets = [2, 0, 3], sizes = [1, 32, 1], strides = [1, 1, 1]} : vector<3x32x14xf32> to vector<1x32x1xf32>
    %1141 = vector.shape_cast %1140 : vector<1x32x1xf32> to vector<32x1xf32>
    %1142 = vector.extract_strided_slice %629 {offsets = [2, 0, 4], sizes = [1, 32, 1], strides = [1, 1, 1]} : vector<3x32x14xf32> to vector<1x32x1xf32>
    %1143 = vector.shape_cast %1142 : vector<1x32x1xf32> to vector<32x1xf32>
    %1144 = vector.broadcast %635 : vector<32x1xf32> to vector<32x128xf32>
    %1145 = arith.subf %627, %1144 : vector<32x128xf32>
    %1146 = vector.broadcast %1141 : vector<32x1xf32> to vector<32x128xf32>
    %1147 = arith.mulf %1145, %1146 : vector<32x128xf32>
    %1148 = arith.mulf %1147, %989 : vector<32x128xf32>
    %1149 = vector.broadcast %639 : vector<32x1xf32> to vector<32x128xf32>
    %1150 = arith.subf %1149, %627 : vector<32x128xf32>
    %1151 = vector.broadcast %1143 : vector<32x1xf32> to vector<32x128xf32>
    %1152 = arith.mulf %1150, %1151 : vector<32x128xf32>
    %1153 = arith.mulf %1152, %1004 : vector<32x128xf32>
    %1154 = arith.addf %1148, %1153 : vector<32x128xf32>
    %1155 = vector.extract_strided_slice %629 {offsets = [2, 0, 4], sizes = [1, 32, 1], strides = [1, 1, 1]} : vector<3x32x14xf32> to vector<1x32x1xf32>
    %1156 = vector.shape_cast %1155 : vector<1x32x1xf32> to vector<32x1xf32>
    %1157 = vector.extract_strided_slice %629 {offsets = [2, 0, 5], sizes = [1, 32, 1], strides = [1, 1, 1]} : vector<3x32x14xf32> to vector<1x32x1xf32>
    %1158 = vector.shape_cast %1157 : vector<1x32x1xf32> to vector<32x1xf32>
    %1159 = vector.broadcast %636 : vector<32x1xf32> to vector<32x128xf32>
    %1160 = arith.subf %627, %1159 : vector<32x128xf32>
    %1161 = vector.broadcast %1156 : vector<32x1xf32> to vector<32x128xf32>
    %1162 = arith.mulf %1160, %1161 : vector<32x128xf32>
    %1163 = arith.mulf %1162, %1004 : vector<32x128xf32>
    %1164 = vector.broadcast %640 : vector<32x1xf32> to vector<32x128xf32>
    %1165 = arith.subf %1164, %627 : vector<32x128xf32>
    %1166 = vector.broadcast %1158 : vector<32x1xf32> to vector<32x128xf32>
    %1167 = arith.mulf %1165, %1166 : vector<32x128xf32>
    %1168 = arith.mulf %1167, %1019 : vector<32x128xf32>
    %1169 = arith.addf %1163, %1168 : vector<32x128xf32>
    %1170 = vector.extract_strided_slice %629 {offsets = [2, 0, 5], sizes = [1, 32, 1], strides = [1, 1, 1]} : vector<3x32x14xf32> to vector<1x32x1xf32>
    %1171 = vector.shape_cast %1170 : vector<1x32x1xf32> to vector<32x1xf32>
    %1172 = vector.extract_strided_slice %629 {offsets = [2, 0, 6], sizes = [1, 32, 1], strides = [1, 1, 1]} : vector<3x32x14xf32> to vector<1x32x1xf32>
    %1173 = vector.shape_cast %1172 : vector<1x32x1xf32> to vector<32x1xf32>
    %1174 = vector.broadcast %637 : vector<32x1xf32> to vector<32x128xf32>
    %1175 = arith.subf %627, %1174 : vector<32x128xf32>
    %1176 = vector.broadcast %1171 : vector<32x1xf32> to vector<32x128xf32>
    %1177 = arith.mulf %1175, %1176 : vector<32x128xf32>
    %1178 = arith.mulf %1177, %1019 : vector<32x128xf32>
    %1179 = vector.broadcast %641 : vector<32x1xf32> to vector<32x128xf32>
    %1180 = arith.subf %1179, %627 : vector<32x128xf32>
    %1181 = vector.broadcast %1173 : vector<32x1xf32> to vector<32x128xf32>
    %1182 = arith.mulf %1180, %1181 : vector<32x128xf32>
    %1183 = arith.mulf %1182, %1034 : vector<32x128xf32>
    %1184 = arith.addf %1178, %1183 : vector<32x128xf32>
    %1185 = vector.extract_strided_slice %629 {offsets = [2, 0, 6], sizes = [1, 32, 1], strides = [1, 1, 1]} : vector<3x32x14xf32> to vector<1x32x1xf32>
    %1186 = vector.shape_cast %1185 : vector<1x32x1xf32> to vector<32x1xf32>
    %1187 = vector.extract_strided_slice %629 {offsets = [2, 0, 7], sizes = [1, 32, 1], strides = [1, 1, 1]} : vector<3x32x14xf32> to vector<1x32x1xf32>
    %1188 = vector.shape_cast %1187 : vector<1x32x1xf32> to vector<32x1xf32>
    %1189 = vector.broadcast %638 : vector<32x1xf32> to vector<32x128xf32>
    %1190 = arith.subf %627, %1189 : vector<32x128xf32>
    %1191 = vector.broadcast %1186 : vector<32x1xf32> to vector<32x128xf32>
    %1192 = arith.mulf %1190, %1191 : vector<32x128xf32>
    %1193 = arith.mulf %1192, %1034 : vector<32x128xf32>
    %1194 = vector.broadcast %642 : vector<32x1xf32> to vector<32x128xf32>
    %1195 = arith.subf %1194, %627 : vector<32x128xf32>
    %1196 = vector.broadcast %1188 : vector<32x1xf32> to vector<32x128xf32>
    %1197 = arith.mulf %1195, %1196 : vector<32x128xf32>
    %1198 = arith.mulf %1197, %1049 : vector<32x128xf32>
    %1199 = arith.addf %1193, %1198 : vector<32x128xf32>
    %1200 = vector.extract_strided_slice %629 {offsets = [2, 0, 7], sizes = [1, 32, 1], strides = [1, 1, 1]} : vector<3x32x14xf32> to vector<1x32x1xf32>
    %1201 = vector.shape_cast %1200 : vector<1x32x1xf32> to vector<32x1xf32>
    %1202 = vector.extract_strided_slice %629 {offsets = [2, 0, 8], sizes = [1, 32, 1], strides = [1, 1, 1]} : vector<3x32x14xf32> to vector<1x32x1xf32>
    %1203 = vector.shape_cast %1202 : vector<1x32x1xf32> to vector<32x1xf32>
    %1204 = vector.broadcast %639 : vector<32x1xf32> to vector<32x128xf32>
    %1205 = arith.subf %627, %1204 : vector<32x128xf32>
    %1206 = vector.broadcast %1201 : vector<32x1xf32> to vector<32x128xf32>
    %1207 = arith.mulf %1205, %1206 : vector<32x128xf32>
    %1208 = arith.mulf %1207, %1049 : vector<32x128xf32>
    %1209 = vector.broadcast %643 : vector<32x1xf32> to vector<32x128xf32>
    %1210 = arith.subf %1209, %627 : vector<32x128xf32>
    %1211 = vector.broadcast %1203 : vector<32x1xf32> to vector<32x128xf32>
    %1212 = arith.mulf %1210, %1211 : vector<32x128xf32>
    %1213 = arith.mulf %1212, %1064 : vector<32x128xf32>
    %1214 = arith.addf %1208, %1213 : vector<32x128xf32>
    %1215 = vector.extract_strided_slice %629 {offsets = [2, 0, 8], sizes = [1, 32, 1], strides = [1, 1, 1]} : vector<3x32x14xf32> to vector<1x32x1xf32>
    %1216 = vector.shape_cast %1215 : vector<1x32x1xf32> to vector<32x1xf32>
    %1217 = vector.extract_strided_slice %629 {offsets = [2, 0, 9], sizes = [1, 32, 1], strides = [1, 1, 1]} : vector<3x32x14xf32> to vector<1x32x1xf32>
    %1218 = vector.shape_cast %1217 : vector<1x32x1xf32> to vector<32x1xf32>
    %1219 = vector.broadcast %640 : vector<32x1xf32> to vector<32x128xf32>
    %1220 = arith.subf %627, %1219 : vector<32x128xf32>
    %1221 = vector.broadcast %1216 : vector<32x1xf32> to vector<32x128xf32>
    %1222 = arith.mulf %1220, %1221 : vector<32x128xf32>
    %1223 = arith.mulf %1222, %1064 : vector<32x128xf32>
    %1224 = vector.broadcast %644 : vector<32x1xf32> to vector<32x128xf32>
    %1225 = arith.subf %1224, %627 : vector<32x128xf32>
    %1226 = vector.broadcast %1218 : vector<32x1xf32> to vector<32x128xf32>
    %1227 = arith.mulf %1225, %1226 : vector<32x128xf32>
    %1228 = arith.mulf %1227, %1079 : vector<32x128xf32>
    %1229 = arith.addf %1223, %1228 : vector<32x128xf32>
    %1230 = vector.extract_strided_slice %629 {offsets = [2, 0, 9], sizes = [1, 32, 1], strides = [1, 1, 1]} : vector<3x32x14xf32> to vector<1x32x1xf32>
    %1231 = vector.shape_cast %1230 : vector<1x32x1xf32> to vector<32x1xf32>
    %1232 = vector.extract_strided_slice %629 {offsets = [2, 0, 10], sizes = [1, 32, 1], strides = [1, 1, 1]} : vector<3x32x14xf32> to vector<1x32x1xf32>
    %1233 = vector.shape_cast %1232 : vector<1x32x1xf32> to vector<32x1xf32>
    %1234 = vector.broadcast %641 : vector<32x1xf32> to vector<32x128xf32>
    %1235 = arith.subf %627, %1234 : vector<32x128xf32>
    %1236 = vector.broadcast %1231 : vector<32x1xf32> to vector<32x128xf32>
    %1237 = arith.mulf %1235, %1236 : vector<32x128xf32>
    %1238 = arith.mulf %1237, %1079 : vector<32x128xf32>
    %1239 = vector.broadcast %645 : vector<32x1xf32> to vector<32x128xf32>
    %1240 = arith.subf %1239, %627 : vector<32x128xf32>
    %1241 = vector.broadcast %1233 : vector<32x1xf32> to vector<32x128xf32>
    %1242 = arith.mulf %1240, %1241 : vector<32x128xf32>
    %1243 = arith.mulf %1242, %1094 : vector<32x128xf32>
    %1244 = arith.addf %1238, %1243 : vector<32x128xf32>
    %1245 = arith.negf %627 : vector<32x128xf32>
    %1246 = math.exp %1245 : vector<32x128xf32>
    %cst_72 = arith.constant 1.000000e+00 : f32
    %1247 = vector.broadcast %cst_72 : f32 to vector<32x128xf32>
    %1248 = arith.addf %1247, %1246 : vector<32x128xf32>
    %1249 = arith.divf %1247, %1248 : vector<32x128xf32>
    %1250 = arith.mulf %627, %1249 : vector<32x128xf32>
    %1251 = tpu.concatenate %1250, %1109, %1124, %1139, %1154, %1169, %1184, %1199, %1214, %1229, %1244 in 0 : vector<32x128xf32>, vector<32x128xf32>, vector<32x128xf32>, vector<32x128xf32>, vector<32x128xf32>, vector<32x128xf32>, vector<32x128xf32>, vector<32x128xf32>, vector<32x128xf32>, vector<32x128xf32>, vector<32x128xf32> -> vector<352x128xf32>
    %cst_73 = arith.constant dense<0.000000e+00> : vector<16x128xf32>
    %1252 = tpu.matmul %630, %1251, %cst_73 {dimension_numbers = #tpu.dot_dimension_numbers<[1], [0], [0], [1], [0, 0, 1, 1], [], []>, precision = #tpu.contract_precision<fp32>} : vector<16x352xf32>, vector<352x128xf32>, vector<16x128xf32> -> vector<16x128xf32>
    %1253 = vector.broadcast %631 : vector<16x1xf32> to vector<16x128xf32>
    %1254 = arith.addf %1252, %1253 : vector<16x128xf32>
    %c0_74 = arith.constant 0 : index
    %c0_75 = arith.constant 0 : index
    %1255 = vector.load %arg10[%c0_74, %c0_75] : memref<16x128xf32, #tpu.memory_space<vmem>>, vector<16x128xf32>
    tpu.vector_store %arg10[%c0_74, %c0_75], %1254 {strides = array<i32>} : memref<16x128xf32, #tpu.memory_space<vmem>>, vector<16x128xf32>,
    return
  }
  func.func @transform_0(%arg0: i32) -> (i32, i32) {
    %c0_i32 = arith.constant 0 : i32
    %c0_i32_0 = arith.constant 0 : i32
    return %c0_i32, %arg0 : i32, i32
  }
  func.func @transform_1(%arg0: i32) -> (i32, i32) {
    %c0_i32 = arith.constant 0 : i32
    %c0_i32_0 = arith.constant 0 : i32
    %c0_i32_1 = arith.constant 0 : i32
    return %c0_i32, %c0_i32_0 : i32, i32
  }
  func.func @transform_2(%arg0: i32) -> (i32, i32, i32) {
    %c0_i32 = arith.constant 0 : i32
    %c0_i32_0 = arith.constant 0 : i32
    %c0_i32_1 = arith.constant 0 : i32
    %c0_i32_2 = arith.constant 0 : i32
    return %c0_i32, %c0_i32_0, %c0_i32_1 : i32, i32, i32
  }
  func.func @transform_3(%arg0: i32) -> (i32, i32) {
    %c0_i32 = arith.constant 0 : i32
    %c0_i32_0 = arith.constant 0 : i32
    %c0_i32_1 = arith.constant 0 : i32
    return %c0_i32, %c0_i32_0 : i32, i32
  }
  func.func @transform_4(%arg0: i32) -> (i32, i32) {
    %c0_i32 = arith.constant 0 : i32
    %c0_i32_0 = arith.constant 0 : i32
    %c0_i32_1 = arith.constant 0 : i32
    return %c0_i32, %c0_i32_0 : i32, i32
  }
  func.func @transform_5(%arg0: i32) -> (i32, i32) {
    %c0_i32 = arith.constant 0 : i32
    %c0_i32_0 = arith.constant 0 : i32
    %c0_i32_1 = arith.constant 0 : i32
    return %c0_i32, %c0_i32_0 : i32, i32
  }
  func.func @transform_6(%arg0: i32) -> (i32, i32, i32) {
    %c0_i32 = arith.constant 0 : i32
    %c0_i32_0 = arith.constant 0 : i32
    %c0_i32_1 = arith.constant 0 : i32
    %c0_i32_2 = arith.constant 0 : i32
    return %c0_i32, %c0_i32_0, %c0_i32_1 : i32, i32, i32
  }
  func.func @transform_7(%arg0: i32) -> (i32, i32) {
    %c0_i32 = arith.constant 0 : i32
    %c0_i32_0 = arith.constant 0 : i32
    %c0_i32_1 = arith.constant 0 : i32
    return %c0_i32, %c0_i32_0 : i32, i32
  }
  func.func @transform_8(%arg0: i32) -> (i32, i32) {
    %c0_i32 = arith.constant 0 : i32
    %c0_i32_0 = arith.constant 0 : i32
    %c0_i32_1 = arith.constant 0 : i32
    return %c0_i32, %c0_i32_0 : i32, i32
  }
  func.func @transform_9(%arg0: i32) -> (i32, i32) {
    %c0_i32 = arith.constant 0 : i32
    %c0_i32_0 = arith.constant 0 : i32
    return %c0_i32, %arg0 : i32, i32
  }
}

</mosaic_0001>

<llo_original>
// kernel: tpu_custom_call.1
$region0: #{tpu_custom_call.1}
  #allocation0 [shape = 'u32[]', space=smem, size = 0x4, offset = 0x4, fixed_abs, tag = 'smem constant byte address 0x4 - core index']
  #allocation1 [shape = 'u32[144,128]{1,0:T(1,128)}', space=vmem, size = 0x12000, scoped, tag = 'internal scratch']
  %s0 = inlined_call_operand.vmem [shape: f32[8,128], index: 0, kind: input, shape index: {}]
  %s1 = inlined_call_operand.vmem [shape: f32[8,14], index: 1, kind: input, shape index: {}]
  %s2 = inlined_call_operand.vmem [shape: f32[3,8,14], index: 2, kind: input, shape index: {}]
  %s3 = inlined_call_operand.vmem [shape: f32[32,88], index: 3, kind: input, shape index: {}]
  %s4 = inlined_call_operand.vmem [shape: f32[32,1], index: 4, kind: input, shape index: {}]
  %s5 = inlined_call_operand.vmem [shape: f32[32,14], index: 5, kind: input, shape index: {}]
  %s6 = inlined_call_operand.vmem [shape: f32[3,32,14], index: 6, kind: input, shape index: {}]
  %s7 = inlined_call_operand.vmem [shape: f32[16,352], index: 7, kind: input, shape index: {}]
  %s8 = inlined_call_operand.vmem [shape: f32[16,1], index: 8, kind: input, shape index: {}]
  %s9 = inlined_call_operand.hbm [shape: f32[16,128], index: 9, kind: output, shape index: {}]
  %s10 = sld [smem:[#allocation0]]
  $region46: #{tpu_custom_call.1} parent=0
    _
  %s12 = ssub.s32 1, %s10
  %s13 = scalar_select 0, %s12, %s10
  $region1: #{tpu_custom_call.1} parent=0
    #allocation2 [shape = 'u8[8192]{0}', space=vmem, size = 0x2000, scoped, tag = 'output window, operand 0, single buffered']
    #allocation3 [shape = 's32[1]{0}', space=sflag, size = 0x4, scoped, tag = 'scoped memory for tpu_custom_call.1']
    %14 = vsyncpa [#allocation3], 0
    // Predicated region
    $region2: #{tpu_custom_call.1} parent=1 // pred_check
      _
    $region3: #{tpu_custom_call.1} parent=1 // pred_check_branch
      %16 = sbr.rel (0) target = $region5
    $region4: #{tpu_custom_call.1} parent=1 // pred_region
      _
    $region5: #{tpu_custom_call.1} parent=1 // pred_fallthru
      _
    // Predicated region
    $region6: #{tpu_custom_call.1} parent=1 // pred_check
      _
    $region7: #{tpu_custom_call.1} parent=1 // pred_check_branch
      %18 = sbr.rel (0) target = $region9
    $region8: #{tpu_custom_call.1} parent=1 // pred_region
      _
    $region9: #{tpu_custom_call.1} parent=1 // pred_fallthru
      _
    // Predicated region
    $region10: #{tpu_custom_call.1} parent=1 // pred_check
      _
    $region11: #{tpu_custom_call.1} parent=1 // pred_check_branch
      %20 = sbr.rel (0) target = $region13
    $region12: #{tpu_custom_call.1} parent=1 // pred_region
      _
    $region13: #{tpu_custom_call.1} parent=1 // pred_fallthru
      _
    // Predicated region
    $region14: #{tpu_custom_call.1} parent=1 // pred_check
      _
    $region15: #{tpu_custom_call.1} parent=1 // pred_check_branch
      %22 = sbr.rel (0) target = $region17
    $region16: #{tpu_custom_call.1} parent=1 // pred_region
      _
    $region17: #{tpu_custom_call.1} parent=1 // pred_fallthru
      _
    // Predicated region
    $region18: #{tpu_custom_call.1} parent=1 // pred_check
      _
    $region19: #{tpu_custom_call.1} parent=1 // pred_check_branch
      %24 = sbr.rel (0) target = $region21
    $region20: #{tpu_custom_call.1} parent=1 // pred_region
      _
    $region21: #{tpu_custom_call.1} parent=1 // pred_fallthru
      _
    // Predicated region
    $region22: #{tpu_custom_call.1} parent=1 // pred_check
      _
    $region23: #{tpu_custom_call.1} parent=1 // pred_check_branch
      %26 = sbr.rel (0) target = $region25
    $region24: #{tpu_custom_call.1} parent=1 // pred_region
      _
    $region25: #{tpu_custom_call.1} parent=1 // pred_fallthru
      _
    // Predicated region
    $region26: #{tpu_custom_call.1} parent=1 // pred_check
      _
    $region27: #{tpu_custom_call.1} parent=1 // pred_check_branch
      %28 = sbr.rel (0) target = $region29
    $region28: #{tpu_custom_call.1} parent=1 // pred_region
      _
    $region29: #{tpu_custom_call.1} parent=1 // pred_fallthru
      _
    // Predicated region
    $region30: #{tpu_custom_call.1} parent=1 // pred_check
      _
    $region31: #{tpu_custom_call.1} parent=1 // pred_check_branch
      %30 = sbr.rel (0) target = $region33
    $region32: #{tpu_custom_call.1} parent=1 // pred_region
      _
    $region33: #{tpu_custom_call.1} parent=1 // pred_fallthru
      _
    // Predicated region
    $region34: #{tpu_custom_call.1} parent=1 // pred_check
      _
    $region35: #{tpu_custom_call.1} parent=1 // pred_check_branch
      %32 = sbr.rel (0) target = $region37
    $region36: #{tpu_custom_call.1} parent=1 // pred_region
      _
    $region37: #{tpu_custom_call.1} parent=1 // pred_fallthru
      _
    %v33 = vld [vmem:[%s0] sm:$0xff]
    %v34 = vld [vmem:[%s1] sm:$0xff]
    %v35 = vld [vmem:[%s2] sm:$0xff]
    %v36 = vld [vmem:[%s2 + $0x8] sm:$0xff]
    %v37 = vld [vmem:[%s2 + $0x10] sm:$0xff]
    %v38 = vld [vmem:[%s3] sm:$0xff]
    %v39 = vld [vmem:[%s3 + $0x8] sm:$0xff]
    %v40 = vld [vmem:[%s3 + $0x10] sm:$0xff]
    %v41 = vld [vmem:[%s3 + $0x18] sm:$0xff]
    %v42 = vld [vmem:[%s4] sm:$0xff]
    %v43 = vld [vmem:[%s4 + $0x8] sm:$0xff]
    %v44 = vld [vmem:[%s4 + $0x10] sm:$0xff]
    %v45 = vld [vmem:[%s4 + $0x18] sm:$0xff]
    %47 = vset.pattern.permute.xlu0 0
    %48 = vperm.xlu0 %47, %v34
    %v49 = vpop.permute.xlu0 %48
    %vm51 = vcmp.ge.f32.partialorder %v33, %v49
    %52 = vset.pattern.permute.xlu0 1
    %53 = vperm.xlu0 %52, %v34
    %v54 = vpop.permute.xlu0 %53
    %vm56 = vcmp.lt.f32.partialorder %v33, %v54
    %vm57 = vmand %vm51, %vm56
    %v58 = vsel %vm57, 1.0, 0.0
    %vm59 = vcmp.ge.f32.partialorder %v33, %v54
    %60 = vset.pattern.permute.xlu0 2
    %61 = vperm.xlu0 %60, %v34
    %v62 = vpop.permute.xlu0 %61
    %vm64 = vcmp.lt.f32.partialorder %v33, %v62
    %vm65 = vmand %vm59, %vm64
    %v66 = vsel %vm65, 1.0, 0.0
    %vm67 = vcmp.ge.f32.partialorder %v33, %v62
    %68 = vset.pattern.permute.xlu0 3
    %69 = vperm.xlu0 %68, %v34
    %v70 = vpop.permute.xlu0 %69
    %vm72 = vcmp.lt.f32.partialorder %v33, %v70
    %vm73 = vmand %vm67, %vm72
    %v74 = vsel %vm73, 1.0, 0.0
    %vm75 = vcmp.ge.f32.partialorder %v33, %v70
    %76 = vset.pattern.permute.xlu0 4
    %77 = vperm.xlu0 %76, %v34
    %v78 = vpop.permute.xlu0 %77
    %vm80 = vcmp.lt.f32.partialorder %v33, %v78
    %vm81 = vmand %vm75, %vm80
    %v82 = vsel %vm81, 1.0, 0.0
    %vm83 = vcmp.ge.f32.partialorder %v33, %v78
    %84 = vset.pattern.permute.xlu0 5
    %85 = vperm.xlu0 %84, %v34
    %v86 = vpop.permute.xlu0 %85
    %vm88 = vcmp.lt.f32.partialorder %v33, %v86
    %vm89 = vmand %vm83, %vm88
    %v90 = vsel %vm89, 1.0, 0.0
    %vm91 = vcmp.ge.f32.partialorder %v33, %v86
    %92 = vset.pattern.permute.xlu0 6
    %93 = vperm.xlu0 %92, %v34
    %v94 = vpop.permute.xlu0 %93
    %vm96 = vcmp.lt.f32.partialorder %v33, %v94
    %vm97 = vmand %vm91, %vm96
    %v98 = vsel %vm97, 1.0, 0.0
    %vm99 = vcmp.ge.f32.partialorder %v33, %v94
    %100 = vset.pattern.permute.xlu0 7
    %101 = vperm.xlu0 %100, %v34
    %v102 = vpop.permute.xlu0 %101
    %vm104 = vcmp.lt.f32.partialorder %v33, %v102
    %vm105 = vmand %vm99, %vm104
    %v106 = vsel %vm105, 1.0, 0.0
    %vm107 = vcmp.ge.f32.partialorder %v33, %v102
    %108 = vset.pattern.permute.xlu0 8
    %109 = vperm.xlu0 %108, %v34
    %v110 = vpop.permute.xlu0 %109
    %vm112 = vcmp.lt.f32.partialorder %v33, %v110
    %vm113 = vmand %vm107, %vm112
    %v114 = vsel %vm113, 1.0, 0.0
    %vm115 = vcmp.ge.f32.partialorder %v33, %v110
    %116 = vset.pattern.permute.xlu0 9
    %117 = vperm.xlu0 %116, %v34
    %v118 = vpop.permute.xlu0 %117
    %vm120 = vcmp.lt.f32.partialorder %v33, %v118
    %vm121 = vmand %vm115, %vm120
    %v122 = vsel %vm121, 1.0, 0.0
    %vm123 = vcmp.ge.f32.partialorder %v33, %v118
    %124 = vset.pattern.permute.xlu0 10
    %125 = vperm.xlu0 %124, %v34
    %v126 = vpop.permute.xlu0 %125
    %vm128 = vcmp.lt.f32.partialorder %v33, %v126
    %vm129 = vmand %vm123, %vm128
    %v130 = vsel %vm129, 1.0, 0.0
    %vm131 = vcmp.ge.f32.partialorder %v33, %v126
    %132 = vset.pattern.permute.xlu0 11
    %133 = vperm.xlu0 %132, %v34
    %v134 = vpop.permute.xlu0 %133
    %vm136 = vcmp.lt.f32.partialorder %v33, %v134
    %vm137 = vmand %vm131, %vm136
    %v138 = vsel %vm137, 1.0, 0.0
    %vm139 = vcmp.ge.f32.partialorder %v33, %v134
    %140 = vset.pattern.permute.xlu0 12
    %141 = vperm.xlu0 %140, %v34
    %v142 = vpop.permute.xlu0 %141
    %vm144 = vcmp.lt.f32.partialorder %v33, %v142
    %vm145 = vmand %vm139, %vm144
    %v146 = vsel %vm145, 1.0, 0.0
    %vm147 = vcmp.ge.f32.partialorder %v33, %v142
    %148 = vset.pattern.permute.xlu0 13
    %149 = vperm.xlu0 %148, %v34
    %v150 = vpop.permute.xlu0 %149
    %vm152 = vcmp.lt.f32.partialorder %v33, %v150
    %vm153 = vmand %vm147, %vm152
    %v154 = vsel %vm153, 1.0, 0.0
    %v155 = vsub.f32 %v33, %v49
    %157 = vset.pattern.permute.xlu0 0
    %158 = vperm.xlu0 %157, %v35
    %v159 = vpop.permute.xlu0 %158
    %v161 = vmul.f32 %v155, %v159
    %v162 = vmul.f32 %v161, %v58
    %v163 = vsub.f32 %v62, %v33
    %164 = vset.pattern.permute.xlu0 1
    %165 = vperm.xlu0 %164, %v35
    %v166 = vpop.permute.xlu0 %165
    %v168 = vmul.f32 %v163, %v166
    %v169 = vmul.f32 %v168, %v66
    %v170 = vadd.f32 %v162, %v169
    %v171 = vsub.f32 %v33, %v54
    %v172 = vmul.f32 %v171, %v166
    %v173 = vmul.f32 %v172, %v66
    %v174 = vsub.f32 %v70, %v33
    %175 = vset.pattern.permute.xlu0 2
    %176 = vperm.xlu0 %175, %v35
    %v177 = vpop.permute.xlu0 %176
    %v179 = vmul.f32 %v174, %v177
    %v180 = vmul.f32 %v179, %v74
    %v181 = vadd.f32 %v173, %v180
    %v182 = vsub.f32 %v33, %v62
    %v183 = vmul.f32 %v182, %v177
    %v184 = vmul.f32 %v183, %v74
    %v185 = vsub.f32 %v78, %v33
    %186 = vset.pattern.permute.xlu0 3
    %187 = vperm.xlu0 %186, %v35
    %v188 = vpop.permute.xlu0 %187
    %v190 = vmul.f32 %v185, %v188
    %v191 = vmul.f32 %v190, %v82
    %v192 = vadd.f32 %v184, %v191
    %v193 = vsub.f32 %v33, %v70
    %v194 = vmul.f32 %v193, %v188
    %v195 = vmul.f32 %v194, %v82
    %v196 = vsub.f32 %v86, %v33
    %197 = vset.pattern.permute.xlu0 4
    %198 = vperm.xlu0 %197, %v35
    %v199 = vpop.permute.xlu0 %198
    %v201 = vmul.f32 %v196, %v199
    %v202 = vmul.f32 %v201, %v90
    %v203 = vadd.f32 %v195, %v202
    %v204 = vsub.f32 %v33, %v78
    %v205 = vmul.f32 %v204, %v199
    %v206 = vmul.f32 %v205, %v90
    %v207 = vsub.f32 %v94, %v33
    %208 = vset.pattern.permute.xlu0 5
    %209 = vperm.xlu0 %208, %v35
    %v210 = vpop.permute.xlu0 %209
    %v212 = vmul.f32 %v207, %v210
    %v213 = vmul.f32 %v212, %v98
    %v214 = vadd.f32 %v206, %v213
    %v215 = vsub.f32 %v33, %v86
    %v216 = vmul.f32 %v215, %v210
    %v217 = vmul.f32 %v216, %v98
    %v218 = vsub.f32 %v102, %v33
    %219 = vset.pattern.permute.xlu0 6
    %220 = vperm.xlu0 %219, %v35
    %v221 = vpop.permute.xlu0 %220
    %v223 = vmul.f32 %v218, %v221
    %v224 = vmul.f32 %v223, %v106
    %v225 = vadd.f32 %v217, %v224
    %v226 = vsub.f32 %v33, %v94
    %v227 = vmul.f32 %v226, %v221
    %v228 = vmul.f32 %v227, %v106
    %v229 = vsub.f32 %v110, %v33
    %230 = vset.pattern.permute.xlu0 7
    %231 = vperm.xlu0 %230, %v35
    %v232 = vpop.permute.xlu0 %231
    %v234 = vmul.f32 %v229, %v232
    %v235 = vmul.f32 %v234, %v114
    %v236 = vadd.f32 %v228, %v235
    %v237 = vsub.f32 %v33, %v102
    %v238 = vmul.f32 %v237, %v232
    %v239 = vmul.f32 %v238, %v114
    %v240 = vsub.f32 %v118, %v33
    %241 = vset.pattern.permute.xlu0 8
    %242 = vperm.xlu0 %241, %v35
    %v243 = vpop.permute.xlu0 %242
    %v245 = vmul.f32 %v240, %v243
    %v246 = vmul.f32 %v245, %v122
    %v247 = vadd.f32 %v239, %v246
    %v248 = vsub.f32 %v33, %v110
    %v249 = vmul.f32 %v248, %v243
    %v250 = vmul.f32 %v249, %v122
    %v251 = vsub.f32 %v126, %v33
    %252 = vset.pattern.permute.xlu0 9
    %253 = vperm.xlu0 %252, %v35
    %v254 = vpop.permute.xlu0 %253
    %v256 = vmul.f32 %v251, %v254
    %v257 = vmul.f32 %v256, %v130
    %v258 = vadd.f32 %v250, %v257
    %v259 = vsub.f32 %v33, %v118
    %v260 = vmul.f32 %v259, %v254
    %v261 = vmul.f32 %v260, %v130
    %v262 = vsub.f32 %v134, %v33
    %263 = vset.pattern.permute.xlu0 10
    %264 = vperm.xlu0 %263, %v35
    %v265 = vpop.permute.xlu0 %264
    %v267 = vmul.f32 %v262, %v265
    %v268 = vmul.f32 %v267, %v138
    %v269 = vadd.f32 %v261, %v268
    %v270 = vsub.f32 %v33, %v126
    %v271 = vmul.f32 %v270, %v265
    %v272 = vmul.f32 %v271, %v138
    %v273 = vsub.f32 %v142, %v33
    %274 = vset.pattern.permute.xlu0 11
    %275 = vperm.xlu0 %274, %v35
    %v276 = vpop.permute.xlu0 %275
    %v278 = vmul.f32 %v273, %v276
    %v279 = vmul.f32 %v278, %v146
    %v280 = vadd.f32 %v272, %v279
    %v281 = vsub.f32 %v33, %v134
    %v282 = vmul.f32 %v281, %v276
    %v283 = vmul.f32 %v282, %v146
    %v284 = vsub.f32 %v150, %v33
    %285 = vset.pattern.permute.xlu0 12
    %286 = vperm.xlu0 %285, %v35
    %v287 = vpop.permute.xlu0 %286
    %v289 = vmul.f32 %v284, %v287
    %v290 = vmul.f32 %v289, %v154
    %v291 = vadd.f32 %v283, %v290
    %293 = vset.pattern.permute.xlu0 0
    %294 = vperm.xlu0 %293, %v36
    %v295 = vpop.permute.xlu0 %294
    %v297 = vmul.f32 %v155, %v295
    %v298 = vmul.f32 %v297, %v170
    %299 = vset.pattern.permute.xlu0 1
    %300 = vperm.xlu0 %299, %v36
    %v301 = vpop.permute.xlu0 %300
    %v303 = vmul.f32 %v174, %v301
    %v304 = vmul.f32 %v303, %v181
    %v305 = vadd.f32 %v298, %v304
    %v306 = vmul.f32 %v171, %v301
    %v307 = vmul.f32 %v306, %v181
    %308 = vset.pattern.permute.xlu0 2
    %309 = vperm.xlu0 %308, %v36
    %v310 = vpop.permute.xlu0 %309
    %v312 = vmul.f32 %v185, %v310
    %v313 = vmul.f32 %v312, %v192
    %v314 = vadd.f32 %v307, %v313
    %v315 = vmul.f32 %v182, %v310
    %v316 = vmul.f32 %v315, %v192
    %317 = vset.pattern.permute.xlu0 3
    %318 = vperm.xlu0 %317, %v36
    %v319 = vpop.permute.xlu0 %318
    %v321 = vmul.f32 %v196, %v319
    %v322 = vmul.f32 %v321, %v203
    %v323 = vadd.f32 %v316, %v322
    %v324 = vmul.f32 %v193, %v319
    %v325 = vmul.f32 %v324, %v203
    %326 = vset.pattern.permute.xlu0 4
    %327 = vperm.xlu0 %326, %v36
    %v328 = vpop.permute.xlu0 %327
    %v330 = vmul.f32 %v207, %v328
    %v331 = vmul.f32 %v330, %v214
    %v332 = vadd.f32 %v325, %v331
    %v333 = vmul.f32 %v204, %v328
    %v334 = vmul.f32 %v333, %v214
    %335 = vset.pattern.permute.xlu0 5
    %336 = vperm.xlu0 %335, %v36
    %v337 = vpop.permute.xlu0 %336
    %v339 = vmul.f32 %v218, %v337
    %v340 = vmul.f32 %v339, %v225
    %v341 = vadd.f32 %v334, %v340
    %v342 = vmul.f32 %v215, %v337
    %v343 = vmul.f32 %v342, %v225
    %344 = vset.pattern.permute.xlu0 6
    %345 = vperm.xlu0 %344, %v36
    %v346 = vpop.permute.xlu0 %345
    %v348 = vmul.f32 %v229, %v346
    %v349 = vmul.f32 %v348, %v236
    %v350 = vadd.f32 %v343, %v349
    %v351 = vmul.f32 %v226, %v346
    %v352 = vmul.f32 %v351, %v236
    %353 = vset.pattern.permute.xlu0 7
    %354 = vperm.xlu0 %353, %v36
    %v355 = vpop.permute.xlu0 %354
    %v357 = vmul.f32 %v240, %v355
    %v358 = vmul.f32 %v357, %v247
    %v359 = vadd.f32 %v352, %v358
    %v360 = vmul.f32 %v237, %v355
    %v361 = vmul.f32 %v360, %v247
    %362 = vset.pattern.permute.xlu0 8
    %363 = vperm.xlu0 %362, %v36
    %v364 = vpop.permute.xlu0 %363
    %v366 = vmul.f32 %v251, %v364
    %v367 = vmul.f32 %v366, %v258
    %v368 = vadd.f32 %v361, %v367
    %v369 = vmul.f32 %v248, %v364
    %v370 = vmul.f32 %v369, %v258
    %371 = vset.pattern.permute.xlu0 9
    %372 = vperm.xlu0 %371, %v36
    %v373 = vpop.permute.xlu0 %372
    %v375 = vmul.f32 %v262, %v373
    %v376 = vmul.f32 %v375, %v269
    %v377 = vadd.f32 %v370, %v376
    %v378 = vmul.f32 %v259, %v373
    %v379 = vmul.f32 %v378, %v269
    %380 = vset.pattern.permute.xlu0 10
    %381 = vperm.xlu0 %380, %v36
    %v382 = vpop.permute.xlu0 %381
    %v384 = vmul.f32 %v273, %v382
    %v385 = vmul.f32 %v384, %v280
    %v386 = vadd.f32 %v379, %v385
    %v387 = vmul.f32 %v270, %v382
    %v388 = vmul.f32 %v387, %v280
    %389 = vset.pattern.permute.xlu0 11
    %390 = vperm.xlu0 %389, %v36
    %v391 = vpop.permute.xlu0 %390
    %v393 = vmul.f32 %v284, %v391
    %v394 = vmul.f32 %v393, %v291
    %v395 = vadd.f32 %v388, %v394
    %397 = vset.pattern.permute.xlu0 0
    %398 = vperm.xlu0 %397, %v37
    %v399 = vpop.permute.xlu0 %398
    %v401 = vmul.f32 %v155, %v399
    %v402 = vmul.f32 %v401, %v305
    %403 = vset.pattern.permute.xlu0 1
    %404 = vperm.xlu0 %403, %v37
    %v405 = vpop.permute.xlu0 %404
    %v407 = vmul.f32 %v185, %v405
    %v408 = vmul.f32 %v407, %v314
    %v409 = vadd.f32 %v402, %v408
    %v410 = vmul.f32 %v171, %v405
    %v411 = vmul.f32 %v410, %v314
    %412 = vset.pattern.permute.xlu0 2
    %413 = vperm.xlu0 %412, %v37
    %v414 = vpop.permute.xlu0 %413
    %v416 = vmul.f32 %v196, %v414
    %v417 = vmul.f32 %v416, %v323
    %v418 = vadd.f32 %v411, %v417
    %v419 = vmul.f32 %v182, %v414
    %v420 = vmul.f32 %v419, %v323
    %421 = vset.pattern.permute.xlu0 3
    %422 = vperm.xlu0 %421, %v37
    %v423 = vpop.permute.xlu0 %422
    %v425 = vmul.f32 %v207, %v423
    %v426 = vmul.f32 %v425, %v332
    %v427 = vadd.f32 %v420, %v426
    %v428 = vmul.f32 %v193, %v423
    %v429 = vmul.f32 %v428, %v332
    %430 = vset.pattern.permute.xlu0 4
    %431 = vperm.xlu0 %430, %v37
    %v432 = vpop.permute.xlu0 %431
    %v434 = vmul.f32 %v218, %v432
    %v435 = vmul.f32 %v434, %v341
    %v436 = vadd.f32 %v429, %v435
    %v437 = vmul.f32 %v204, %v432
    %v438 = vmul.f32 %v437, %v341
    %439 = vset.pattern.permute.xlu0 5
    %440 = vperm.xlu0 %439, %v37
    %v441 = vpop.permute.xlu0 %440
    %v443 = vmul.f32 %v229, %v441
    %v444 = vmul.f32 %v443, %v350
    %v445 = vadd.f32 %v438, %v444
    %v446 = vmul.f32 %v215, %v441
    %v447 = vmul.f32 %v446, %v350
    %448 = vset.pattern.permute.xlu0 6
    %449 = vperm.xlu0 %448, %v37
    %v450 = vpop.permute.xlu0 %449
    %v452 = vmul.f32 %v240, %v450
    %v453 = vmul.f32 %v452, %v359
    %v454 = vadd.f32 %v447, %v453
    %v455 = vmul.f32 %v226, %v450
    %v456 = vmul.f32 %v455, %v359
    %457 = vset.pattern.permute.xlu0 7
    %458 = vperm.xlu0 %457, %v37
    %v459 = vpop.permute.xlu0 %458
    %v461 = vmul.f32 %v251, %v459
    %v462 = vmul.f32 %v461, %v368
    %v463 = vadd.f32 %v456, %v462
    %v464 = vmul.f32 %v237, %v459
    %v465 = vmul.f32 %v464, %v368
    %466 = vset.pattern.permute.xlu0 8
    %467 = vperm.xlu0 %466, %v37
    %v468 = vpop.permute.xlu0 %467
    %v470 = vmul.f32 %v262, %v468
    %v471 = vmul.f32 %v470, %v377
    %v472 = vadd.f32 %v465, %v471
    %v473 = vmul.f32 %v248, %v468
    %v474 = vmul.f32 %v473, %v377
    %475 = vset.pattern.permute.xlu0 9
    %476 = vperm.xlu0 %475, %v37
    %v477 = vpop.permute.xlu0 %476
    %v479 = vmul.f32 %v273, %v477
    %v480 = vmul.f32 %v479, %v386
    %v481 = vadd.f32 %v474, %v480
    %v482 = vmul.f32 %v259, %v477
    %v483 = vmul.f32 %v482, %v386
    %484 = vset.pattern.permute.xlu0 10
    %485 = vperm.xlu0 %484, %v37
    %v486 = vpop.permute.xlu0 %485
    %v488 = vmul.f32 %v284, %v486
    %v489 = vmul.f32 %v488, %v395
    %v490 = vadd.f32 %v483, %v489
    %v491 = vxor.u32 %v33, 2147483648
    %v492 = vmul.f32 %v491, 1.442695
    %v493 = vpow.pop %v492
    %v494 = vadd.f32 %v493, 1.0
    %v495 = vrcp.pop %v494
    %v496 = vmul.f32 1.0, %v495
    %v497 = vmul.f32 %v33, %v496
    %499 = vset.pattern.permute.xlu0 0
    %500 = vperm.xlu0 %499, %v42
    %v501 = vpop.permute.xlu0 %500
    %504 = vset.pattern.permute.xlu0 0
    %505 = vperm.xlu0 %504, %v43
    %v506 = vpop.permute.xlu0 %505
    %509 = vset.pattern.permute.xlu0 0
    %510 = vperm.xlu0 %509, %v44
    %v511 = vpop.permute.xlu0 %510
    %514 = vset.pattern.permute.xlu0 0
    %515 = vperm.xlu0 %514, %v45
    %v516 = vpop.permute.xlu0 %515
    %vm518 = vcmask 719872
    %v520 = vsel %vm518, %v38, 0
    %v523 = vsel %vm518, %v39, 0
    %v526 = vsel %vm518, %v40, 0
    %v529 = vsel %vm518, %v41, 0
    %531 = vmatprep.subr.mxu0 0.0
    %532 = vmatpush1.msra.mxu0 0.0
    %533 = vmatprep.subr.mxu0 0.0
    %534 = vmatpush1.msra.mxu0 0.0
    %535 = vmatprep.subr.mxu0 0.0
    %536 = vmatpush1.msra.mxu0 0.0
    %537 = vmatprep.subr.mxu0 0.0
    %538 = vmatpush1.msra.mxu0 0.0
    %539 = vmatprep.subr.mxu0 0.0
    %540 = vmatpush1.msra.mxu0 0.0
    %541 = vmatprep.subr.mxu0 0.0
    %v542 = vand.u32 %v490, 4294901760
    %543 = vmatpush1.msra.mxu0 %v542
    %544 = vmatprep.subr.mxu0 0.0
    %v545 = vand.u32 %v481, 4294901760
    %546 = vmatpush1.msra.mxu0 %v545
    %547 = vmatprep.subr.mxu0 0.0
    %v548 = vand.u32 %v472, 4294901760
    %549 = vmatpush1.msra.mxu0 %v548
    %550 = vmatprep.subr.mxu0 0.0
    %v551 = vand.u32 %v463, 4294901760
    %552 = vmatpush1.msra.mxu0 %v551
    %553 = vmatprep.subr.mxu0 0.0
    %v554 = vand.u32 %v454, 4294901760
    %555 = vmatpush1.msra.mxu0 %v554
    %556 = vmatprep.subr.mxu0 0.0
    %v557 = vand.u32 %v445, 4294901760
    %558 = vmatpush1.msra.mxu0 %v557
    %559 = vmatprep.subr.mxu0 0.0
    %v560 = vand.u32 %v436, 4294901760
    %561 = vmatpush1.msra.mxu0 %v560
    %562 = vmatprep.subr.mxu0 0.0
    %v563 = vand.u32 %v427, 4294901760
    %564 = vmatpush1.msra.mxu0 %v563
    %565 = vmatprep.subr.mxu0 0.0
    %v566 = vand.u32 %v418, 4294901760
    %567 = vmatpush1.msra.mxu0 %v566
    %568 = vmatprep.subr.mxu0 0.0
    %v569 = vand.u32 %v409, 4294901760
    %570 = vmatpush1.msra.mxu0 %v569
    %571 = vmatprep.subr.mxu0 0.0
    %v572 = vand.u32 %v497, 4294901760
    %573 = vmatpush1.msra.mxu0 %v572
    %574 = vmatprep.subr.mxu0 0.0
    %575 = vmatpush2.msra.mxu0 0.0
    %576 = vmatprep.subr.mxu0 0.0
    %577 = vmatpush2.msra.mxu0 0.0
    %578 = vmatprep.subr.mxu0 0.0
    %579 = vmatpush2.msra.mxu0 0.0
    %580 = vmatprep.subr.mxu0 0.0
    %581 = vmatpush2.msra.mxu0 0.0
    %582 = vmatprep.subr.mxu0 0.0
    %583 = vmatpush2.msra.mxu0 0.0
    %584 = vmatprep.subr.mxu0 0.0
    %585 = vmatpush2.msra.mxu0 0.0
    %586 = vmatprep.subr.mxu0 0.0
    %587 = vmatpush2.msra.mxu0 0.0
    %588 = vmatprep.subr.mxu0 0.0
    %589 = vmatpush2.msra.mxu0 0.0
    %590 = vmatprep.subr.mxu0 0.0
    %591 = vmatpush2.msra.mxu0 0.0
    %592 = vmatprep.subr.mxu0 0.0
    %593 = vmatpush2.msra.mxu0 0.0
    %594 = vmatprep.subr.mxu0 0.0
    %595 = vmatpush2.msra.mxu0 0.0
    %596 = vmatprep.subr.mxu0 0.0
    %597 = vmatpush2.msra.mxu0 0.0
    %598 = vmatprep.subr.mxu0 0.0
    %599 = vmatpush2.msra.mxu0 0.0
    %600 = vmatprep.subr.mxu0 0.0
    %601 = vmatpush2.msra.mxu0 0.0
    %602 = vmatprep.subr.mxu0 0.0
    %603 = vmatpush2.msra.mxu0 0.0
    %604 = vmatprep.subr.mxu0 0.0
    %605 = vmatpush2.msra.mxu0 0.0
    %606 = vmatprep.mubr.f32.mxu0 0.0
    %v607 = vand.u32 %v520, 4294901760
    %v608 = vsub.f32 %v520, %v607
    %v609 = vand.u32 %v608, 4294901760
    %v610 = vsub.f32 %v608, %v609
    %v611 = vand.u32 %v610, 4294901760
    %612 = vmatmul.mubr.f32.gmra.mxu0 %v611
    %v613 = vpop.f32.mrf.mxu0
    %v614 = vadd.f32 %v501, %v613
    %v615 = vpop.f32.mrf.mxu0
    %616 = vmatprep.mubr.f32.mxu0 0.0
    %v617 = vand.u32 %v523, 4294901760
    %v618 = vsub.f32 %v523, %v617
    %v619 = vand.u32 %v618, 4294901760
    %v620 = vsub.f32 %v618, %v619
    %v621 = vand.u32 %v620, 4294901760
    %622 = vmatmul.mubr.f32.gmra.mxu0 %v621
    %v623 = vpop.f32.mrf.mxu0
    %v624 = vadd.f32 %v506, %v623
    %v625 = vpop.f32.mrf.mxu0
    %626 = vmatprep.mubr.f32.mxu0 0.0
    %v627 = vand.u32 %v526, 4294901760
    %v628 = vsub.f32 %v526, %v627
    %v629 = vand.u32 %v628, 4294901760
    %v630 = vsub.f32 %v628, %v629
    %v631 = vand.u32 %v630, 4294901760
    %632 = vmatmul.mubr.f32.gmra.mxu0 %v631
    %v633 = vpop.f32.mrf.mxu0
    %v634 = vadd.f32 %v511, %v633
    %v635 = vpop.f32.mrf.mxu0
    %636 = vmatprep.mubr.f32.mxu0 0.0
    %v637 = vand.u32 %v529, 4294901760
    %v638 = vsub.f32 %v529, %v637
    %v639 = vand.u32 %v638, 4294901760
    %v640 = vsub.f32 %v638, %v639
    %v641 = vand.u32 %v640, 4294901760
    %642 = vmatmul.mubr.f32.gmra.mxu0 %v641
    %v643 = vpop.f32.mrf.mxu0
    %v644 = vadd.f32 %v516, %v643
    %v645 = vpop.f32.mrf.mxu0
    %646 = vdwg.mxu0
    %647 = vmatprep.subr.mxu0 0.0
    %648 = vmatpush1.msra.mxu0 0.0
    %649 = vmatprep.subr.mxu0 0.0
    %650 = vmatpush1.msra.mxu0 0.0
    %651 = vmatprep.subr.mxu0 0.0
    %652 = vmatpush1.msra.mxu0 0.0
    %653 = vmatprep.subr.mxu0 0.0
    %654 = vmatpush1.msra.mxu0 0.0
    %655 = vmatprep.subr.mxu0 0.0
    %656 = vmatpush1.msra.mxu0 0.0
    %657 = vmatprep.subr.mxu0 0.0
    %v658 = vand.u32 %v490, 4294901760
    %v659 = vsub.f32 %v490, %v658
    %v660 = vand.u32 %v659, 4294901760
    %v661 = vsub.f32 %v659, %v660
    %v662 = vand.u32 %v661, 4294901760
    %663 = vmatpush1.msra.mxu0 %v662
    %664 = vmatprep.subr.mxu0 0.0
    %v665 = vand.u32 %v481, 4294901760
    %v666 = vsub.f32 %v481, %v665
    %v667 = vand.u32 %v666, 4294901760
    %v668 = vsub.f32 %v666, %v667
    %v669 = vand.u32 %v668, 4294901760
    %670 = vmatpush1.msra.mxu0 %v669
    %671 = vmatprep.subr.mxu0 0.0
    %v672 = vand.u32 %v472, 4294901760
    %v673 = vsub.f32 %v472, %v672
    %v674 = vand.u32 %v673, 4294901760
    %v675 = vsub.f32 %v673, %v674
    %v676 = vand.u32 %v675, 4294901760
    %677 = vmatpush1.msra.mxu0 %v676
    %678 = vmatprep.subr.mxu0 0.0
    %v679 = vand.u32 %v463, 4294901760
    %v680 = vsub.f32 %v463, %v679
    %v681 = vand.u32 %v680, 4294901760
    %v682 = vsub.f32 %v680, %v681
    %v683 = vand.u32 %v682, 4294901760
    %684 = vmatpush1.msra.mxu0 %v683
    %685 = vmatprep.subr.mxu0 0.0
    %v686 = vand.u32 %v454, 4294901760
    %v687 = vsub.f32 %v454, %v686
    %v688 = vand.u32 %v687, 4294901760
    %v689 = vsub.f32 %v687, %v688
    %v690 = vand.u32 %v689, 4294901760
    %691 = vmatpush1.msra.mxu0 %v690
    %692 = vmatprep.subr.mxu0 0.0
    %v693 = vand.u32 %v445, 4294901760
    %v694 = vsub.f32 %v445, %v693
    %v695 = vand.u32 %v694, 4294901760
    %v696 = vsub.f32 %v694, %v695
    %v697 = vand.u32 %v696, 4294901760
    %698 = vmatpush1.msra.mxu0 %v697
    %699 = vmatprep.subr.mxu0 0.0
    %v700 = vand.u32 %v436, 4294901760
    %v701 = vsub.f32 %v436, %v700
    %v702 = vand.u32 %v701, 4294901760
    %v703 = vsub.f32 %v701, %v702
    %v704 = vand.u32 %v703, 4294901760
    %705 = vmatpush1.msra.mxu0 %v704
    %706 = vmatprep.subr.mxu0 0.0
    %v707 = vand.u32 %v427, 4294901760
    %v708 = vsub.f32 %v427, %v707
    %v709 = vand.u32 %v708, 4294901760
    %v710 = vsub.f32 %v708, %v709
    %v711 = vand.u32 %v710, 4294901760
    %712 = vmatpush1.msra.mxu0 %v711
    %713 = vmatprep.subr.mxu0 0.0
    %v714 = vand.u32 %v418, 4294901760
    %v715 = vsub.f32 %v418, %v714
    %v716 = vand.u32 %v715, 4294901760
    %v717 = vsub.f32 %v715, %v716
    %v718 = vand.u32 %v717, 4294901760
    %719 = vmatpush1.msra.mxu0 %v718
    %720 = vmatprep.subr.mxu0 0.0
    %v721 = vand.u32 %v409, 4294901760
    %v722 = vsub.f32 %v409, %v721
    %v723 = vand.u32 %v722, 4294901760
    %v724 = vsub.f32 %v722, %v723
    %v725 = vand.u32 %v724, 4294901760
    %726 = vmatpush1.msra.mxu0 %v725
    %727 = vmatprep.subr.mxu0 0.0
    %v728 = vand.u32 %v497, 4294901760
    %v729 = vsub.f32 %v497, %v728
    %v730 = vand.u32 %v729, 4294901760
    %v731 = vsub.f32 %v729, %v730
    %v732 = vand.u32 %v731, 4294901760
    %733 = vmatpush1.msra.mxu0 %v732
    %734 = vmatprep.subr.mxu0 0.0
    %735 = vmatpush2.msra.mxu0 0.0
    %736 = vmatprep.subr.mxu0 0.0
    %737 = vmatpush2.msra.mxu0 0.0
    %738 = vmatprep.subr.mxu0 0.0
    %739 = vmatpush2.msra.mxu0 0.0
    %740 = vmatprep.subr.mxu0 0.0
    %741 = vmatpush2.msra.mxu0 0.0
    %742 = vmatprep.subr.mxu0 0.0
    %743 = vmatpush2.msra.mxu0 0.0
    %744 = vmatprep.subr.mxu0 0.0
    %745 = vmatpush2.msra.mxu0 0.0
    %746 = vmatprep.subr.mxu0 0.0
    %747 = vmatpush2.msra.mxu0 0.0
    %748 = vmatprep.subr.mxu0 0.0
    %749 = vmatpush2.msra.mxu0 0.0
    %750 = vmatprep.subr.mxu0 0.0
    %751 = vmatpush2.msra.mxu0 0.0
    %752 = vmatprep.subr.mxu0 0.0
    %753 = vmatpush2.msra.mxu0 0.0
    %754 = vmatprep.subr.mxu0 0.0
    %755 = vmatpush2.msra.mxu0 0.0
    %756 = vmatprep.subr.mxu0 0.0
    %757 = vmatpush2.msra.mxu0 0.0
    %758 = vmatprep.subr.mxu0 0.0
    %759 = vmatpush2.msra.mxu0 0.0
    %760 = vmatprep.subr.mxu0 0.0
    %761 = vmatpush2.msra.mxu0 0.0
    %762 = vmatprep.subr.mxu0 0.0
    %763 = vmatpush2.msra.mxu0 0.0
    %764 = vmatprep.subr.mxu0 0.0
    %765 = vmatpush2.msra.mxu0 0.0
    %766 = vmatprep.mubr.f32.mxu0 0.0
    %v767 = vand.u32 %v520, 4294901760
    %768 = vmatmul.mubr.f32.gmra.mxu0 %v767
    %v769 = vpop.f32.mrf.mxu0
    %v770 = vadd.f32 %v614, %v769
    %v771 = vpop.f32.mrf.mxu0
    %772 = vmatprep.mubr.f32.mxu0 0.0
    %v773 = vand.u32 %v523, 4294901760
    %774 = vmatmul.mubr.f32.gmra.mxu0 %v773
    %v775 = vpop.f32.mrf.mxu0
    %v776 = vadd.f32 %v624, %v775
    %v777 = vpop.f32.mrf.mxu0
    %778 = vmatprep.mubr.f32.mxu0 0.0
    %v779 = vand.u32 %v526, 4294901760
    %780 = vmatmul.mubr.f32.gmra.mxu0 %v779
    %v781 = vpop.f32.mrf.mxu0
    %v782 = vadd.f32 %v634, %v781
    %v783 = vpop.f32.mrf.mxu0
    %784 = vmatprep.mubr.f32.mxu0 0.0
    %v785 = vand.u32 %v529, 4294901760
    %786 = vmatmul.mubr.f32.gmra.mxu0 %v785
    %v787 = vpop.f32.mrf.mxu0
    %v788 = vadd.f32 %v644, %v787
    %v789 = vpop.f32.mrf.mxu0
    %790 = vdwg.mxu0
    %791 = vmatprep.subr.mxu0 0.0
    %792 = vmatpush1.msra.mxu0 0.0
    %793 = vmatprep.subr.mxu0 0.0
    %794 = vmatpush1.msra.mxu0 0.0
    %795 = vmatprep.subr.mxu0 0.0
    %796 = vmatpush1.msra.mxu0 0.0
    %797 = vmatprep.subr.mxu0 0.0
    %798 = vmatpush1.msra.mxu0 0.0
    %799 = vmatprep.subr.mxu0 0.0
    %800 = vmatpush1.msra.mxu0 0.0
    %801 = vmatprep.subr.mxu0 0.0
    %v802 = vand.u32 %v490, 4294901760
    %v803 = vsub.f32 %v490, %v802
    %804 = vmatpush1.msra.mxu0 %v803
    %805 = vmatprep.subr.mxu0 0.0
    %v806 = vand.u32 %v481, 4294901760
    %v807 = vsub.f32 %v481, %v806
    %808 = vmatpush1.msra.mxu0 %v807
    %809 = vmatprep.subr.mxu0 0.0
    %v810 = vand.u32 %v472, 4294901760
    %v811 = vsub.f32 %v472, %v810
    %812 = vmatpush1.msra.mxu0 %v811
    %813 = vmatprep.subr.mxu0 0.0
    %v814 = vand.u32 %v463, 4294901760
    %v815 = vsub.f32 %v463, %v814
    %816 = vmatpush1.msra.mxu0 %v815
    %817 = vmatprep.subr.mxu0 0.0
    %v818 = vand.u32 %v454, 4294901760
    %v819 = vsub.f32 %v454, %v818
    %820 = vmatpush1.msra.mxu0 %v819
    %821 = vmatprep.subr.mxu0 0.0
    %v822 = vand.u32 %v445, 4294901760
    %v823 = vsub.f32 %v445, %v822
    %824 = vmatpush1.msra.mxu0 %v823
    %825 = vmatprep.subr.mxu0 0.0
    %v826 = vand.u32 %v436, 4294901760
    %v827 = vsub.f32 %v436, %v826
    %828 = vmatpush1.msra.mxu0 %v827
    %829 = vmatprep.subr.mxu0 0.0
    %v830 = vand.u32 %v427, 4294901760
    %v831 = vsub.f32 %v427, %v830
    %832 = vmatpush1.msra.mxu0 %v831
    %833 = vmatprep.subr.mxu0 0.0
    %v834 = vand.u32 %v418, 4294901760
    %v835 = vsub.f32 %v418, %v834
    %836 = vmatpush1.msra.mxu0 %v835
    %837 = vmatprep.subr.mxu0 0.0
    %v838 = vand.u32 %v409, 4294901760
    %v839 = vsub.f32 %v409, %v838
    %840 = vmatpush1.msra.mxu0 %v839
    %841 = vmatprep.subr.mxu0 0.0
    %v842 = vand.u32 %v497, 4294901760
    %v843 = vsub.f32 %v497, %v842
    %844 = vmatpush1.msra.mxu0 %v843
    %845 = vmatprep.subr.mxu0 0.0
    %846 = vmatpush2.msra.mxu0 0.0
    %847 = vmatprep.subr.mxu0 0.0
    %848 = vmatpush2.msra.mxu0 0.0
    %849 = vmatprep.subr.mxu0 0.0
    %850 = vmatpush2.msra.mxu0 0.0
    %851 = vmatprep.subr.mxu0 0.0
    %852 = vmatpush2.msra.mxu0 0.0
    %853 = vmatprep.subr.mxu0 0.0
    %854 = vmatpush2.msra.mxu0 0.0
    %855 = vmatprep.subr.mxu0 0.0
    %856 = vmatpush2.msra.mxu0 0.0
    %857 = vmatprep.subr.mxu0 0.0
    %858 = vmatpush2.msra.mxu0 0.0
    %859 = vmatprep.subr.mxu0 0.0
    %860 = vmatpush2.msra.mxu0 0.0
    %861 = vmatprep.subr.mxu0 0.0
    %862 = vmatpush2.msra.mxu0 0.0
    %863 = vmatprep.subr.mxu0 0.0
    %864 = vmatpush2.msra.mxu0 0.0
    %865 = vmatprep.subr.mxu0 0.0
    %866 = vmatpush2.msra.mxu0 0.0
    %867 = vmatprep.subr.mxu0 0.0
    %868 = vmatpush2.msra.mxu0 0.0
    %869 = vmatprep.subr.mxu0 0.0
    %870 = vmatpush2.msra.mxu0 0.0
    %871 = vmatprep.subr.mxu0 0.0
    %872 = vmatpush2.msra.mxu0 0.0
    %873 = vmatprep.subr.mxu0 0.0
    %874 = vmatpush2.msra.mxu0 0.0
    %875 = vmatprep.subr.mxu0 0.0
    %876 = vmatpush2.msra.mxu0 0.0
    %877 = vmatprep.mubr.f32.mxu0 0.0
    %v878 = vand.u32 %v520, 4294901760
    %v879 = vsub.f32 %v520, %v878
    %880 = vmatmul.mubr.f32.gmra.mxu0 %v879
    %v881 = vpop.f32.mrf.mxu0
    %v882 = vadd.f32 %v770, %v881
    %v883 = vpop.f32.mrf.mxu0
    %884 = vmatprep.mubr.f32.mxu0 0.0
    %v885 = vand.u32 %v523, 4294901760
    %v886 = vsub.f32 %v523, %v885
    %887 = vmatmul.mubr.f32.gmra.mxu0 %v886
    %v888 = vpop.f32.mrf.mxu0
    %v889 = vadd.f32 %v776, %v888
    %v890 = vpop.f32.mrf.mxu0
    %891 = vmatprep.mubr.f32.mxu0 0.0
    %v892 = vand.u32 %v526, 4294901760
    %v893 = vsub.f32 %v526, %v892
    %894 = vmatmul.mubr.f32.gmra.mxu0 %v893
    %v895 = vpop.f32.mrf.mxu0
    %v896 = vadd.f32 %v782, %v895
    %v897 = vpop.f32.mrf.mxu0
    %898 = vmatprep.mubr.f32.mxu0 0.0
    %v899 = vand.u32 %v529, 4294901760
    %v900 = vsub.f32 %v529, %v899
    %901 = vmatmul.mubr.f32.gmra.mxu0 %v900
    %v902 = vpop.f32.mrf.mxu0
    %v903 = vadd.f32 %v788, %v902
    %v904 = vpop.f32.mrf.mxu0
    %905 = vdwg.mxu0
    %906 = vmatprep.subr.mxu0 0.0
    %907 = vmatpush1.msra.mxu0 0.0
    %908 = vmatprep.subr.mxu0 0.0
    %909 = vmatpush1.msra.mxu0 0.0
    %910 = vmatprep.subr.mxu0 0.0
    %911 = vmatpush1.msra.mxu0 0.0
    %912 = vmatprep.subr.mxu0 0.0
    %913 = vmatpush1.msra.mxu0 0.0
    %914 = vmatprep.subr.mxu0 0.0
    %915 = vmatpush1.msra.mxu0 0.0
    %916 = vmatprep.subr.mxu0 0.0
    %v917 = vand.u32 %v490, 4294901760
    %918 = vmatpush1.msra.mxu0 %v917
    %919 = vmatprep.subr.mxu0 0.0
    %v920 = vand.u32 %v481, 4294901760
    %921 = vmatpush1.msra.mxu0 %v920
    %922 = vmatprep.subr.mxu0 0.0
    %v923 = vand.u32 %v472, 4294901760
    %924 = vmatpush1.msra.mxu0 %v923
    %925 = vmatprep.subr.mxu0 0.0
    %v926 = vand.u32 %v463, 4294901760
    %927 = vmatpush1.msra.mxu0 %v926
    %928 = vmatprep.subr.mxu0 0.0
    %v929 = vand.u32 %v454, 4294901760
    %930 = vmatpush1.msra.mxu0 %v929
    %931 = vmatprep.subr.mxu0 0.0
    %v932 = vand.u32 %v445, 4294901760
    %933 = vmatpush1.msra.mxu0 %v932
    %934 = vmatprep.subr.mxu0 0.0
    %v935 = vand.u32 %v436, 4294901760
    %936 = vmatpush1.msra.mxu0 %v935
    %937 = vmatprep.subr.mxu0 0.0
    %v938 = vand.u32 %v427, 4294901760
    %939 = vmatpush1.msra.mxu0 %v938
    %940 = vmatprep.subr.mxu0 0.0
    %v941 = vand.u32 %v418, 4294901760
    %942 = vmatpush1.msra.mxu0 %v941
    %943 = vmatprep.subr.mxu0 0.0
    %v944 = vand.u32 %v409, 4294901760
    %945 = vmatpush1.msra.mxu0 %v944
    %946 = vmatprep.subr.mxu0 0.0
    %v947 = vand.u32 %v497, 4294901760
    %948 = vmatpush1.msra.mxu0 %v947
    %949 = vmatprep.subr.mxu0 0.0
    %950 = vmatpush2.msra.mxu0 0.0
    %951 = vmatprep.subr.mxu0 0.0
    %952 = vmatpush2.msra.mxu0 0.0
    %953 = vmatprep.subr.mxu0 0.0
    %954 = vmatpush2.msra.mxu0 0.0
    %955 = vmatprep.subr.mxu0 0.0
    %956 = vmatpush2.msra.mxu0 0.0
    %957 = vmatprep.subr.mxu0 0.0
    %958 = vmatpush2.msra.mxu0 0.0
    %959 = vmatprep.subr.mxu0 0.0
    %960 = vmatpush2.msra.mxu0 0.0
    %961 = vmatprep.subr.mxu0 0.0
    %962 = vmatpush2.msra.mxu0 0.0
    %963 = vmatprep.subr.mxu0 0.0
    %964 = vmatpush2.msra.mxu0 0.0
    %965 = vmatprep.subr.mxu0 0.0
    %966 = vmatpush2.msra.mxu0 0.0
    %967 = vmatprep.subr.mxu0 0.0
    %968 = vmatpush2.msra.mxu0 0.0
    %969 = vmatprep.subr.mxu0 0.0
    %970 = vmatpush2.msra.mxu0 0.0
    %971 = vmatprep.subr.mxu0 0.0
    %972 = vmatpush2.msra.mxu0 0.0
    %973 = vmatprep.subr.mxu0 0.0
    %974 = vmatpush2.msra.mxu0 0.0
    %975 = vmatprep.subr.mxu0 0.0
    %976 = vmatpush2.msra.mxu0 0.0
    %977 = vmatprep.subr.mxu0 0.0
    %978 = vmatpush2.msra.mxu0 0.0
    %979 = vmatprep.subr.mxu0 0.0
    %980 = vmatpush2.msra.mxu0 0.0
    %981 = vmatprep.mubr.f32.mxu0 0.0
    %v982 = vand.u32 %v520, 4294901760
    %v983 = vsub.f32 %v520, %v982
    %v984 = vand.u32 %v983, 4294901760
    %985 = vmatmul.mubr.f32.gmra.mxu0 %v984
    %v986 = vpop.f32.mrf.mxu0
    %v987 = vadd.f32 %v882, %v986
    %v988 = vpop.f32.mrf.mxu0
    %989 = vmatprep.mubr.f32.mxu0 0.0
    %v990 = vand.u32 %v523, 4294901760
    %v991 = vsub.f32 %v523, %v990
    %v992 = vand.u32 %v991, 4294901760
    %993 = vmatmul.mubr.f32.gmra.mxu0 %v992
    %v994 = vpop.f32.mrf.mxu0
    %v995 = vadd.f32 %v889, %v994
    %v996 = vpop.f32.mrf.mxu0
    %997 = vmatprep.mubr.f32.mxu0 0.0
    %v998 = vand.u32 %v526, 4294901760
    %v999 = vsub.f32 %v526, %v998
    %v1000 = vand.u32 %v999, 4294901760
    %1001 = vmatmul.mubr.f32.gmra.mxu0 %v1000
    %v1002 = vpop.f32.mrf.mxu0
    %v1003 = vadd.f32 %v896, %v1002
    %v1004 = vpop.f32.mrf.mxu0
    %1005 = vmatprep.mubr.f32.mxu0 0.0
    %v1006 = vand.u32 %v529, 4294901760
    %v1007 = vsub.f32 %v529, %v1006
    %v1008 = vand.u32 %v1007, 4294901760
    %1009 = vmatmul.mubr.f32.gmra.mxu0 %v1008
    %v1010 = vpop.f32.mrf.mxu0
    %v1011 = vadd.f32 %v903, %v1010
    %v1012 = vpop.f32.mrf.mxu0
    %1013 = vdwg.mxu0
    %1014 = vmatprep.subr.mxu0 0.0
    %1015 = vmatpush1.msra.mxu0 0.0
    %1016 = vmatprep.subr.mxu0 0.0
    %1017 = vmatpush1.msra.mxu0 0.0
    %1018 = vmatprep.subr.mxu0 0.0
    %1019 = vmatpush1.msra.mxu0 0.0
    %1020 = vmatprep.subr.mxu0 0.0
    %1021 = vmatpush1.msra.mxu0 0.0
    %1022 = vmatprep.subr.mxu0 0.0
    %1023 = vmatpush1.msra.mxu0 0.0
    %1024 = vmatprep.subr.mxu0 0.0
    %v1025 = vand.u32 %v490, 4294901760
    %v1026 = vsub.f32 %v490, %v1025
    %v1027 = vand.u32 %v1026, 4294901760
    %1028 = vmatpush1.msra.mxu0 %v1027
    %1029 = vmatprep.subr.mxu0 0.0
    %v1030 = vand.u32 %v481, 4294901760
    %v1031 = vsub.f32 %v481, %v1030
    %v1032 = vand.u32 %v1031, 4294901760
    %1033 = vmatpush1.msra.mxu0 %v1032
    %1034 = vmatprep.subr.mxu0 0.0
    %v1035 = vand.u32 %v472, 4294901760
    %v1036 = vsub.f32 %v472, %v1035
    %v1037 = vand.u32 %v1036, 4294901760
    %1038 = vmatpush1.msra.mxu0 %v1037
    %1039 = vmatprep.subr.mxu0 0.0
    %v1040 = vand.u32 %v463, 4294901760
    %v1041 = vsub.f32 %v463, %v1040
    %v1042 = vand.u32 %v1041, 4294901760
    %1043 = vmatpush1.msra.mxu0 %v1042
    %1044 = vmatprep.subr.mxu0 0.0
    %v1045 = vand.u32 %v454, 4294901760
    %v1046 = vsub.f32 %v454, %v1045
    %v1047 = vand.u32 %v1046, 4294901760
    %1048 = vmatpush1.msra.mxu0 %v1047
    %1049 = vmatprep.subr.mxu0 0.0
    %v1050 = vand.u32 %v445, 4294901760
    %v1051 = vsub.f32 %v445, %v1050
    %v1052 = vand.u32 %v1051, 4294901760
    %1053 = vmatpush1.msra.mxu0 %v1052
    %1054 = vmatprep.subr.mxu0 0.0
    %v1055 = vand.u32 %v436, 4294901760
    %v1056 = vsub.f32 %v436, %v1055
    %v1057 = vand.u32 %v1056, 4294901760
    %1058 = vmatpush1.msra.mxu0 %v1057
    %1059 = vmatprep.subr.mxu0 0.0
    %v1060 = vand.u32 %v427, 4294901760
    %v1061 = vsub.f32 %v427, %v1060
    %v1062 = vand.u32 %v1061, 4294901760
    %1063 = vmatpush1.msra.mxu0 %v1062
    %1064 = vmatprep.subr.mxu0 0.0
    %v1065 = vand.u32 %v418, 4294901760
    %v1066 = vsub.f32 %v418, %v1065
    %v1067 = vand.u32 %v1066, 4294901760
    %1068 = vmatpush1.msra.mxu0 %v1067
    %1069 = vmatprep.subr.mxu0 0.0
    %v1070 = vand.u32 %v409, 4294901760
    %v1071 = vsub.f32 %v409, %v1070
    %v1072 = vand.u32 %v1071, 4294901760
    %1073 = vmatpush1.msra.mxu0 %v1072
    %1074 = vmatprep.subr.mxu0 0.0
    %v1075 = vand.u32 %v497, 4294901760
    %v1076 = vsub.f32 %v497, %v1075
    %v1077 = vand.u32 %v1076, 4294901760
    %1078 = vmatpush1.msra.mxu0 %v1077
    %1079 = vmatprep.subr.mxu0 0.0
    %1080 = vmatpush2.msra.mxu0 0.0
    %1081 = vmatprep.subr.mxu0 0.0
    %1082 = vmatpush2.msra.mxu0 0.0
    %1083 = vmatprep.subr.mxu0 0.0
    %1084 = vmatpush2.msra.mxu0 0.0
    %1085 = vmatprep.subr.mxu0 0.0
    %1086 = vmatpush2.msra.mxu0 0.0
    %1087 = vmatprep.subr.mxu0 0.0
    %1088 = vmatpush2.msra.mxu0 0.0
    %1089 = vmatprep.subr.mxu0 0.0
    %1090 = vmatpush2.msra.mxu0 0.0
    %1091 = vmatprep.subr.mxu0 0.0
    %1092 = vmatpush2.msra.mxu0 0.0
    %1093 = vmatprep.subr.mxu0 0.0
    %1094 = vmatpush2.msra.mxu0 0.0
    %1095 = vmatprep.subr.mxu0 0.0
    %1096 = vmatpush2.msra.mxu0 0.0
    %1097 = vmatprep.subr.mxu0 0.0
    %1098 = vmatpush2.msra.mxu0 0.0
    %1099 = vmatprep.subr.mxu0 0.0
    %1100 = vmatpush2.msra.mxu0 0.0
    %1101 = vmatprep.subr.mxu0 0.0
    %1102 = vmatpush2.msra.mxu0 0.0
    %1103 = vmatprep.subr.mxu0 0.0
    %1104 = vmatpush2.msra.mxu0 0.0
    %1105 = vmatprep.subr.mxu0 0.0
    %1106 = vmatpush2.msra.mxu0 0.0
    %1107 = vmatprep.subr.mxu0 0.0
    %1108 = vmatpush2.msra.mxu0 0.0
    %1109 = vmatprep.subr.mxu0 0.0
    %1110 = vmatpush2.msra.mxu0 0.0
    %1111 = vmatprep.mubr.f32.mxu0 0.0
    %v1112 = vand.u32 %v520, 4294901760
    %1113 = vmatmul.mubr.f32.gmra.mxu0 %v1112
    %v1114 = vpop.f32.mrf.mxu0
    %v1115 = vadd.f32 %v987, %v1114
    %v1116 = vpop.f32.mrf.mxu0
    %1117 = vmatprep.mubr.f32.mxu0 0.0
    %v1118 = vand.u32 %v523, 4294901760
    %1119 = vmatmul.mubr.f32.gmra.mxu0 %v1118
    %v1120 = vpop.f32.mrf.mxu0
    %v1121 = vadd.f32 %v995, %v1120
    %v1122 = vpop.f32.mrf.mxu0
    %1123 = vmatprep.mubr.f32.mxu0 0.0
    %v1124 = vand.u32 %v526, 4294901760
    %1125 = vmatmul.mubr.f32.gmra.mxu0 %v1124
    %v1126 = vpop.f32.mrf.mxu0
    %v1127 = vadd.f32 %v1003, %v1126
    %v1128 = vpop.f32.mrf.mxu0
    %1129 = vmatprep.mubr.f32.mxu0 0.0
    %v1130 = vand.u32 %v529, 4294901760
    %1131 = vmatmul.mubr.f32.gmra.mxu0 %v1130
    %v1132 = vpop.f32.mrf.mxu0
    %v1133 = vadd.f32 %v1011, %v1132
    %v1134 = vpop.f32.mrf.mxu0
    %1135 = vdwg.mxu0
    %1136 = vmatprep.subr.mxu0 0.0
    %1137 = vmatpush1.msra.mxu0 0.0
    %1138 = vmatprep.subr.mxu0 0.0
    %1139 = vmatpush1.msra.mxu0 0.0
    %1140 = vmatprep.subr.mxu0 0.0
    %1141 = vmatpush1.msra.mxu0 0.0
    %1142 = vmatprep.subr.mxu0 0.0
    %1143 = vmatpush1.msra.mxu0 0.0
    %1144 = vmatprep.subr.mxu0 0.0
    %1145 = vmatpush1.msra.mxu0 0.0
    %1146 = vmatprep.subr.mxu0 0.0
    %v1147 = vand.u32 %v490, 4294901760
    %1148 = vmatpush1.msra.mxu0 %v1147
    %1149 = vmatprep.subr.mxu0 0.0
    %v1150 = vand.u32 %v481, 4294901760
    %1151 = vmatpush1.msra.mxu0 %v1150
    %1152 = vmatprep.subr.mxu0 0.0
    %v1153 = vand.u32 %v472, 4294901760
    %1154 = vmatpush1.msra.mxu0 %v1153
    %1155 = vmatprep.subr.mxu0 0.0
    %v1156 = vand.u32 %v463, 4294901760
    %1157 = vmatpush1.msra.mxu0 %v1156
    %1158 = vmatprep.subr.mxu0 0.0
    %v1159 = vand.u32 %v454, 4294901760
    %1160 = vmatpush1.msra.mxu0 %v1159
    %1161 = vmatprep.subr.mxu0 0.0
    %v1162 = vand.u32 %v445, 4294901760
    %1163 = vmatpush1.msra.mxu0 %v1162
    %1164 = vmatprep.subr.mxu0 0.0
    %v1165 = vand.u32 %v436, 4294901760
    %1166 = vmatpush1.msra.mxu0 %v1165
    %1167 = vmatprep.subr.mxu0 0.0
    %v1168 = vand.u32 %v427, 4294901760
    %1169 = vmatpush1.msra.mxu0 %v1168
    %1170 = vmatprep.subr.mxu0 0.0
    %v1171 = vand.u32 %v418, 4294901760
    %1172 = vmatpush1.msra.mxu0 %v1171
    %1173 = vmatprep.subr.mxu0 0.0
    %v1174 = vand.u32 %v409, 4294901760
    %1175 = vmatpush1.msra.mxu0 %v1174
    %1176 = vmatprep.subr.mxu0 0.0
    %v1177 = vand.u32 %v497, 4294901760
    %1178 = vmatpush1.msra.mxu0 %v1177
    %1179 = vmatprep.subr.mxu0 0.0
    %1180 = vmatpush2.msra.mxu0 0.0
    %1181 = vmatprep.subr.mxu0 0.0
    %1182 = vmatpush2.msra.mxu0 0.0
    %1183 = vmatprep.subr.mxu0 0.0
    %1184 = vmatpush2.msra.mxu0 0.0
    %1185 = vmatprep.subr.mxu0 0.0
    %1186 = vmatpush2.msra.mxu0 0.0
    %1187 = vmatprep.subr.mxu0 0.0
    %1188 = vmatpush2.msra.mxu0 0.0
    %1189 = vmatprep.subr.mxu0 0.0
    %1190 = vmatpush2.msra.mxu0 0.0
    %1191 = vmatprep.subr.mxu0 0.0
    %1192 = vmatpush2.msra.mxu0 0.0
    %1193 = vmatprep.subr.mxu0 0.0
    %1194 = vmatpush2.msra.mxu0 0.0
    %1195 = vmatprep.subr.mxu0 0.0
    %1196 = vmatpush2.msra.mxu0 0.0
    %1197 = vmatprep.subr.mxu0 0.0
    %1198 = vmatpush2.msra.mxu0 0.0
    %1199 = vmatprep.subr.mxu0 0.0
    %1200 = vmatpush2.msra.mxu0 0.0
    %1201 = vmatprep.subr.mxu0 0.0
    %1202 = vmatpush2.msra.mxu0 0.0
    %1203 = vmatprep.subr.mxu0 0.0
    %1204 = vmatpush2.msra.mxu0 0.0
    %1205 = vmatprep.subr.mxu0 0.0
    %1206 = vmatpush2.msra.mxu0 0.0
    %1207 = vmatprep.subr.mxu0 0.0
    %1208 = vmatpush2.msra.mxu0 0.0
    %1209 = vmatprep.subr.mxu0 0.0
    %1210 = vmatpush2.msra.mxu0 0.0
    %1211 = vmatprep.mubr.f32.mxu0 0.0
    %v1212 = vand.u32 %v520, 4294901760
    %1213 = vmatmul.mubr.f32.gmra.mxu0 %v1212
    %v1214 = vpop.f32.mrf.mxu0
    %v1215 = vadd.f32 %v1115, %v1214
    %v1216 = vpop.f32.mrf.mxu0
    %1217 = vmatprep.mubr.f32.mxu0 0.0
    %v1218 = vand.u32 %v523, 4294901760
    %1219 = vmatmul.mubr.f32.gmra.mxu0 %v1218
    %v1220 = vpop.f32.mrf.mxu0
    %v1221 = vadd.f32 %v1121, %v1220
    %v1222 = vpop.f32.mrf.mxu0
    %1223 = vmatprep.mubr.f32.mxu0 0.0
    %v1224 = vand.u32 %v526, 4294901760
    %1225 = vmatmul.mubr.f32.gmra.mxu0 %v1224
    %v1226 = vpop.f32.mrf.mxu0
    %v1227 = vadd.f32 %v1127, %v1226
    %v1228 = vpop.f32.mrf.mxu0
    %1229 = vmatprep.mubr.f32.mxu0 0.0
    %v1230 = vand.u32 %v529, 4294901760
    %1231 = vmatmul.mubr.f32.gmra.mxu0 %v1230
    %v1232 = vpop.f32.mrf.mxu0
    %v1233 = vadd.f32 %v1133, %v1232
    %v1234 = vpop.f32.mrf.mxu0
    %1235 = vdwg.mxu0
    %v1236 = vld [vmem:[%s5] sm:$0xff]
    %v1237 = vld [vmem:[%s5 + $0x8] sm:$0xff]
    %v1238 = vld [vmem:[%s5 + $0x10] sm:$0xff]
    %v1239 = vld [vmem:[%s5 + $0x18] sm:$0xff]
    %v1240 = vld [vmem:[%s6] sm:$0xff]
    %v1241 = vld [vmem:[%s6 + $0x8] sm:$0xff]
    %v1242 = vld [vmem:[%s6 + $0x10] sm:$0xff]
    %v1243 = vld [vmem:[%s6 + $0x18] sm:$0xff]
    %v1244 = vld [vmem:[%s6 + $0x20] sm:$0xff]
    %v1245 = vld [vmem:[%s6 + $0x28] sm:$0xff]
    %v1246 = vld [vmem:[%s6 + $0x30] sm:$0xff]
    %v1247 = vld [vmem:[%s6 + $0x38] sm:$0xff]
    %v1248 = vld [vmem:[%s6 + $0x40] sm:$0xff]
    %v1249 = vld [vmem:[%s6 + $0x48] sm:$0xff]
    %v1250 = vld [vmem:[%s6 + $0x50] sm:$0xff]
    %v1251 = vld [vmem:[%s6 + $0x58] sm:$0xff]
    %v1252 = vld [vmem:[%s7] sm:$0xff]
    %v1253 = vld [vmem:[%s7 + $0x8] sm:$0xff]
    %v1254 = vld [vmem:[%s7 + $0x10] sm:$0xff]
    %v1255 = vld [vmem:[%s7 + $0x18] sm:$0xff]
    %v1256 = vld [vmem:[%s7 + $0x20] sm:$0xff]
    %v1257 = vld [vmem:[%s7 + $0x28] sm:$0xff]
    %v1258 = vld [vmem:[%s8] sm:$0xff]
    %v1259 = vld [vmem:[%s8 + $0x8] sm:$0xff]
    %1261 = vset.pattern.permute.xlu0 0
    %1262 = vperm.xlu0 %1261, %v1236
    %v1263 = vpop.permute.xlu0 %1262
    %1266 = vset.pattern.permute.xlu0 0
    %1267 = vperm.xlu0 %1266, %v1237
    %v1268 = vpop.permute.xlu0 %1267
    %1271 = vset.pattern.permute.xlu0 0
    %1272 = vperm.xlu0 %1271, %v1238
    %v1273 = vpop.permute.xlu0 %1272
    %1276 = vset.pattern.permute.xlu0 0
    %1277 = vperm.xlu0 %1276, %v1239
    %v1278 = vpop.permute.xlu0 %1277
    %vm1280 = vcmp.ge.f32.partialorder %v1215, %v1263
    %vm1281 = vcmp.ge.f32.partialorder %v1221, %v1268
    %vm1282 = vcmp.ge.f32.partialorder %v1227, %v1273
    %vm1283 = vcmp.ge.f32.partialorder %v1233, %v1278
    %1284 = vset.pattern.permute.xlu0 1
    %1285 = vperm.xlu0 %1284, %v1236
    %v1286 = vpop.permute.xlu0 %1285
    %1288 = vset.pattern.permute.xlu0 1
    %1289 = vperm.xlu0 %1288, %v1237
    %v1290 = vpop.permute.xlu0 %1289
    %1292 = vset.pattern.permute.xlu0 1
    %1293 = vperm.xlu0 %1292, %v1238
    %v1294 = vpop.permute.xlu0 %1293
    %1296 = vset.pattern.permute.xlu0 1
    %1297 = vperm.xlu0 %1296, %v1239
    %v1298 = vpop.permute.xlu0 %1297
    %vm1300 = vcmp.lt.f32.partialorder %v1215, %v1286
    %vm1301 = vcmp.lt.f32.partialorder %v1221, %v1290
    %vm1302 = vcmp.lt.f32.partialorder %v1227, %v1294
    %vm1303 = vcmp.lt.f32.partialorder %v1233, %v1298
    %vm1304 = vmand %vm1280, %vm1300
    %vm1305 = vmand %vm1281, %vm1301
    %vm1306 = vmand %vm1282, %vm1302
    %vm1307 = vmand %vm1283, %vm1303
    %v1308 = vsel %vm1304, 1.0, 0.0
    %v1309 = vsel %vm1305, 1.0, 0.0
    %v1310 = vsel %vm1306, 1.0, 0.0
    %v1311 = vsel %vm1307, 1.0, 0.0
    %vm1312 = vcmp.ge.f32.partialorder %v1215, %v1286
    %vm1313 = vcmp.ge.f32.partialorder %v1221, %v1290
    %vm1314 = vcmp.ge.f32.partialorder %v1227, %v1294
    %vm1315 = vcmp.ge.f32.partialorder %v1233, %v1298
    %1316 = vset.pattern.permute.xlu0 2
    %1317 = vperm.xlu0 %1316, %v1236
    %v1318 = vpop.permute.xlu0 %1317
    %1320 = vset.pattern.permute.xlu0 2
    %1321 = vperm.xlu0 %1320, %v1237
    %v1322 = vpop.permute.xlu0 %1321
    %1324 = vset.pattern.permute.xlu0 2
    %1325 = vperm.xlu0 %1324, %v1238
    %v1326 = vpop.permute.xlu0 %1325
    %1328 = vset.pattern.permute.xlu0 2
    %1329 = vperm.xlu0 %1328, %v1239
    %v1330 = vpop.permute.xlu0 %1329
    %vm1332 = vcmp.lt.f32.partialorder %v1215, %v1318
    %vm1333 = vcmp.lt.f32.partialorder %v1221, %v1322
    %vm1334 = vcmp.lt.f32.partialorder %v1227, %v1326
    %vm1335 = vcmp.lt.f32.partialorder %v1233, %v1330
    %vm1336 = vmand %vm1312, %vm1332
    %vm1337 = vmand %vm1313, %vm1333
    %vm1338 = vmand %vm1314, %vm1334
    %vm1339 = vmand %vm1315, %vm1335
    %v1340 = vsel %vm1336, 1.0, 0.0
    %v1341 = vsel %vm1337, 1.0, 0.0
    %v1342 = vsel %vm1338, 1.0, 0.0
    %v1343 = vsel %vm1339, 1.0, 0.0
    %vm1344 = vcmp.ge.f32.partialorder %v1215, %v1318
    %vm1345 = vcmp.ge.f32.partialorder %v1221, %v1322
    %vm1346 = vcmp.ge.f32.partialorder %v1227, %v1326
    %vm1347 = vcmp.ge.f32.partialorder %v1233, %v1330
    %1348 = vset.pattern.permute.xlu0 3
    %1349 = vperm.xlu0 %1348, %v1236
    %v1350 = vpop.permute.xlu0 %1349
    %1352 = vset.pattern.permute.xlu0 3
    %1353 = vperm.xlu0 %1352, %v1237
    %v1354 = vpop.permute.xlu0 %1353
    %1356 = vset.pattern.permute.xlu0 3
    %1357 = vperm.xlu0 %1356, %v1238
    %v1358 = vpop.permute.xlu0 %1357
    %1360 = vset.pattern.permute.xlu0 3
    %1361 = vperm.xlu0 %1360, %v1239
    %v1362 = vpop.permute.xlu0 %1361
    %vm1364 = vcmp.lt.f32.partialorder %v1215, %v1350
    %vm1365 = vcmp.lt.f32.partialorder %v1221, %v1354
    %vm1366 = vcmp.lt.f32.partialorder %v1227, %v1358
    %vm1367 = vcmp.lt.f32.partialorder %v1233, %v1362
    %vm1368 = vmand %vm1344, %vm1364
    %vm1369 = vmand %vm1345, %vm1365
    %vm1370 = vmand %vm1346, %vm1366
    %vm1371 = vmand %vm1347, %vm1367
    %v1372 = vsel %vm1368, 1.0, 0.0
    %v1373 = vsel %vm1369, 1.0, 0.0
    %v1374 = vsel %vm1370, 1.0, 0.0
    %v1375 = vsel %vm1371, 1.0, 0.0
    %vm1376 = vcmp.ge.f32.partialorder %v1215, %v1350
    %vm1377 = vcmp.ge.f32.partialorder %v1221, %v1354
    %vm1378 = vcmp.ge.f32.partialorder %v1227, %v1358
    %vm1379 = vcmp.ge.f32.partialorder %v1233, %v1362
    %1380 = vset.pattern.permute.xlu0 4
    %1381 = vperm.xlu0 %1380, %v1236
    %v1382 = vpop.permute.xlu0 %1381
    %1384 = vset.pattern.permute.xlu0 4
    %1385 = vperm.xlu0 %1384, %v1237
    %v1386 = vpop.permute.xlu0 %1385
    %1388 = vset.pattern.permute.xlu0 4
    %1389 = vperm.xlu0 %1388, %v1238
    %v1390 = vpop.permute.xlu0 %1389
    %1392 = vset.pattern.permute.xlu0 4
    %1393 = vperm.xlu0 %1392, %v1239
    %v1394 = vpop.permute.xlu0 %1393
    %vm1396 = vcmp.lt.f32.partialorder %v1215, %v1382
    %vm1397 = vcmp.lt.f32.partialorder %v1221, %v1386
    %vm1398 = vcmp.lt.f32.partialorder %v1227, %v1390
    %vm1399 = vcmp.lt.f32.partialorder %v1233, %v1394
    %vm1400 = vmand %vm1376, %vm1396
    %vm1401 = vmand %vm1377, %vm1397
    %vm1402 = vmand %vm1378, %vm1398
    %vm1403 = vmand %vm1379, %vm1399
    %v1404 = vsel %vm1400, 1.0, 0.0
    %v1405 = vsel %vm1401, 1.0, 0.0
    %v1406 = vsel %vm1402, 1.0, 0.0
    %v1407 = vsel %vm1403, 1.0, 0.0
    %vm1408 = vcmp.ge.f32.partialorder %v1215, %v1382
    %vm1409 = vcmp.ge.f32.partialorder %v1221, %v1386
    %vm1410 = vcmp.ge.f32.partialorder %v1227, %v1390
    %vm1411 = vcmp.ge.f32.partialorder %v1233, %v1394
    %1412 = vset.pattern.permute.xlu0 5
    %1413 = vperm.xlu0 %1412, %v1236
    %v1414 = vpop.permute.xlu0 %1413
    %1416 = vset.pattern.permute.xlu0 5
    %1417 = vperm.xlu0 %1416, %v1237
    %v1418 = vpop.permute.xlu0 %1417
    %1420 = vset.pattern.permute.xlu0 5
    %1421 = vperm.xlu0 %1420, %v1238
    %v1422 = vpop.permute.xlu0 %1421
    %1424 = vset.pattern.permute.xlu0 5
    %1425 = vperm.xlu0 %1424, %v1239
    %v1426 = vpop.permute.xlu0 %1425
    %vm1428 = vcmp.lt.f32.partialorder %v1215, %v1414
    %vm1429 = vcmp.lt.f32.partialorder %v1221, %v1418
    %vm1430 = vcmp.lt.f32.partialorder %v1227, %v1422
    %vm1431 = vcmp.lt.f32.partialorder %v1233, %v1426
    %vm1432 = vmand %vm1408, %vm1428
    %vm1433 = vmand %vm1409, %vm1429
    %vm1434 = vmand %vm1410, %vm1430
    %vm1435 = vmand %vm1411, %vm1431
    %v1436 = vsel %vm1432, 1.0, 0.0
    %v1437 = vsel %vm1433, 1.0, 0.0
    %v1438 = vsel %vm1434, 1.0, 0.0
    %v1439 = vsel %vm1435, 1.0, 0.0
    %vm1440 = vcmp.ge.f32.partialorder %v1215, %v1414
    %vm1441 = vcmp.ge.f32.partialorder %v1221, %v1418
    %vm1442 = vcmp.ge.f32.partialorder %v1227, %v1422
    %vm1443 = vcmp.ge.f32.partialorder %v1233, %v1426
    %1444 = vset.pattern.permute.xlu0 6
    %1445 = vperm.xlu0 %1444, %v1236
    %v1446 = vpop.permute.xlu0 %1445
    %1448 = vset.pattern.permute.xlu0 6
    %1449 = vperm.xlu0 %1448, %v1237
    %v1450 = vpop.permute.xlu0 %1449
    %1452 = vset.pattern.permute.xlu0 6
    %1453 = vperm.xlu0 %1452, %v1238
    %v1454 = vpop.permute.xlu0 %1453
    %1456 = vset.pattern.permute.xlu0 6
    %1457 = vperm.xlu0 %1456, %v1239
    %v1458 = vpop.permute.xlu0 %1457
    %vm1460 = vcmp.lt.f32.partialorder %v1215, %v1446
    %vm1461 = vcmp.lt.f32.partialorder %v1221, %v1450
    %vm1462 = vcmp.lt.f32.partialorder %v1227, %v1454
    %vm1463 = vcmp.lt.f32.partialorder %v1233, %v1458
    %vm1464 = vmand %vm1440, %vm1460
    %vm1465 = vmand %vm1441, %vm1461
    %vm1466 = vmand %vm1442, %vm1462
    %vm1467 = vmand %vm1443, %vm1463
    %v1468 = vsel %vm1464, 1.0, 0.0
    %v1469 = vsel %vm1465, 1.0, 0.0
    %v1470 = vsel %vm1466, 1.0, 0.0
    %v1471 = vsel %vm1467, 1.0, 0.0
    %vm1472 = vcmp.ge.f32.partialorder %v1215, %v1446
    %vm1473 = vcmp.ge.f32.partialorder %v1221, %v1450
    %vm1474 = vcmp.ge.f32.partialorder %v1227, %v1454
    %vm1475 = vcmp.ge.f32.partialorder %v1233, %v1458
    %1476 = vset.pattern.permute.xlu0 7
    %1477 = vperm.xlu0 %1476, %v1236
    %v1478 = vpop.permute.xlu0 %1477
    %1480 = vset.pattern.permute.xlu0 7
    %1481 = vperm.xlu0 %1480, %v1237
    %v1482 = vpop.permute.xlu0 %1481
    %1484 = vset.pattern.permute.xlu0 7
    %1485 = vperm.xlu0 %1484, %v1238
    %v1486 = vpop.permute.xlu0 %1485
    %1488 = vset.pattern.permute.xlu0 7
    %1489 = vperm.xlu0 %1488, %v1239
    %v1490 = vpop.permute.xlu0 %1489
    %vm1492 = vcmp.lt.f32.partialorder %v1215, %v1478
    %vm1493 = vcmp.lt.f32.partialorder %v1221, %v1482
    %vm1494 = vcmp.lt.f32.partialorder %v1227, %v1486
    %vm1495 = vcmp.lt.f32.partialorder %v1233, %v1490
    %vm1496 = vmand %vm1472, %vm1492
    %vm1497 = vmand %vm1473, %vm1493
    %vm1498 = vmand %vm1474, %vm1494
    %vm1499 = vmand %vm1475, %vm1495
    %v1500 = vsel %vm1496, 1.0, 0.0
    %v1501 = vsel %vm1497, 1.0, 0.0
    %v1502 = vsel %vm1498, 1.0, 0.0
    %v1503 = vsel %vm1499, 1.0, 0.0
    %vm1504 = vcmp.ge.f32.partialorder %v1215, %v1478
    %vm1505 = vcmp.ge.f32.partialorder %v1221, %v1482
    %vm1506 = vcmp.ge.f32.partialorder %v1227, %v1486
    %vm1507 = vcmp.ge.f32.partialorder %v1233, %v1490
    %1508 = vset.pattern.permute.xlu0 8
    %1509 = vperm.xlu0 %1508, %v1236
    %v1510 = vpop.permute.xlu0 %1509
    %1512 = vset.pattern.permute.xlu0 8
    %1513 = vperm.xlu0 %1512, %v1237
    %v1514 = vpop.permute.xlu0 %1513
    %1516 = vset.pattern.permute.xlu0 8
    %1517 = vperm.xlu0 %1516, %v1238
    %v1518 = vpop.permute.xlu0 %1517
    %1520 = vset.pattern.permute.xlu0 8
    %1521 = vperm.xlu0 %1520, %v1239
    %v1522 = vpop.permute.xlu0 %1521
    %vm1524 = vcmp.lt.f32.partialorder %v1215, %v1510
    %vm1525 = vcmp.lt.f32.partialorder %v1221, %v1514
    %vm1526 = vcmp.lt.f32.partialorder %v1227, %v1518
    %vm1527 = vcmp.lt.f32.partialorder %v1233, %v1522
    %vm1528 = vmand %vm1504, %vm1524
    %vm1529 = vmand %vm1505, %vm1525
    %vm1530 = vmand %vm1506, %vm1526
    %vm1531 = vmand %vm1507, %vm1527
    %v1532 = vsel %vm1528, 1.0, 0.0
    %v1533 = vsel %vm1529, 1.0, 0.0
    %v1534 = vsel %vm1530, 1.0, 0.0
    %v1535 = vsel %vm1531, 1.0, 0.0
    %vm1536 = vcmp.ge.f32.partialorder %v1215, %v1510
    %vm1537 = vcmp.ge.f32.partialorder %v1221, %v1514
    %vm1538 = vcmp.ge.f32.partialorder %v1227, %v1518
    %vm1539 = vcmp.ge.f32.partialorder %v1233, %v1522
    %1540 = vset.pattern.permute.xlu0 9
    %1541 = vperm.xlu0 %1540, %v1236
    %v1542 = vpop.permute.xlu0 %1541
    %1544 = vset.pattern.permute.xlu0 9
    %1545 = vperm.xlu0 %1544, %v1237
    %v1546 = vpop.permute.xlu0 %1545
    %1548 = vset.pattern.permute.xlu0 9
    %1549 = vperm.xlu0 %1548, %v1238
    %v1550 = vpop.permute.xlu0 %1549
    %1552 = vset.pattern.permute.xlu0 9
    %1553 = vperm.xlu0 %1552, %v1239
    %v1554 = vpop.permute.xlu0 %1553
    %vm1556 = vcmp.lt.f32.partialorder %v1215, %v1542
    %vm1557 = vcmp.lt.f32.partialorder %v1221, %v1546
    %vm1558 = vcmp.lt.f32.partialorder %v1227, %v1550
    %vm1559 = vcmp.lt.f32.partialorder %v1233, %v1554
    %vm1560 = vmand %vm1536, %vm1556
    %vm1561 = vmand %vm1537, %vm1557
    %vm1562 = vmand %vm1538, %vm1558
    %vm1563 = vmand %vm1539, %vm1559
    %v1564 = vsel %vm1560, 1.0, 0.0
    %v1565 = vsel %vm1561, 1.0, 0.0
    %v1566 = vsel %vm1562, 1.0, 0.0
    %v1567 = vsel %vm1563, 1.0, 0.0
    %vm1568 = vcmp.ge.f32.partialorder %v1215, %v1542
    %vm1569 = vcmp.ge.f32.partialorder %v1221, %v1546
    %vm1570 = vcmp.ge.f32.partialorder %v1227, %v1550
    %vm1571 = vcmp.ge.f32.partialorder %v1233, %v1554
    %1572 = vset.pattern.permute.xlu0 10
    %1573 = vperm.xlu0 %1572, %v1236
    %v1574 = vpop.permute.xlu0 %1573
    %1576 = vset.pattern.permute.xlu0 10
    %1577 = vperm.xlu0 %1576, %v1237
    %v1578 = vpop.permute.xlu0 %1577
    %1580 = vset.pattern.permute.xlu0 10
    %1581 = vperm.xlu0 %1580, %v1238
    %v1582 = vpop.permute.xlu0 %1581
    %1584 = vset.pattern.permute.xlu0 10
    %1585 = vperm.xlu0 %1584, %v1239
    %v1586 = vpop.permute.xlu0 %1585
    %vm1588 = vcmp.lt.f32.partialorder %v1215, %v1574
    %vm1589 = vcmp.lt.f32.partialorder %v1221, %v1578
    %vm1590 = vcmp.lt.f32.partialorder %v1227, %v1582
    %vm1591 = vcmp.lt.f32.partialorder %v1233, %v1586
    %vm1592 = vmand %vm1568, %vm1588
    %vm1593 = vmand %vm1569, %vm1589
    %vm1594 = vmand %vm1570, %vm1590
    %vm1595 = vmand %vm1571, %vm1591
    %v1596 = vsel %vm1592, 1.0, 0.0
    %v1597 = vsel %vm1593, 1.0, 0.0
    %v1598 = vsel %vm1594, 1.0, 0.0
    %v1599 = vsel %vm1595, 1.0, 0.0
    %vm1600 = vcmp.ge.f32.partialorder %v1215, %v1574
    %vm1601 = vcmp.ge.f32.partialorder %v1221, %v1578
    %vm1602 = vcmp.ge.f32.partialorder %v1227, %v1582
    %vm1603 = vcmp.ge.f32.partialorder %v1233, %v1586
    %1604 = vset.pattern.permute.xlu0 11
    %1605 = vperm.xlu0 %1604, %v1236
    %v1606 = vpop.permute.xlu0 %1605
    %1608 = vset.pattern.permute.xlu0 11
    %1609 = vperm.xlu0 %1608, %v1237
    %v1610 = vpop.permute.xlu0 %1609
    %1612 = vset.pattern.permute.xlu0 11
    %1613 = vperm.xlu0 %1612, %v1238
    %v1614 = vpop.permute.xlu0 %1613
    %1616 = vset.pattern.permute.xlu0 11
    %1617 = vperm.xlu0 %1616, %v1239
    %v1618 = vpop.permute.xlu0 %1617
    %vm1620 = vcmp.lt.f32.partialorder %v1215, %v1606
    %vm1621 = vcmp.lt.f32.partialorder %v1221, %v1610
    %vm1622 = vcmp.lt.f32.partialorder %v1227, %v1614
    %vm1623 = vcmp.lt.f32.partialorder %v1233, %v1618
    %vm1624 = vmand %vm1600, %vm1620
    %vm1625 = vmand %vm1601, %vm1621
    %vm1626 = vmand %vm1602, %vm1622
    %vm1627 = vmand %vm1603, %vm1623
    %v1628 = vsel %vm1624, 1.0, 0.0
    %v1629 = vsel %vm1625, 1.0, 0.0
    %v1630 = vsel %vm1626, 1.0, 0.0
    %v1631 = vsel %vm1627, 1.0, 0.0
    %vm1632 = vcmp.ge.f32.partialorder %v1215, %v1606
    %vm1633 = vcmp.ge.f32.partialorder %v1221, %v1610
    %vm1634 = vcmp.ge.f32.partialorder %v1227, %v1614
    %vm1635 = vcmp.ge.f32.partialorder %v1233, %v1618
    %1636 = vset.pattern.permute.xlu0 12
    %1637 = vperm.xlu0 %1636, %v1236
    %v1638 = vpop.permute.xlu0 %1637
    %1640 = vset.pattern.permute.xlu0 12
    %1641 = vperm.xlu0 %1640, %v1237
    %v1642 = vpop.permute.xlu0 %1641
    %1644 = vset.pattern.permute.xlu0 12
    %1645 = vperm.xlu0 %1644, %v1238
    %v1646 = vpop.permute.xlu0 %1645
    %1648 = vset.pattern.permute.xlu0 12
    %1649 = vperm.xlu0 %1648, %v1239
    %v1650 = vpop.permute.xlu0 %1649
    %vm1652 = vcmp.lt.f32.partialorder %v1215, %v1638
    %vm1653 = vcmp.lt.f32.partialorder %v1221, %v1642
    %vm1654 = vcmp.lt.f32.partialorder %v1227, %v1646
    %vm1655 = vcmp.lt.f32.partialorder %v1233, %v1650
    %vm1656 = vmand %vm1632, %vm1652
    %vm1657 = vmand %vm1633, %vm1653
    %vm1658 = vmand %vm1634, %vm1654
    %vm1659 = vmand %vm1635, %vm1655
    %v1660 = vsel %vm1656, 1.0, 0.0
    %v1661 = vsel %vm1657, 1.0, 0.0
    %v1662 = vsel %vm1658, 1.0, 0.0
    %v1663 = vsel %vm1659, 1.0, 0.0
    %vm1664 = vcmp.ge.f32.partialorder %v1215, %v1638
    %vm1665 = vcmp.ge.f32.partialorder %v1221, %v1642
    %vm1666 = vcmp.ge.f32.partialorder %v1227, %v1646
    %vm1667 = vcmp.ge.f32.partialorder %v1233, %v1650
    %1668 = vset.pattern.permute.xlu0 13
    %1669 = vperm.xlu0 %1668, %v1236
    %v1670 = vpop.permute.xlu0 %1669
    %1672 = vset.pattern.permute.xlu0 13
    %1673 = vperm.xlu0 %1672, %v1237
    %v1674 = vpop.permute.xlu0 %1673
    %1676 = vset.pattern.permute.xlu0 13
    %1677 = vperm.xlu0 %1676, %v1238
    %v1678 = vpop.permute.xlu0 %1677
    %1680 = vset.pattern.permute.xlu0 13
    %1681 = vperm.xlu0 %1680, %v1239
    %v1682 = vpop.permute.xlu0 %1681
    %vm1684 = vcmp.lt.f32.partialorder %v1215, %v1670
    %vm1685 = vcmp.lt.f32.partialorder %v1221, %v1674
    %vm1686 = vcmp.lt.f32.partialorder %v1227, %v1678
    %vm1687 = vcmp.lt.f32.partialorder %v1233, %v1682
    %vm1688 = vmand %vm1664, %vm1684
    %vm1689 = vmand %vm1665, %vm1685
    %vm1690 = vmand %vm1666, %vm1686
    %vm1691 = vmand %vm1667, %vm1687
    %v1692 = vsel %vm1688, 1.0, 0.0
    %v1693 = vsel %vm1689, 1.0, 0.0
    %v1694 = vsel %vm1690, 1.0, 0.0
    %v1695 = vsel %vm1691, 1.0, 0.0
    %v1696 = vsub.f32 %v1215, %v1263
    %v1697 = vsub.f32 %v1221, %v1268
    %v1698 = vsub.f32 %v1227, %v1273
    %v1699 = vsub.f32 %v1233, %v1278
    %1701 = vset.pattern.permute.xlu0 0
    %1702 = vperm.xlu0 %1701, %v1240
    %v1703 = vpop.permute.xlu0 %1702
    %1706 = vset.pattern.permute.xlu0 0
    %1707 = vperm.xlu0 %1706, %v1241
    %v1708 = vpop.permute.xlu0 %1707
    %1711 = vset.pattern.permute.xlu0 0
    %1712 = vperm.xlu0 %1711, %v1242
    %v1713 = vpop.permute.xlu0 %1712
    %1716 = vset.pattern.permute.xlu0 0
    %1717 = vperm.xlu0 %1716, %v1243
    %v1718 = vpop.permute.xlu0 %1717
    %v1720 = vmul.f32 %v1696, %v1703
    %v1721 = vmul.f32 %v1697, %v1708
    %v1722 = vmul.f32 %v1698, %v1713
    %v1723 = vmul.f32 %v1699, %v1718
    %v1724 = vmul.f32 %v1720, %v1308
    %v1725 = vmul.f32 %v1721, %v1309
    %v1726 = vmul.f32 %v1722, %v1310
    %v1727 = vmul.f32 %v1723, %v1311
    %v1728 = vsub.f32 %v1318, %v1215
    %v1729 = vsub.f32 %v1322, %v1221
    %v1730 = vsub.f32 %v1326, %v1227
    %v1731 = vsub.f32 %v1330, %v1233
    %1732 = vset.pattern.permute.xlu0 1
    %1733 = vperm.xlu0 %1732, %v1240
    %v1734 = vpop.permute.xlu0 %1733
    %1736 = vset.pattern.permute.xlu0 1
    %1737 = vperm.xlu0 %1736, %v1241
    %v1738 = vpop.permute.xlu0 %1737
    %1740 = vset.pattern.permute.xlu0 1
    %1741 = vperm.xlu0 %1740, %v1242
    %v1742 = vpop.permute.xlu0 %1741
    %1744 = vset.pattern.permute.xlu0 1
    %1745 = vperm.xlu0 %1744, %v1243
    %v1746 = vpop.permute.xlu0 %1745
    %v1748 = vmul.f32 %v1728, %v1734
    %v1749 = vmul.f32 %v1729, %v1738
    %v1750 = vmul.f32 %v1730, %v1742
    %v1751 = vmul.f32 %v1731, %v1746
    %v1752 = vmul.f32 %v1748, %v1340
    %v1753 = vmul.f32 %v1749, %v1341
    %v1754 = vmul.f32 %v1750, %v1342
    %v1755 = vmul.f32 %v1751, %v1343
    %v1756 = vadd.f32 %v1724, %v1752
    %v1757 = vadd.f32 %v1725, %v1753
    %v1758 = vadd.f32 %v1726, %v1754
    %v1759 = vadd.f32 %v1727, %v1755
    %v1760 = vsub.f32 %v1215, %v1286
    %v1761 = vsub.f32 %v1221, %v1290
    %v1762 = vsub.f32 %v1227, %v1294
    %v1763 = vsub.f32 %v1233, %v1298
    %v1764 = vmul.f32 %v1760, %v1734
    %v1765 = vmul.f32 %v1761, %v1738
    %v1766 = vmul.f32 %v1762, %v1742
    %v1767 = vmul.f32 %v1763, %v1746
    %v1768 = vmul.f32 %v1764, %v1340
    %v1769 = vmul.f32 %v1765, %v1341
    %v1770 = vmul.f32 %v1766, %v1342
    %v1771 = vmul.f32 %v1767, %v1343
    %v1772 = vsub.f32 %v1350, %v1215
    %v1773 = vsub.f32 %v1354, %v1221
    %v1774 = vsub.f32 %v1358, %v1227
    %v1775 = vsub.f32 %v1362, %v1233
    %1776 = vset.pattern.permute.xlu0 2
    %1777 = vperm.xlu0 %1776, %v1240
    %v1778 = vpop.permute.xlu0 %1777
    %1780 = vset.pattern.permute.xlu0 2
    %1781 = vperm.xlu0 %1780, %v1241
    %v1782 = vpop.permute.xlu0 %1781
    %1784 = vset.pattern.permute.xlu0 2
    %1785 = vperm.xlu0 %1784, %v1242
    %v1786 = vpop.permute.xlu0 %1785
    %1788 = vset.pattern.permute.xlu0 2
    %1789 = vperm.xlu0 %1788, %v1243
    %v1790 = vpop.permute.xlu0 %1789
    %v1792 = vmul.f32 %v1772, %v1778
    %v1793 = vmul.f32 %v1773, %v1782
    %v1794 = vmul.f32 %v1774, %v1786
    %v1795 = vmul.f32 %v1775, %v1790
    %v1796 = vmul.f32 %v1792, %v1372
    %v1797 = vmul.f32 %v1793, %v1373
    %v1798 = vmul.f32 %v1794, %v1374
    %v1799 = vmul.f32 %v1795, %v1375
    %v1800 = vadd.f32 %v1768, %v1796
    %v1801 = vadd.f32 %v1769, %v1797
    %v1802 = vadd.f32 %v1770, %v1798
    %v1803 = vadd.f32 %v1771, %v1799
    %v1804 = vsub.f32 %v1215, %v1318
    %v1805 = vsub.f32 %v1221, %v1322
    %v1806 = vsub.f32 %v1227, %v1326
    %v1807 = vsub.f32 %v1233, %v1330
    %v1808 = vmul.f32 %v1804, %v1778
    %v1809 = vmul.f32 %v1805, %v1782
    %v1810 = vmul.f32 %v1806, %v1786
    %v1811 = vmul.f32 %v1807, %v1790
    %v1812 = vmul.f32 %v1808, %v1372
    %v1813 = vmul.f32 %v1809, %v1373
    %v1814 = vmul.f32 %v1810, %v1374
    %v1815 = vmul.f32 %v1811, %v1375
    %v1816 = vsub.f32 %v1382, %v1215
    %v1817 = vsub.f32 %v1386, %v1221
    %v1818 = vsub.f32 %v1390, %v1227
    %v1819 = vsub.f32 %v1394, %v1233
    %1820 = vset.pattern.permute.xlu0 3
    %1821 = vperm.xlu0 %1820, %v1240
    %v1822 = vpop.permute.xlu0 %1821
    %1824 = vset.pattern.permute.xlu0 3
    %1825 = vperm.xlu0 %1824, %v1241
    %v1826 = vpop.permute.xlu0 %1825
    %1828 = vset.pattern.permute.xlu0 3
    %1829 = vperm.xlu0 %1828, %v1242
    %v1830 = vpop.permute.xlu0 %1829
    %1832 = vset.pattern.permute.xlu0 3
    %1833 = vperm.xlu0 %1832, %v1243
    %v1834 = vpop.permute.xlu0 %1833
    %v1836 = vmul.f32 %v1816, %v1822
    %v1837 = vmul.f32 %v1817, %v1826
    %v1838 = vmul.f32 %v1818, %v1830
    %v1839 = vmul.f32 %v1819, %v1834
    %v1840 = vmul.f32 %v1836, %v1404
    %v1841 = vmul.f32 %v1837, %v1405
    %v1842 = vmul.f32 %v1838, %v1406
    %v1843 = vmul.f32 %v1839, %v1407
    %v1844 = vadd.f32 %v1812, %v1840
    %v1845 = vadd.f32 %v1813, %v1841
    %v1846 = vadd.f32 %v1814, %v1842
    %v1847 = vadd.f32 %v1815, %v1843
    %v1848 = vsub.f32 %v1215, %v1350
    %v1849 = vsub.f32 %v1221, %v1354
    %v1850 = vsub.f32 %v1227, %v1358
    %v1851 = vsub.f32 %v1233, %v1362
    %v1852 = vmul.f32 %v1848, %v1822
    %v1853 = vmul.f32 %v1849, %v1826
    %v1854 = vmul.f32 %v1850, %v1830
    %v1855 = vmul.f32 %v1851, %v1834
    %v1856 = vmul.f32 %v1852, %v1404
    %v1857 = vmul.f32 %v1853, %v1405
    %v1858 = vmul.f32 %v1854, %v1406
    %v1859 = vmul.f32 %v1855, %v1407
    %v1860 = vsub.f32 %v1414, %v1215
    %v1861 = vsub.f32 %v1418, %v1221
    %v1862 = vsub.f32 %v1422, %v1227
    %v1863 = vsub.f32 %v1426, %v1233
    %1864 = vset.pattern.permute.xlu0 4
    %1865 = vperm.xlu0 %1864, %v1240
    %v1866 = vpop.permute.xlu0 %1865
    %1868 = vset.pattern.permute.xlu0 4
    %1869 = vperm.xlu0 %1868, %v1241
    %v1870 = vpop.permute.xlu0 %1869
    %1872 = vset.pattern.permute.xlu0 4
    %1873 = vperm.xlu0 %1872, %v1242
    %v1874 = vpop.permute.xlu0 %1873
    %1876 = vset.pattern.permute.xlu0 4
    %1877 = vperm.xlu0 %1876, %v1243
    %v1878 = vpop.permute.xlu0 %1877
    %v1880 = vmul.f32 %v1860, %v1866
    %v1881 = vmul.f32 %v1861, %v1870
    %v1882 = vmul.f32 %v1862, %v1874
    %v1883 = vmul.f32 %v1863, %v1878
    %v1884 = vmul.f32 %v1880, %v1436
    %v1885 = vmul.f32 %v1881, %v1437
    %v1886 = vmul.f32 %v1882, %v1438
    %v1887 = vmul.f32 %v1883, %v1439
    %v1888 = vadd.f32 %v1856, %v1884
    %v1889 = vadd.f32 %v1857, %v1885
    %v1890 = vadd.f32 %v1858, %v1886
    %v1891 = vadd.f32 %v1859, %v1887
    %v1892 = vsub.f32 %v1215, %v1382
    %v1893 = vsub.f32 %v1221, %v1386
    %v1894 = vsub.f32 %v1227, %v1390
    %v1895 = vsub.f32 %v1233, %v1394
    %v1896 = vmul.f32 %v1892, %v1866
    %v1897 = vmul.f32 %v1893, %v1870
    %v1898 = vmul.f32 %v1894, %v1874
    %v1899 = vmul.f32 %v1895, %v1878
    %v1900 = vmul.f32 %v1896, %v1436
    %v1901 = vmul.f32 %v1897, %v1437
    %v1902 = vmul.f32 %v1898, %v1438
    %v1903 = vmul.f32 %v1899, %v1439
    %v1904 = vsub.f32 %v1446, %v1215
    %v1905 = vsub.f32 %v1450, %v1221
    %v1906 = vsub.f32 %v1454, %v1227
    %v1907 = vsub.f32 %v1458, %v1233
    %1908 = vset.pattern.permute.xlu0 5
    %1909 = vperm.xlu0 %1908, %v1240
    %v1910 = vpop.permute.xlu0 %1909
    %1912 = vset.pattern.permute.xlu0 5
    %1913 = vperm.xlu0 %1912, %v1241
    %v1914 = vpop.permute.xlu0 %1913
    %1916 = vset.pattern.permute.xlu0 5
    %1917 = vperm.xlu0 %1916, %v1242
    %v1918 = vpop.permute.xlu0 %1917
    %1920 = vset.pattern.permute.xlu0 5
    %1921 = vperm.xlu0 %1920, %v1243
    %v1922 = vpop.permute.xlu0 %1921
    %v1924 = vmul.f32 %v1904, %v1910
    %v1925 = vmul.f32 %v1905, %v1914
    %v1926 = vmul.f32 %v1906, %v1918
    %v1927 = vmul.f32 %v1907, %v1922
    %v1928 = vmul.f32 %v1924, %v1468
    %v1929 = vmul.f32 %v1925, %v1469
    %v1930 = vmul.f32 %v1926, %v1470
    %v1931 = vmul.f32 %v1927, %v1471
    %v1932 = vadd.f32 %v1900, %v1928
    %v1933 = vadd.f32 %v1901, %v1929
    %v1934 = vadd.f32 %v1902, %v1930
    %v1935 = vadd.f32 %v1903, %v1931
    %v1936 = vsub.f32 %v1215, %v1414
    %v1937 = vsub.f32 %v1221, %v1418
    %v1938 = vsub.f32 %v1227, %v1422
    %v1939 = vsub.f32 %v1233, %v1426
    %v1940 = vmul.f32 %v1936, %v1910
    %v1941 = vmul.f32 %v1937, %v1914
    %v1942 = vmul.f32 %v1938, %v1918
    %v1943 = vmul.f32 %v1939, %v1922
    %v1944 = vmul.f32 %v1940, %v1468
    %v1945 = vmul.f32 %v1941, %v1469
    %v1946 = vmul.f32 %v1942, %v1470
    %v1947 = vmul.f32 %v1943, %v1471
    %v1948 = vsub.f32 %v1478, %v1215
    %v1949 = vsub.f32 %v1482, %v1221
    %v1950 = vsub.f32 %v1486, %v1227
    %v1951 = vsub.f32 %v1490, %v1233
    %1952 = vset.pattern.permute.xlu0 6
    %1953 = vperm.xlu0 %1952, %v1240
    %v1954 = vpop.permute.xlu0 %1953
    %1956 = vset.pattern.permute.xlu0 6
    %1957 = vperm.xlu0 %1956, %v1241
    %v1958 = vpop.permute.xlu0 %1957
    %1960 = vset.pattern.permute.xlu0 6
    %1961 = vperm.xlu0 %1960, %v1242
    %v1962 = vpop.permute.xlu0 %1961
    %1964 = vset.pattern.permute.xlu0 6
    %1965 = vperm.xlu0 %1964, %v1243
    %v1966 = vpop.permute.xlu0 %1965
    %v1968 = vmul.f32 %v1948, %v1954
    %v1969 = vmul.f32 %v1949, %v1958
    %v1970 = vmul.f32 %v1950, %v1962
    %v1971 = vmul.f32 %v1951, %v1966
    %v1972 = vmul.f32 %v1968, %v1500
    %v1973 = vmul.f32 %v1969, %v1501
    %v1974 = vmul.f32 %v1970, %v1502
    %v1975 = vmul.f32 %v1971, %v1503
    %v1976 = vadd.f32 %v1944, %v1972
    %v1977 = vadd.f32 %v1945, %v1973
    %v1978 = vadd.f32 %v1946, %v1974
    %v1979 = vadd.f32 %v1947, %v1975
    %v1980 = vsub.f32 %v1215, %v1446
    %v1981 = vsub.f32 %v1221, %v1450
    %v1982 = vsub.f32 %v1227, %v1454
    %v1983 = vsub.f32 %v1233, %v1458
    %v1984 = vmul.f32 %v1980, %v1954
    %v1985 = vmul.f32 %v1981, %v1958
    %v1986 = vmul.f32 %v1982, %v1962
    %v1987 = vmul.f32 %v1983, %v1966
    %v1988 = vmul.f32 %v1984, %v1500
    %v1989 = vmul.f32 %v1985, %v1501
    %v1990 = vmul.f32 %v1986, %v1502
    %v1991 = vmul.f32 %v1987, %v1503
    %v1992 = vsub.f32 %v1510, %v1215
    %v1993 = vsub.f32 %v1514, %v1221
    %v1994 = vsub.f32 %v1518, %v1227
    %v1995 = vsub.f32 %v1522, %v1233
    %1996 = vset.pattern.permute.xlu0 7
    %1997 = vperm.xlu0 %1996, %v1240
    %v1998 = vpop.permute.xlu0 %1997
    %2000 = vset.pattern.permute.xlu0 7
    %2001 = vperm.xlu0 %2000, %v1241
    %v2002 = vpop.permute.xlu0 %2001
    %2004 = vset.pattern.permute.xlu0 7
    %2005 = vperm.xlu0 %2004, %v1242
    %v2006 = vpop.permute.xlu0 %2005
    %2008 = vset.pattern.permute.xlu0 7
    %2009 = vperm.xlu0 %2008, %v1243
    %v2010 = vpop.permute.xlu0 %2009
    %v2012 = vmul.f32 %v1992, %v1998
    %v2013 = vmul.f32 %v1993, %v2002
    %v2014 = vmul.f32 %v1994, %v2006
    %v2015 = vmul.f32 %v1995, %v2010
    %v2016 = vmul.f32 %v2012, %v1532
    %v2017 = vmul.f32 %v2013, %v1533
    %v2018 = vmul.f32 %v2014, %v1534
    %v2019 = vmul.f32 %v2015, %v1535
    %v2020 = vadd.f32 %v1988, %v2016
    %v2021 = vadd.f32 %v1989, %v2017
    %v2022 = vadd.f32 %v1990, %v2018
    %v2023 = vadd.f32 %v1991, %v2019
    %v2024 = vsub.f32 %v1215, %v1478
    %v2025 = vsub.f32 %v1221, %v1482
    %v2026 = vsub.f32 %v1227, %v1486
    %v2027 = vsub.f32 %v1233, %v1490
    %v2028 = vmul.f32 %v2024, %v1998
    %v2029 = vmul.f32 %v2025, %v2002
    %v2030 = vmul.f32 %v2026, %v2006
    %v2031 = vmul.f32 %v2027, %v2010
    %v2032 = vmul.f32 %v2028, %v1532
    %v2033 = vmul.f32 %v2029, %v1533
    %v2034 = vmul.f32 %v2030, %v1534
    %v2035 = vmul.f32 %v2031, %v1535
    %v2036 = vsub.f32 %v1542, %v1215
    %v2037 = vsub.f32 %v1546, %v1221
    %v2038 = vsub.f32 %v1550, %v1227
    %v2039 = vsub.f32 %v1554, %v1233
    %2040 = vset.pattern.permute.xlu0 8
    %2041 = vperm.xlu0 %2040, %v1240
    %v2042 = vpop.permute.xlu0 %2041
    %2044 = vset.pattern.permute.xlu0 8
    %2045 = vperm.xlu0 %2044, %v1241
    %v2046 = vpop.permute.xlu0 %2045
    %2048 = vset.pattern.permute.xlu0 8
    %2049 = vperm.xlu0 %2048, %v1242
    %v2050 = vpop.permute.xlu0 %2049
    %2052 = vset.pattern.permute.xlu0 8
    %2053 = vperm.xlu0 %2052, %v1243
    %v2054 = vpop.permute.xlu0 %2053
    %v2056 = vmul.f32 %v2036, %v2042
    %v2057 = vmul.f32 %v2037, %v2046
    %v2058 = vmul.f32 %v2038, %v2050
    %v2059 = vmul.f32 %v2039, %v2054
    %v2060 = vmul.f32 %v2056, %v1564
    %v2061 = vmul.f32 %v2057, %v1565
    %v2062 = vmul.f32 %v2058, %v1566
    %v2063 = vmul.f32 %v2059, %v1567
    %v2064 = vadd.f32 %v2032, %v2060
    %v2065 = vadd.f32 %v2033, %v2061
    %v2066 = vadd.f32 %v2034, %v2062
    %v2067 = vadd.f32 %v2035, %v2063
    %v2068 = vsub.f32 %v1215, %v1510
    %v2069 = vsub.f32 %v1221, %v1514
    %v2070 = vsub.f32 %v1227, %v1518
    %v2071 = vsub.f32 %v1233, %v1522
    %v2072 = vmul.f32 %v2068, %v2042
    %v2073 = vmul.f32 %v2069, %v2046
    %v2074 = vmul.f32 %v2070, %v2050
    %v2075 = vmul.f32 %v2071, %v2054
    %v2076 = vmul.f32 %v2072, %v1564
    %v2077 = vmul.f32 %v2073, %v1565
    %v2078 = vmul.f32 %v2074, %v1566
    %v2079 = vmul.f32 %v2075, %v1567
    %v2080 = vsub.f32 %v1574, %v1215
    %v2081 = vsub.f32 %v1578, %v1221
    %v2082 = vsub.f32 %v1582, %v1227
    %v2083 = vsub.f32 %v1586, %v1233
    %2084 = vset.pattern.permute.xlu0 9
    %2085 = vperm.xlu0 %2084, %v1240
    %v2086 = vpop.permute.xlu0 %2085
    %2088 = vset.pattern.permute.xlu0 9
    %2089 = vperm.xlu0 %2088, %v1241
    %v2090 = vpop.permute.xlu0 %2089
    %2092 = vset.pattern.permute.xlu0 9
    %2093 = vperm.xlu0 %2092, %v1242
    %v2094 = vpop.permute.xlu0 %2093
    %2096 = vset.pattern.permute.xlu0 9
    %2097 = vperm.xlu0 %2096, %v1243
    %v2098 = vpop.permute.xlu0 %2097
    %v2100 = vmul.f32 %v2080, %v2086
    %v2101 = vmul.f32 %v2081, %v2090
    %v2102 = vmul.f32 %v2082, %v2094
    %v2103 = vmul.f32 %v2083, %v2098
    %v2104 = vmul.f32 %v2100, %v1596
    %v2105 = vmul.f32 %v2101, %v1597
    %v2106 = vmul.f32 %v2102, %v1598
    %v2107 = vmul.f32 %v2103, %v1599
    %v2108 = vadd.f32 %v2076, %v2104
    %v2109 = vadd.f32 %v2077, %v2105
    %v2110 = vadd.f32 %v2078, %v2106
    %v2111 = vadd.f32 %v2079, %v2107
    %v2112 = vsub.f32 %v1215, %v1542
    %v2113 = vsub.f32 %v1221, %v1546
    %v2114 = vsub.f32 %v1227, %v1550
    %v2115 = vsub.f32 %v1233, %v1554
    %v2116 = vmul.f32 %v2112, %v2086
    %v2117 = vmul.f32 %v2113, %v2090
    %v2118 = vmul.f32 %v2114, %v2094
    %v2119 = vmul.f32 %v2115, %v2098
    %v2120 = vmul.f32 %v2116, %v1596
    %v2121 = vmul.f32 %v2117, %v1597
    %v2122 = vmul.f32 %v2118, %v1598
    %v2123 = vmul.f32 %v2119, %v1599
    %v2124 = vsub.f32 %v1606, %v1215
    %v2125 = vsub.f32 %v1610, %v1221
    %v2126 = vsub.f32 %v1614, %v1227
    %v2127 = vsub.f32 %v1618, %v1233
    %2128 = vset.pattern.permute.xlu0 10
    %2129 = vperm.xlu0 %2128, %v1240
    %v2130 = vpop.permute.xlu0 %2129
    %2132 = vset.pattern.permute.xlu0 10
    %2133 = vperm.xlu0 %2132, %v1241
    %v2134 = vpop.permute.xlu0 %2133
    %2136 = vset.pattern.permute.xlu0 10
    %2137 = vperm.xlu0 %2136, %v1242
    %v2138 = vpop.permute.xlu0 %2137
    %2140 = vset.pattern.permute.xlu0 10
    %2141 = vperm.xlu0 %2140, %v1243
    %v2142 = vpop.permute.xlu0 %2141
    %v2144 = vmul.f32 %v2124, %v2130
    %v2145 = vmul.f32 %v2125, %v2134
    %v2146 = vmul.f32 %v2126, %v2138
    %v2147 = vmul.f32 %v2127, %v2142
    %v2148 = vmul.f32 %v2144, %v1628
    %v2149 = vmul.f32 %v2145, %v1629
    %v2150 = vmul.f32 %v2146, %v1630
    %v2151 = vmul.f32 %v2147, %v1631
    %v2152 = vadd.f32 %v2120, %v2148
    %v2153 = vadd.f32 %v2121, %v2149
    %v2154 = vadd.f32 %v2122, %v2150
    %v2155 = vadd.f32 %v2123, %v2151
    %v2156 = vsub.f32 %v1215, %v1574
    %v2157 = vsub.f32 %v1221, %v1578
    %v2158 = vsub.f32 %v1227, %v1582
    %v2159 = vsub.f32 %v1233, %v1586
    %v2160 = vmul.f32 %v2156, %v2130
    %v2161 = vmul.f32 %v2157, %v2134
    %v2162 = vmul.f32 %v2158, %v2138
    %v2163 = vmul.f32 %v2159, %v2142
    %v2164 = vmul.f32 %v2160, %v1628
    %v2165 = vmul.f32 %v2161, %v1629
    %v2166 = vmul.f32 %v2162, %v1630
    %v2167 = vmul.f32 %v2163, %v1631
    %v2168 = vsub.f32 %v1638, %v1215
    %v2169 = vsub.f32 %v1642, %v1221
    %v2170 = vsub.f32 %v1646, %v1227
    %v2171 = vsub.f32 %v1650, %v1233
    %2172 = vset.pattern.permute.xlu0 11
    %2173 = vperm.xlu0 %2172, %v1240
    %v2174 = vpop.permute.xlu0 %2173
    %2176 = vset.pattern.permute.xlu0 11
    %2177 = vperm.xlu0 %2176, %v1241
    %v2178 = vpop.permute.xlu0 %2177
    %2180 = vset.pattern.permute.xlu0 11
    %2181 = vperm.xlu0 %2180, %v1242
    %v2182 = vpop.permute.xlu0 %2181
    %2184 = vset.pattern.permute.xlu0 11
    %2185 = vperm.xlu0 %2184, %v1243
    %v2186 = vpop.permute.xlu0 %2185
    %v2188 = vmul.f32 %v2168, %v2174
    %v2189 = vmul.f32 %v2169, %v2178
    %v2190 = vmul.f32 %v2170, %v2182
    %v2191 = vmul.f32 %v2171, %v2186
    %v2192 = vmul.f32 %v2188, %v1660
    %v2193 = vmul.f32 %v2189, %v1661
    %v2194 = vmul.f32 %v2190, %v1662
    %v2195 = vmul.f32 %v2191, %v1663
    %v2196 = vadd.f32 %v2164, %v2192
    %v2197 = vadd.f32 %v2165, %v2193
    %v2198 = vadd.f32 %v2166, %v2194
    %v2199 = vadd.f32 %v2167, %v2195
    %v2200 = vsub.f32 %v1215, %v1606
    %v2201 = vsub.f32 %v1221, %v1610
    %v2202 = vsub.f32 %v1227, %v1614
    %v2203 = vsub.f32 %v1233, %v1618
    %v2204 = vmul.f32 %v2200, %v2174
    %v2205 = vmul.f32 %v2201, %v2178
    %v2206 = vmul.f32 %v2202, %v2182
    %v2207 = vmul.f32 %v2203, %v2186
    %v2208 = vmul.f32 %v2204, %v1660
    %v2209 = vmul.f32 %v2205, %v1661
    %v2210 = vmul.f32 %v2206, %v1662
    %v2211 = vmul.f32 %v2207, %v1663
    %v2212 = vsub.f32 %v1670, %v1215
    %v2213 = vsub.f32 %v1674, %v1221
    %v2214 = vsub.f32 %v1678, %v1227
    %v2215 = vsub.f32 %v1682, %v1233
    %2216 = vset.pattern.permute.xlu0 12
    %2217 = vperm.xlu0 %2216, %v1240
    %v2218 = vpop.permute.xlu0 %2217
    %2220 = vset.pattern.permute.xlu0 12
    %2221 = vperm.xlu0 %2220, %v1241
    %v2222 = vpop.permute.xlu0 %2221
    %2224 = vset.pattern.permute.xlu0 12
    %2225 = vperm.xlu0 %2224, %v1242
    %v2226 = vpop.permute.xlu0 %2225
    %2228 = vset.pattern.permute.xlu0 12
    %2229 = vperm.xlu0 %2228, %v1243
    %v2230 = vpop.permute.xlu0 %2229
    %v2232 = vmul.f32 %v2212, %v2218
    %v2233 = vmul.f32 %v2213, %v2222
    %v2234 = vmul.f32 %v2214, %v2226
    %v2235 = vmul.f32 %v2215, %v2230
    %v2236 = vmul.f32 %v2232, %v1692
    %v2237 = vmul.f32 %v2233, %v1693
    %v2238 = vmul.f32 %v2234, %v1694
    %v2239 = vmul.f32 %v2235, %v1695
    %v2240 = vadd.f32 %v2208, %v2236
    %v2241 = vadd.f32 %v2209, %v2237
    %v2242 = vadd.f32 %v2210, %v2238
    %v2243 = vadd.f32 %v2211, %v2239
    %2245 = vset.pattern.permute.xlu0 0
    %2246 = vperm.xlu0 %2245, %v1244
    %v2247 = vpop.permute.xlu0 %2246
    %2250 = vset.pattern.permute.xlu0 0
    %2251 = vperm.xlu0 %2250, %v1245
    %v2252 = vpop.permute.xlu0 %2251
    %2255 = vset.pattern.permute.xlu0 0
    %2256 = vperm.xlu0 %2255, %v1246
    %v2257 = vpop.permute.xlu0 %2256
    %2260 = vset.pattern.permute.xlu0 0
    %2261 = vperm.xlu0 %2260, %v1247
    %v2262 = vpop.permute.xlu0 %2261
    %v2264 = vmul.f32 %v1696, %v2247
    %v2265 = vmul.f32 %v1697, %v2252
    %v2266 = vmul.f32 %v1698, %v2257
    %v2267 = vmul.f32 %v1699, %v2262
    %v2268 = vmul.f32 %v2264, %v1756
    %v2269 = vmul.f32 %v2265, %v1757
    %v2270 = vmul.f32 %v2266, %v1758
    %v2271 = vmul.f32 %v2267, %v1759
    %2272 = vset.pattern.permute.xlu0 1
    %2273 = vperm.xlu0 %2272, %v1244
    %v2274 = vpop.permute.xlu0 %2273
    %2276 = vset.pattern.permute.xlu0 1
    %2277 = vperm.xlu0 %2276, %v1245
    %v2278 = vpop.permute.xlu0 %2277
    %2280 = vset.pattern.permute.xlu0 1
    %2281 = vperm.xlu0 %2280, %v1246
    %v2282 = vpop.permute.xlu0 %2281
    %2284 = vset.pattern.permute.xlu0 1
    %2285 = vperm.xlu0 %2284, %v1247
    %v2286 = vpop.permute.xlu0 %2285
    %v2288 = vmul.f32 %v1772, %v2274
    %v2289 = vmul.f32 %v1773, %v2278
    %v2290 = vmul.f32 %v1774, %v2282
    %v2291 = vmul.f32 %v1775, %v2286
    %v2292 = vmul.f32 %v2288, %v1800
    %v2293 = vmul.f32 %v2289, %v1801
    %v2294 = vmul.f32 %v2290, %v1802
    %v2295 = vmul.f32 %v2291, %v1803
    %v2296 = vadd.f32 %v2268, %v2292
    %v2297 = vadd.f32 %v2269, %v2293
    %v2298 = vadd.f32 %v2270, %v2294
    %v2299 = vadd.f32 %v2271, %v2295
    %v2300 = vmul.f32 %v1760, %v2274
    %v2301 = vmul.f32 %v1761, %v2278
    %v2302 = vmul.f32 %v1762, %v2282
    %v2303 = vmul.f32 %v1763, %v2286
    %v2304 = vmul.f32 %v2300, %v1800
    %v2305 = vmul.f32 %v2301, %v1801
    %v2306 = vmul.f32 %v2302, %v1802
    %v2307 = vmul.f32 %v2303, %v1803
    %2308 = vset.pattern.permute.xlu0 2
    %2309 = vperm.xlu0 %2308, %v1244
    %v2310 = vpop.permute.xlu0 %2309
    %2312 = vset.pattern.permute.xlu0 2
    %2313 = vperm.xlu0 %2312, %v1245
    %v2314 = vpop.permute.xlu0 %2313
    %2316 = vset.pattern.permute.xlu0 2
    %2317 = vperm.xlu0 %2316, %v1246
    %v2318 = vpop.permute.xlu0 %2317
    %2320 = vset.pattern.permute.xlu0 2
    %2321 = vperm.xlu0 %2320, %v1247
    %v2322 = vpop.permute.xlu0 %2321
    %v2324 = vmul.f32 %v1816, %v2310
    %v2325 = vmul.f32 %v1817, %v2314
    %v2326 = vmul.f32 %v1818, %v2318
    %v2327 = vmul.f32 %v1819, %v2322
    %v2328 = vmul.f32 %v2324, %v1844
    %v2329 = vmul.f32 %v2325, %v1845
    %v2330 = vmul.f32 %v2326, %v1846
    %v2331 = vmul.f32 %v2327, %v1847
    %v2332 = vadd.f32 %v2304, %v2328
    %v2333 = vadd.f32 %v2305, %v2329
    %v2334 = vadd.f32 %v2306, %v2330
    %v2335 = vadd.f32 %v2307, %v2331
    %v2336 = vmul.f32 %v1804, %v2310
    %v2337 = vmul.f32 %v1805, %v2314
    %v2338 = vmul.f32 %v1806, %v2318
    %v2339 = vmul.f32 %v1807, %v2322
    %v2340 = vmul.f32 %v2336, %v1844
    %v2341 = vmul.f32 %v2337, %v1845
    %v2342 = vmul.f32 %v2338, %v1846
    %v2343 = vmul.f32 %v2339, %v1847
    %2344 = vset.pattern.permute.xlu0 3
    %2345 = vperm.xlu0 %2344, %v1244
    %v2346 = vpop.permute.xlu0 %2345
    %2348 = vset.pattern.permute.xlu0 3
    %2349 = vperm.xlu0 %2348, %v1245
    %v2350 = vpop.permute.xlu0 %2349
    %2352 = vset.pattern.permute.xlu0 3
    %2353 = vperm.xlu0 %2352, %v1246
    %v2354 = vpop.permute.xlu0 %2353
    %2356 = vset.pattern.permute.xlu0 3
    %2357 = vperm.xlu0 %2356, %v1247
    %v2358 = vpop.permute.xlu0 %2357
    %v2360 = vmul.f32 %v1860, %v2346
    %v2361 = vmul.f32 %v1861, %v2350
    %v2362 = vmul.f32 %v1862, %v2354
    %v2363 = vmul.f32 %v1863, %v2358
    %v2364 = vmul.f32 %v2360, %v1888
    %v2365 = vmul.f32 %v2361, %v1889
    %v2366 = vmul.f32 %v2362, %v1890
    %v2367 = vmul.f32 %v2363, %v1891
    %v2368 = vadd.f32 %v2340, %v2364
    %v2369 = vadd.f32 %v2341, %v2365
    %v2370 = vadd.f32 %v2342, %v2366
    %v2371 = vadd.f32 %v2343, %v2367
    %v2372 = vmul.f32 %v1848, %v2346
    %v2373 = vmul.f32 %v1849, %v2350
    %v2374 = vmul.f32 %v1850, %v2354
    %v2375 = vmul.f32 %v1851, %v2358
    %v2376 = vmul.f32 %v2372, %v1888
    %v2377 = vmul.f32 %v2373, %v1889
    %v2378 = vmul.f32 %v2374, %v1890
    %v2379 = vmul.f32 %v2375, %v1891
    %2380 = vset.pattern.permute.xlu0 4
    %2381 = vperm.xlu0 %2380, %v1244
    %v2382 = vpop.permute.xlu0 %2381
    %2384 = vset.pattern.permute.xlu0 4
    %2385 = vperm.xlu0 %2384, %v1245
    %v2386 = vpop.permute.xlu0 %2385
    %2388 = vset.pattern.permute.xlu0 4
    %2389 = vperm.xlu0 %2388, %v1246
    %v2390 = vpop.permute.xlu0 %2389
    %2392 = vset.pattern.permute.xlu0 4
    %2393 = vperm.xlu0 %2392, %v1247
    %v2394 = vpop.permute.xlu0 %2393
    %v2396 = vmul.f32 %v1904, %v2382
    %v2397 = vmul.f32 %v1905, %v2386
    %v2398 = vmul.f32 %v1906, %v2390
    %v2399 = vmul.f32 %v1907, %v2394
    %v2400 = vmul.f32 %v2396, %v1932
    %v2401 = vmul.f32 %v2397, %v1933
    %v2402 = vmul.f32 %v2398, %v1934
    %v2403 = vmul.f32 %v2399, %v1935
    %v2404 = vadd.f32 %v2376, %v2400
    %v2405 = vadd.f32 %v2377, %v2401
    %v2406 = vadd.f32 %v2378, %v2402
    %v2407 = vadd.f32 %v2379, %v2403
    %v2408 = vmul.f32 %v1892, %v2382
    %v2409 = vmul.f32 %v1893, %v2386
    %v2410 = vmul.f32 %v1894, %v2390
    %v2411 = vmul.f32 %v1895, %v2394
    %v2412 = vmul.f32 %v2408, %v1932
    %v2413 = vmul.f32 %v2409, %v1933
    %v2414 = vmul.f32 %v2410, %v1934
    %v2415 = vmul.f32 %v2411, %v1935
    %2416 = vset.pattern.permute.xlu0 5
    %2417 = vperm.xlu0 %2416, %v1244
    %v2418 = vpop.permute.xlu0 %2417
    %2420 = vset.pattern.permute.xlu0 5
    %2421 = vperm.xlu0 %2420, %v1245
    %v2422 = vpop.permute.xlu0 %2421
    %2424 = vset.pattern.permute.xlu0 5
    %2425 = vperm.xlu0 %2424, %v1246
    %v2426 = vpop.permute.xlu0 %2425
    %2428 = vset.pattern.permute.xlu0 5
    %2429 = vperm.xlu0 %2428, %v1247
    %v2430 = vpop.permute.xlu0 %2429
    %v2432 = vmul.f32 %v1948, %v2418
    %v2433 = vmul.f32 %v1949, %v2422
    %v2434 = vmul.f32 %v1950, %v2426
    %v2435 = vmul.f32 %v1951, %v2430
    %v2436 = vmul.f32 %v2432, %v1976
    %v2437 = vmul.f32 %v2433, %v1977
    %v2438 = vmul.f32 %v2434, %v1978
    %v2439 = vmul.f32 %v2435, %v1979
    %v2440 = vadd.f32 %v2412, %v2436
    %v2441 = vadd.f32 %v2413, %v2437
    %v2442 = vadd.f32 %v2414, %v2438
    %v2443 = vadd.f32 %v2415, %v2439
    %v2444 = vmul.f32 %v1936, %v2418
    %v2445 = vmul.f32 %v1937, %v2422
    %v2446 = vmul.f32 %v1938, %v2426
    %v2447 = vmul.f32 %v1939, %v2430
    %v2448 = vmul.f32 %v2444, %v1976
    %v2449 = vmul.f32 %v2445, %v1977
    %v2450 = vmul.f32 %v2446, %v1978
    %v2451 = vmul.f32 %v2447, %v1979
    %2452 = vset.pattern.permute.xlu0 6
    %2453 = vperm.xlu0 %2452, %v1244
    %v2454 = vpop.permute.xlu0 %2453
    %2456 = vset.pattern.permute.xlu0 6
    %2457 = vperm.xlu0 %2456, %v1245
    %v2458 = vpop.permute.xlu0 %2457
    %2460 = vset.pattern.permute.xlu0 6
    %2461 = vperm.xlu0 %2460, %v1246
    %v2462 = vpop.permute.xlu0 %2461
    %2464 = vset.pattern.permute.xlu0 6
    %2465 = vperm.xlu0 %2464, %v1247
    %v2466 = vpop.permute.xlu0 %2465
    %v2468 = vmul.f32 %v1992, %v2454
    %v2469 = vmul.f32 %v1993, %v2458
    %v2470 = vmul.f32 %v1994, %v2462
    %v2471 = vmul.f32 %v1995, %v2466
    %v2472 = vmul.f32 %v2468, %v2020
    %v2473 = vmul.f32 %v2469, %v2021
    %v2474 = vmul.f32 %v2470, %v2022
    %v2475 = vmul.f32 %v2471, %v2023
    %v2476 = vadd.f32 %v2448, %v2472
    %v2477 = vadd.f32 %v2449, %v2473
    %v2478 = vadd.f32 %v2450, %v2474
    %v2479 = vadd.f32 %v2451, %v2475
    %v2480 = vmul.f32 %v1980, %v2454
    %v2481 = vmul.f32 %v1981, %v2458
    %v2482 = vmul.f32 %v1982, %v2462
    %v2483 = vmul.f32 %v1983, %v2466
    %v2484 = vmul.f32 %v2480, %v2020
    %v2485 = vmul.f32 %v2481, %v2021
    %v2486 = vmul.f32 %v2482, %v2022
    %v2487 = vmul.f32 %v2483, %v2023
    %2488 = vset.pattern.permute.xlu0 7
    %2489 = vperm.xlu0 %2488, %v1244
    %v2490 = vpop.permute.xlu0 %2489
    %2492 = vset.pattern.permute.xlu0 7
    %2493 = vperm.xlu0 %2492, %v1245
    %v2494 = vpop.permute.xlu0 %2493
    %2496 = vset.pattern.permute.xlu0 7
    %2497 = vperm.xlu0 %2496, %v1246
    %v2498 = vpop.permute.xlu0 %2497
    %2500 = vset.pattern.permute.xlu0 7
    %2501 = vperm.xlu0 %2500, %v1247
    %v2502 = vpop.permute.xlu0 %2501
    %v2504 = vmul.f32 %v2036, %v2490
    %v2505 = vmul.f32 %v2037, %v2494
    %v2506 = vmul.f32 %v2038, %v2498
    %v2507 = vmul.f32 %v2039, %v2502
    %v2508 = vmul.f32 %v2504, %v2064
    %v2509 = vmul.f32 %v2505, %v2065
    %v2510 = vmul.f32 %v2506, %v2066
    %v2511 = vmul.f32 %v2507, %v2067
    %v2512 = vadd.f32 %v2484, %v2508
    %v2513 = vadd.f32 %v2485, %v2509
    %v2514 = vadd.f32 %v2486, %v2510
    %v2515 = vadd.f32 %v2487, %v2511
    %v2516 = vmul.f32 %v2024, %v2490
    %v2517 = vmul.f32 %v2025, %v2494
    %v2518 = vmul.f32 %v2026, %v2498
    %v2519 = vmul.f32 %v2027, %v2502
    %v2520 = vmul.f32 %v2516, %v2064
    %v2521 = vmul.f32 %v2517, %v2065
    %v2522 = vmul.f32 %v2518, %v2066
    %v2523 = vmul.f32 %v2519, %v2067
    %2524 = vset.pattern.permute.xlu0 8
    %2525 = vperm.xlu0 %2524, %v1244
    %v2526 = vpop.permute.xlu0 %2525
    %2528 = vset.pattern.permute.xlu0 8
    %2529 = vperm.xlu0 %2528, %v1245
    %v2530 = vpop.permute.xlu0 %2529
    %2532 = vset.pattern.permute.xlu0 8
    %2533 = vperm.xlu0 %2532, %v1246
    %v2534 = vpop.permute.xlu0 %2533
    %2536 = vset.pattern.permute.xlu0 8
    %2537 = vperm.xlu0 %2536, %v1247
    %v2538 = vpop.permute.xlu0 %2537
    %v2540 = vmul.f32 %v2080, %v2526
    %v2541 = vmul.f32 %v2081, %v2530
    %v2542 = vmul.f32 %v2082, %v2534
    %v2543 = vmul.f32 %v2083, %v2538
    %v2544 = vmul.f32 %v2540, %v2108
    %v2545 = vmul.f32 %v2541, %v2109
    %v2546 = vmul.f32 %v2542, %v2110
    %v2547 = vmul.f32 %v2543, %v2111
    %v2548 = vadd.f32 %v2520, %v2544
    %v2549 = vadd.f32 %v2521, %v2545
    %v2550 = vadd.f32 %v2522, %v2546
    %v2551 = vadd.f32 %v2523, %v2547
    %v2552 = vmul.f32 %v2068, %v2526
    %v2553 = vmul.f32 %v2069, %v2530
    %v2554 = vmul.f32 %v2070, %v2534
    %v2555 = vmul.f32 %v2071, %v2538
    %v2556 = vmul.f32 %v2552, %v2108
    %v2557 = vmul.f32 %v2553, %v2109
    %v2558 = vmul.f32 %v2554, %v2110
    %v2559 = vmul.f32 %v2555, %v2111
    %2560 = vset.pattern.permute.xlu0 9
    %2561 = vperm.xlu0 %2560, %v1244
    %v2562 = vpop.permute.xlu0 %2561
    %2564 = vset.pattern.permute.xlu0 9
    %2565 = vperm.xlu0 %2564, %v1245
    %v2566 = vpop.permute.xlu0 %2565
    %2568 = vset.pattern.permute.xlu0 9
    %2569 = vperm.xlu0 %2568, %v1246
    %v2570 = vpop.permute.xlu0 %2569
    %2572 = vset.pattern.permute.xlu0 9
    %2573 = vperm.xlu0 %2572, %v1247
    %v2574 = vpop.permute.xlu0 %2573
    %v2576 = vmul.f32 %v2124, %v2562
    %v2577 = vmul.f32 %v2125, %v2566
    %v2578 = vmul.f32 %v2126, %v2570
    %v2579 = vmul.f32 %v2127, %v2574
    %v2580 = vmul.f32 %v2576, %v2152
    %v2581 = vmul.f32 %v2577, %v2153
    %v2582 = vmul.f32 %v2578, %v2154
    %v2583 = vmul.f32 %v2579, %v2155
    %v2584 = vadd.f32 %v2556, %v2580
    %v2585 = vadd.f32 %v2557, %v2581
    %v2586 = vadd.f32 %v2558, %v2582
    %v2587 = vadd.f32 %v2559, %v2583
    %v2588 = vmul.f32 %v2112, %v2562
    %v2589 = vmul.f32 %v2113, %v2566
    %v2590 = vmul.f32 %v2114, %v2570
    %v2591 = vmul.f32 %v2115, %v2574
    %v2592 = vmul.f32 %v2588, %v2152
    %v2593 = vmul.f32 %v2589, %v2153
    %v2594 = vmul.f32 %v2590, %v2154
    %v2595 = vmul.f32 %v2591, %v2155
    %2596 = vset.pattern.permute.xlu0 10
    %2597 = vperm.xlu0 %2596, %v1244
    %v2598 = vpop.permute.xlu0 %2597
    %2600 = vset.pattern.permute.xlu0 10
    %2601 = vperm.xlu0 %2600, %v1245
    %v2602 = vpop.permute.xlu0 %2601
    %2604 = vset.pattern.permute.xlu0 10
    %2605 = vperm.xlu0 %2604, %v1246
    %v2606 = vpop.permute.xlu0 %2605
    %2608 = vset.pattern.permute.xlu0 10
    %2609 = vperm.xlu0 %2608, %v1247
    %v2610 = vpop.permute.xlu0 %2609
    %v2612 = vmul.f32 %v2168, %v2598
    %v2613 = vmul.f32 %v2169, %v2602
    %v2614 = vmul.f32 %v2170, %v2606
    %v2615 = vmul.f32 %v2171, %v2610
    %v2616 = vmul.f32 %v2612, %v2196
    %v2617 = vmul.f32 %v2613, %v2197
    %v2618 = vmul.f32 %v2614, %v2198
    %v2619 = vmul.f32 %v2615, %v2199
    %v2620 = vadd.f32 %v2592, %v2616
    %v2621 = vadd.f32 %v2593, %v2617
    %v2622 = vadd.f32 %v2594, %v2618
    %v2623 = vadd.f32 %v2595, %v2619
    %v2624 = vmul.f32 %v2156, %v2598
    %v2625 = vmul.f32 %v2157, %v2602
    %v2626 = vmul.f32 %v2158, %v2606
    %v2627 = vmul.f32 %v2159, %v2610
    %v2628 = vmul.f32 %v2624, %v2196
    %v2629 = vmul.f32 %v2625, %v2197
    %v2630 = vmul.f32 %v2626, %v2198
    %v2631 = vmul.f32 %v2627, %v2199
    %2632 = vset.pattern.permute.xlu0 11
    %2633 = vperm.xlu0 %2632, %v1244
    %v2634 = vpop.permute.xlu0 %2633
    %2636 = vset.pattern.permute.xlu0 11
    %2637 = vperm.xlu0 %2636, %v1245
    %v2638 = vpop.permute.xlu0 %2637
    %2640 = vset.pattern.permute.xlu0 11
    %2641 = vperm.xlu0 %2640, %v1246
    %v2642 = vpop.permute.xlu0 %2641
    %2644 = vset.pattern.permute.xlu0 11
    %2645 = vperm.xlu0 %2644, %v1247
    %v2646 = vpop.permute.xlu0 %2645
    %v2648 = vmul.f32 %v2212, %v2634
    %v2649 = vmul.f32 %v2213, %v2638
    %v2650 = vmul.f32 %v2214, %v2642
    %v2651 = vmul.f32 %v2215, %v2646
    %v2652 = vmul.f32 %v2648, %v2240
    %v2653 = vmul.f32 %v2649, %v2241
    %v2654 = vmul.f32 %v2650, %v2242
    %v2655 = vmul.f32 %v2651, %v2243
    %v2656 = vadd.f32 %v2628, %v2652
    %v2657 = vadd.f32 %v2629, %v2653
    %v2658 = vadd.f32 %v2630, %v2654
    %v2659 = vadd.f32 %v2631, %v2655
    %2661 = vset.pattern.permute.xlu0 0
    %2662 = vperm.xlu0 %2661, %v1248
    %v2663 = vpop.permute.xlu0 %2662
    %2666 = vset.pattern.permute.xlu0 0
    %2667 = vperm.xlu0 %2666, %v1249
    %v2668 = vpop.permute.xlu0 %2667
    %2671 = vset.pattern.permute.xlu0 0
    %2672 = vperm.xlu0 %2671, %v1250
    %v2673 = vpop.permute.xlu0 %2672
    %2676 = vset.pattern.permute.xlu0 0
    %2677 = vperm.xlu0 %2676, %v1251
    %v2678 = vpop.permute.xlu0 %2677
    %v2680 = vmul.f32 %v1696, %v2663
    %v2681 = vmul.f32 %v1697, %v2668
    %v2682 = vmul.f32 %v1698, %v2673
    %v2683 = vmul.f32 %v1699, %v2678
    %v2684 = vmul.f32 %v2680, %v2296
    %v2685 = vmul.f32 %v2681, %v2297
    %v2686 = vmul.f32 %v2682, %v2298
    %v2687 = vmul.f32 %v2683, %v2299
    %2688 = vset.pattern.permute.xlu0 1
    %2689 = vperm.xlu0 %2688, %v1248
    %v2690 = vpop.permute.xlu0 %2689
    %2692 = vset.pattern.permute.xlu0 1
    %2693 = vperm.xlu0 %2692, %v1249
    %v2694 = vpop.permute.xlu0 %2693
    %2696 = vset.pattern.permute.xlu0 1
    %2697 = vperm.xlu0 %2696, %v1250
    %v2698 = vpop.permute.xlu0 %2697
    %2700 = vset.pattern.permute.xlu0 1
    %2701 = vperm.xlu0 %2700, %v1251
    %v2702 = vpop.permute.xlu0 %2701
    %v2704 = vmul.f32 %v1816, %v2690
    %v2705 = vmul.f32 %v1817, %v2694
    %v2706 = vmul.f32 %v1818, %v2698
    %v2707 = vmul.f32 %v1819, %v2702
    %v2708 = vmul.f32 %v2704, %v2332
    %v2709 = vmul.f32 %v2705, %v2333
    %v2710 = vmul.f32 %v2706, %v2334
    %v2711 = vmul.f32 %v2707, %v2335
    %v2712 = vadd.f32 %v2684, %v2708
    %v2713 = vadd.f32 %v2685, %v2709
    %v2714 = vadd.f32 %v2686, %v2710
    %v2715 = vadd.f32 %v2687, %v2711
    %v2716 = vmul.f32 %v1760, %v2690
    %v2717 = vmul.f32 %v1761, %v2694
    %v2718 = vmul.f32 %v1762, %v2698
    %v2719 = vmul.f32 %v1763, %v2702
    %v2720 = vmul.f32 %v2716, %v2332
    %v2721 = vmul.f32 %v2717, %v2333
    %v2722 = vmul.f32 %v2718, %v2334
    %v2723 = vmul.f32 %v2719, %v2335
    %2724 = vset.pattern.permute.xlu0 2
    %2725 = vperm.xlu0 %2724, %v1248
    %v2726 = vpop.permute.xlu0 %2725
    %2728 = vset.pattern.permute.xlu0 2
    %2729 = vperm.xlu0 %2728, %v1249
    %v2730 = vpop.permute.xlu0 %2729
    %2732 = vset.pattern.permute.xlu0 2
    %2733 = vperm.xlu0 %2732, %v1250
    %v2734 = vpop.permute.xlu0 %2733
    %2736 = vset.pattern.permute.xlu0 2
    %2737 = vperm.xlu0 %2736, %v1251
    %v2738 = vpop.permute.xlu0 %2737
    %v2740 = vmul.f32 %v1860, %v2726
    %v2741 = vmul.f32 %v1861, %v2730
    %v2742 = vmul.f32 %v1862, %v2734
    %v2743 = vmul.f32 %v1863, %v2738
    %v2744 = vmul.f32 %v2740, %v2368
    %v2745 = vmul.f32 %v2741, %v2369
    %v2746 = vmul.f32 %v2742, %v2370
    %v2747 = vmul.f32 %v2743, %v2371
    %v2748 = vadd.f32 %v2720, %v2744
    %v2749 = vadd.f32 %v2721, %v2745
    %v2750 = vadd.f32 %v2722, %v2746
    %v2751 = vadd.f32 %v2723, %v2747
    %v2752 = vmul.f32 %v1804, %v2726
    %v2753 = vmul.f32 %v1805, %v2730
    %v2754 = vmul.f32 %v1806, %v2734
    %v2755 = vmul.f32 %v1807, %v2738
    %v2756 = vmul.f32 %v2752, %v2368
    %v2757 = vmul.f32 %v2753, %v2369
    %v2758 = vmul.f32 %v2754, %v2370
    %v2759 = vmul.f32 %v2755, %v2371
    %2760 = vset.pattern.permute.xlu0 3
    %2761 = vperm.xlu0 %2760, %v1248
    %v2762 = vpop.permute.xlu0 %2761
    %2764 = vset.pattern.permute.xlu0 3
    %2765 = vperm.xlu0 %2764, %v1249
    %v2766 = vpop.permute.xlu0 %2765
    %2768 = vset.pattern.permute.xlu0 3
    %2769 = vperm.xlu0 %2768, %v1250
    %v2770 = vpop.permute.xlu0 %2769
    %2772 = vset.pattern.permute.xlu0 3
    %2773 = vperm.xlu0 %2772, %v1251
    %v2774 = vpop.permute.xlu0 %2773
    %v2776 = vmul.f32 %v1904, %v2762
    %v2777 = vmul.f32 %v1905, %v2766
    %v2778 = vmul.f32 %v1906, %v2770
    %v2779 = vmul.f32 %v1907, %v2774
    %v2780 = vmul.f32 %v2776, %v2404
    %v2781 = vmul.f32 %v2777, %v2405
    %v2782 = vmul.f32 %v2778, %v2406
    %v2783 = vmul.f32 %v2779, %v2407
    %v2784 = vadd.f32 %v2756, %v2780
    %v2785 = vadd.f32 %v2757, %v2781
    %v2786 = vadd.f32 %v2758, %v2782
    %v2787 = vadd.f32 %v2759, %v2783
    %v2788 = vmul.f32 %v1848, %v2762
    %v2789 = vmul.f32 %v1849, %v2766
    %v2790 = vmul.f32 %v1850, %v2770
    %v2791 = vmul.f32 %v1851, %v2774
    %v2792 = vmul.f32 %v2788, %v2404
    %v2793 = vmul.f32 %v2789, %v2405
    %v2794 = vmul.f32 %v2790, %v2406
    %v2795 = vmul.f32 %v2791, %v2407
    %2796 = vset.pattern.permute.xlu0 4
    %2797 = vperm.xlu0 %2796, %v1248
    %v2798 = vpop.permute.xlu0 %2797
    %2800 = vset.pattern.permute.xlu0 4
    %2801 = vperm.xlu0 %2800, %v1249
    %v2802 = vpop.permute.xlu0 %2801
    %2804 = vset.pattern.permute.xlu0 4
    %2805 = vperm.xlu0 %2804, %v1250
    %v2806 = vpop.permute.xlu0 %2805
    %2808 = vset.pattern.permute.xlu0 4
    %2809 = vperm.xlu0 %2808, %v1251
    %v2810 = vpop.permute.xlu0 %2809
    %v2812 = vmul.f32 %v1948, %v2798
    %v2813 = vmul.f32 %v1949, %v2802
    %v2814 = vmul.f32 %v1950, %v2806
    %v2815 = vmul.f32 %v1951, %v2810
    %v2816 = vmul.f32 %v2812, %v2440
    %v2817 = vmul.f32 %v2813, %v2441
    %v2818 = vmul.f32 %v2814, %v2442
    %v2819 = vmul.f32 %v2815, %v2443
    %v2820 = vadd.f32 %v2792, %v2816
    %v2821 = vadd.f32 %v2793, %v2817
    %v2822 = vadd.f32 %v2794, %v2818
    %v2823 = vadd.f32 %v2795, %v2819
    %v2824 = vmul.f32 %v1892, %v2798
    %v2825 = vmul.f32 %v1893, %v2802
    %v2826 = vmul.f32 %v1894, %v2806
    %v2827 = vmul.f32 %v1895, %v2810
    %v2828 = vmul.f32 %v2824, %v2440
    %v2829 = vmul.f32 %v2825, %v2441
    %v2830 = vmul.f32 %v2826, %v2442
    %v2831 = vmul.f32 %v2827, %v2443
    %2832 = vset.pattern.permute.xlu0 5
    %2833 = vperm.xlu0 %2832, %v1248
    %v2834 = vpop.permute.xlu0 %2833
    %2836 = vset.pattern.permute.xlu0 5
    %2837 = vperm.xlu0 %2836, %v1249
    %v2838 = vpop.permute.xlu0 %2837
    %2840 = vset.pattern.permute.xlu0 5
    %2841 = vperm.xlu0 %2840, %v1250
    %v2842 = vpop.permute.xlu0 %2841
    %2844 = vset.pattern.permute.xlu0 5
    %2845 = vperm.xlu0 %2844, %v1251
    %v2846 = vpop.permute.xlu0 %2845
    %v2848 = vmul.f32 %v1992, %v2834
    %v2849 = vmul.f32 %v1993, %v2838
    %v2850 = vmul.f32 %v1994, %v2842
    %v2851 = vmul.f32 %v1995, %v2846
    %v2852 = vmul.f32 %v2848, %v2476
    %v2853 = vmul.f32 %v2849, %v2477
    %v2854 = vmul.f32 %v2850, %v2478
    %v2855 = vmul.f32 %v2851, %v2479
    %v2856 = vadd.f32 %v2828, %v2852
    %v2857 = vadd.f32 %v2829, %v2853
    %v2858 = vadd.f32 %v2830, %v2854
    %v2859 = vadd.f32 %v2831, %v2855
    %v2860 = vmul.f32 %v1936, %v2834
    %v2861 = vmul.f32 %v1937, %v2838
    %v2862 = vmul.f32 %v1938, %v2842
    %v2863 = vmul.f32 %v1939, %v2846
    %v2864 = vmul.f32 %v2860, %v2476
    %v2865 = vmul.f32 %v2861, %v2477
    %v2866 = vmul.f32 %v2862, %v2478
    %v2867 = vmul.f32 %v2863, %v2479
    %2868 = vset.pattern.permute.xlu0 6
    %2869 = vperm.xlu0 %2868, %v1248
    %v2870 = vpop.permute.xlu0 %2869
    %2872 = vset.pattern.permute.xlu0 6
    %2873 = vperm.xlu0 %2872, %v1249
    %v2874 = vpop.permute.xlu0 %2873
    %2876 = vset.pattern.permute.xlu0 6
    %2877 = vperm.xlu0 %2876, %v1250
    %v2878 = vpop.permute.xlu0 %2877
    %2880 = vset.pattern.permute.xlu0 6
    %2881 = vperm.xlu0 %2880, %v1251
    %v2882 = vpop.permute.xlu0 %2881
    %v2884 = vmul.f32 %v2036, %v2870
    %v2885 = vmul.f32 %v2037, %v2874
    %v2886 = vmul.f32 %v2038, %v2878
    %v2887 = vmul.f32 %v2039, %v2882
    %v2888 = vmul.f32 %v2884, %v2512
    %v2889 = vmul.f32 %v2885, %v2513
    %v2890 = vmul.f32 %v2886, %v2514
    %v2891 = vmul.f32 %v2887, %v2515
    %v2892 = vadd.f32 %v2864, %v2888
    %v2893 = vadd.f32 %v2865, %v2889
    %v2894 = vadd.f32 %v2866, %v2890
    %v2895 = vadd.f32 %v2867, %v2891
    %v2896 = vmul.f32 %v1980, %v2870
    %v2897 = vmul.f32 %v1981, %v2874
    %v2898 = vmul.f32 %v1982, %v2878
    %v2899 = vmul.f32 %v1983, %v2882
    %v2900 = vmul.f32 %v2896, %v2512
    %v2901 = vmul.f32 %v2897, %v2513
    %v2902 = vmul.f32 %v2898, %v2514
    %v2903 = vmul.f32 %v2899, %v2515
    %2904 = vset.pattern.permute.xlu0 7
    %2905 = vperm.xlu0 %2904, %v1248
    %v2906 = vpop.permute.xlu0 %2905
    %2908 = vset.pattern.permute.xlu0 7
    %2909 = vperm.xlu0 %2908, %v1249
    %v2910 = vpop.permute.xlu0 %2909
    %2912 = vset.pattern.permute.xlu0 7
    %2913 = vperm.xlu0 %2912, %v1250
    %v2914 = vpop.permute.xlu0 %2913
    %2916 = vset.pattern.permute.xlu0 7
    %2917 = vperm.xlu0 %2916, %v1251
    %v2918 = vpop.permute.xlu0 %2917
    %v2920 = vmul.f32 %v2080, %v2906
    %v2921 = vmul.f32 %v2081, %v2910
    %v2922 = vmul.f32 %v2082, %v2914
    %v2923 = vmul.f32 %v2083, %v2918
    %v2924 = vmul.f32 %v2920, %v2548
    %v2925 = vmul.f32 %v2921, %v2549
    %v2926 = vmul.f32 %v2922, %v2550
    %v2927 = vmul.f32 %v2923, %v2551
    %v2928 = vadd.f32 %v2900, %v2924
    %v2929 = vadd.f32 %v2901, %v2925
    %v2930 = vadd.f32 %v2902, %v2926
    %v2931 = vadd.f32 %v2903, %v2927
    %v2932 = vmul.f32 %v2024, %v2906
    %v2933 = vmul.f32 %v2025, %v2910
    %v2934 = vmul.f32 %v2026, %v2914
    %v2935 = vmul.f32 %v2027, %v2918
    %v2936 = vmul.f32 %v2932, %v2548
    %v2937 = vmul.f32 %v2933, %v2549
    %v2938 = vmul.f32 %v2934, %v2550
    %v2939 = vmul.f32 %v2935, %v2551
    %2940 = vset.pattern.permute.xlu0 8
    %2941 = vperm.xlu0 %2940, %v1248
    %v2942 = vpop.permute.xlu0 %2941
    %2944 = vset.pattern.permute.xlu0 8
    %2945 = vperm.xlu0 %2944, %v1249
    %v2946 = vpop.permute.xlu0 %2945
    %2948 = vset.pattern.permute.xlu0 8
    %2949 = vperm.xlu0 %2948, %v1250
    %v2950 = vpop.permute.xlu0 %2949
    %2952 = vset.pattern.permute.xlu0 8
    %2953 = vperm.xlu0 %2952, %v1251
    %v2954 = vpop.permute.xlu0 %2953
    %v2956 = vmul.f32 %v2124, %v2942
    %v2957 = vmul.f32 %v2125, %v2946
    %v2958 = vmul.f32 %v2126, %v2950
    %v2959 = vmul.f32 %v2127, %v2954
    %v2960 = vmul.f32 %v2956, %v2584
    %v2961 = vmul.f32 %v2957, %v2585
    %v2962 = vmul.f32 %v2958, %v2586
    %v2963 = vmul.f32 %v2959, %v2587
    %v2964 = vadd.f32 %v2936, %v2960
    %v2965 = vadd.f32 %v2937, %v2961
    %v2966 = vadd.f32 %v2938, %v2962
    %v2967 = vadd.f32 %v2939, %v2963
    %v2968 = vmul.f32 %v2068, %v2942
    %v2969 = vmul.f32 %v2069, %v2946
    %v2970 = vmul.f32 %v2070, %v2950
    %v2971 = vmul.f32 %v2071, %v2954
    %v2972 = vmul.f32 %v2968, %v2584
    %v2973 = vmul.f32 %v2969, %v2585
    %v2974 = vmul.f32 %v2970, %v2586
    %v2975 = vmul.f32 %v2971, %v2587
    %2976 = vset.pattern.permute.xlu0 9
    %2977 = vperm.xlu0 %2976, %v1248
    %v2978 = vpop.permute.xlu0 %2977
    %2980 = vset.pattern.permute.xlu0 9
    %2981 = vperm.xlu0 %2980, %v1249
    %v2982 = vpop.permute.xlu0 %2981
    %2984 = vset.pattern.permute.xlu0 9
    %2985 = vperm.xlu0 %2984, %v1250
    %v2986 = vpop.permute.xlu0 %2985
    %2988 = vset.pattern.permute.xlu0 9
    %2989 = vperm.xlu0 %2988, %v1251
    %v2990 = vpop.permute.xlu0 %2989
    %v2992 = vmul.f32 %v2168, %v2978
    %v2993 = vmul.f32 %v2169, %v2982
    %v2994 = vmul.f32 %v2170, %v2986
    %v2995 = vmul.f32 %v2171, %v2990
    %v2996 = vmul.f32 %v2992, %v2620
    %v2997 = vmul.f32 %v2993, %v2621
    %v2998 = vmul.f32 %v2994, %v2622
    %v2999 = vmul.f32 %v2995, %v2623
    %v3000 = vadd.f32 %v2972, %v2996
    %v3001 = vadd.f32 %v2973, %v2997
    %v3002 = vadd.f32 %v2974, %v2998
    %v3003 = vadd.f32 %v2975, %v2999
    %v3004 = vmul.f32 %v2112, %v2978
    %v3005 = vmul.f32 %v2113, %v2982
    %v3006 = vmul.f32 %v2114, %v2986
    %v3007 = vmul.f32 %v2115, %v2990
    %v3008 = vmul.f32 %v3004, %v2620
    %v3009 = vmul.f32 %v3005, %v2621
    %v3010 = vmul.f32 %v3006, %v2622
    %v3011 = vmul.f32 %v3007, %v2623
    %3012 = vset.pattern.permute.xlu0 10
    %3013 = vperm.xlu0 %3012, %v1248
    %v3014 = vpop.permute.xlu0 %3013
    %3016 = vset.pattern.permute.xlu0 10
    %3017 = vperm.xlu0 %3016, %v1249
    %v3018 = vpop.permute.xlu0 %3017
    %3020 = vset.pattern.permute.xlu0 10
    %3021 = vperm.xlu0 %3020, %v1250
    %v3022 = vpop.permute.xlu0 %3021
    %3024 = vset.pattern.permute.xlu0 10
    %3025 = vperm.xlu0 %3024, %v1251
    %v3026 = vpop.permute.xlu0 %3025
    %v3028 = vmul.f32 %v2212, %v3014
    %v3029 = vmul.f32 %v2213, %v3018
    %v3030 = vmul.f32 %v2214, %v3022
    %v3031 = vmul.f32 %v2215, %v3026
    %v3032 = vmul.f32 %v3028, %v2656
    %v3033 = vmul.f32 %v3029, %v2657
    %v3034 = vmul.f32 %v3030, %v2658
    %v3035 = vmul.f32 %v3031, %v2659
    %v3036 = vadd.f32 %v3008, %v3032
    %v3037 = vadd.f32 %v3009, %v3033
    %v3038 = vadd.f32 %v3010, %v3034
    %v3039 = vadd.f32 %v3011, %v3035
    %v3040 = vxor.u32 %v1215, 2147483648
    %v3041 = vxor.u32 %v1221, 2147483648
    %v3042 = vxor.u32 %v1227, 2147483648
    %v3043 = vxor.u32 %v1233, 2147483648
    %v3044 = vmul.f32 %v3040, 1.442695
    %v3045 = vpow.pop %v3044
    %v3046 = vmul.f32 %v3041, 1.442695
    %v3047 = vpow.pop %v3046
    %v3048 = vmul.f32 %v3042, 1.442695
    %v3049 = vpow.pop %v3048
    %v3050 = vmul.f32 %v3043, 1.442695
    %v3051 = vpow.pop %v3050
    %v3052 = vadd.f32 %v3045, 1.0
    %v3053 = vadd.f32 %v3047, 1.0
    %v3054 = vadd.f32 %v3049, 1.0
    %v3055 = vadd.f32 %v3051, 1.0
    %v3056 = vrcp.pop %v3052
    %v3057 = vmul.f32 1.0, %v3056
    %v3058 = vrcp.pop %v3053
    %v3059 = vmul.f32 1.0, %v3058
    %v3060 = vrcp.pop %v3054
    %v3061 = vmul.f32 1.0, %v3060
    %v3062 = vrcp.pop %v3055
    %v3063 = vmul.f32 1.0, %v3062
    %v3064 = vmul.f32 %v1215, %v3057
    %v3065 = vmul.f32 %v1221, %v3059
    %v3066 = vmul.f32 %v1227, %v3061
    %v3067 = vmul.f32 %v1233, %v3063
    %3069 = vset.pattern.permute.xlu0 0
    %3070 = vperm.xlu0 %3069, %v1258
    %v3071 = vpop.permute.xlu0 %3070
    %3074 = vset.pattern.permute.xlu0 0
    %3075 = vperm.xlu0 %3074, %v1259
    %v3076 = vpop.permute.xlu0 %3075
    %vm3078 = vcmask 785408
    %v3080 = vsel %vm3078, %v1254, 0
    %v3083 = vsel %vm3078, %v1257, 0
    %3085 = vmatprep.subr.mxu0 0.0
    %v3086 = vand.u32 %v2787, 4294901760
    %3087 = vmatpush1.msra.mxu0 %v3086
    %3088 = vmatprep.subr.mxu0 0.0
    %v3089 = vand.u32 %v2786, 4294901760
    %3090 = vmatpush1.msra.mxu0 %v3089
    %3091 = vmatprep.subr.mxu0 0.0
    %v3092 = vand.u32 %v2785, 4294901760
    %3093 = vmatpush1.msra.mxu0 %v3092
    %3094 = vmatprep.subr.mxu0 0.0
    %v3095 = vand.u32 %v2784, 4294901760
    %3096 = vmatpush1.msra.mxu0 %v3095
    %3097 = vmatprep.subr.mxu0 0.0
    %v3098 = vand.u32 %v2751, 4294901760
    %3099 = vmatpush1.msra.mxu0 %v3098
    %3100 = vmatprep.subr.mxu0 0.0
    %v3101 = vand.u32 %v2750, 4294901760
    %3102 = vmatpush1.msra.mxu0 %v3101
    %3103 = vmatprep.subr.mxu0 0.0
    %v3104 = vand.u32 %v2749, 4294901760
    %3105 = vmatpush1.msra.mxu0 %v3104
    %3106 = vmatprep.subr.mxu0 0.0
    %v3107 = vand.u32 %v2748, 4294901760
    %3108 = vmatpush1.msra.mxu0 %v3107
    %3109 = vmatprep.subr.mxu0 0.0
    %v3110 = vand.u32 %v2715, 4294901760
    %3111 = vmatpush1.msra.mxu0 %v3110
    %3112 = vmatprep.subr.mxu0 0.0
    %v3113 = vand.u32 %v2714, 4294901760
    %3114 = vmatpush1.msra.mxu0 %v3113
    %3115 = vmatprep.subr.mxu0 0.0
    %v3116 = vand.u32 %v2713, 4294901760
    %3117 = vmatpush1.msra.mxu0 %v3116
    %3118 = vmatprep.subr.mxu0 0.0
    %v3119 = vand.u32 %v2712, 4294901760
    %3120 = vmatpush1.msra.mxu0 %v3119
    %3121 = vmatprep.subr.mxu0 0.0
    %v3122 = vand.u32 %v3067, 4294901760
    %3123 = vmatpush1.msra.mxu0 %v3122
    %3124 = vmatprep.subr.mxu0 0.0
    %v3125 = vand.u32 %v3066, 4294901760
    %3126 = vmatpush1.msra.mxu0 %v3125
    %3127 = vmatprep.subr.mxu0 0.0
    %v3128 = vand.u32 %v3065, 4294901760
    %3129 = vmatpush1.msra.mxu0 %v3128
    %3130 = vmatprep.subr.mxu0 0.0
    %v3131 = vand.u32 %v3064, 4294901760
    %3132 = vmatpush1.msra.mxu0 %v3131
    %3133 = vmatprep.subr.mxu0 0.0
    %v3134 = vand.u32 %v2931, 4294901760
    %3135 = vmatpush2.msra.mxu0 %v3134
    %3136 = vmatprep.subr.mxu0 0.0
    %v3137 = vand.u32 %v2930, 4294901760
    %3138 = vmatpush2.msra.mxu0 %v3137
    %3139 = vmatprep.subr.mxu0 0.0
    %v3140 = vand.u32 %v2929, 4294901760
    %3141 = vmatpush2.msra.mxu0 %v3140
    %3142 = vmatprep.subr.mxu0 0.0
    %v3143 = vand.u32 %v2928, 4294901760
    %3144 = vmatpush2.msra.mxu0 %v3143
    %3145 = vmatprep.subr.mxu0 0.0
    %v3146 = vand.u32 %v2895, 4294901760
    %3147 = vmatpush2.msra.mxu0 %v3146
    %3148 = vmatprep.subr.mxu0 0.0
    %v3149 = vand.u32 %v2894, 4294901760
    %3150 = vmatpush2.msra.mxu0 %v3149
    %3151 = vmatprep.subr.mxu0 0.0
    %v3152 = vand.u32 %v2893, 4294901760
    %3153 = vmatpush2.msra.mxu0 %v3152
    %3154 = vmatprep.subr.mxu0 0.0
    %v3155 = vand.u32 %v2892, 4294901760
    %3156 = vmatpush2.msra.mxu0 %v3155
    %3157 = vmatprep.subr.mxu0 0.0
    %v3158 = vand.u32 %v2859, 4294901760
    %3159 = vmatpush2.msra.mxu0 %v3158
    %3160 = vmatprep.subr.mxu0 0.0
    %v3161 = vand.u32 %v2858, 4294901760
    %3162 = vmatpush2.msra.mxu0 %v3161
    %3163 = vmatprep.subr.mxu0 0.0
    %v3164 = vand.u32 %v2857, 4294901760
    %3165 = vmatpush2.msra.mxu0 %v3164
    %3166 = vmatprep.subr.mxu0 0.0
    %v3167 = vand.u32 %v2856, 4294901760
    %3168 = vmatpush2.msra.mxu0 %v3167
    %3169 = vmatprep.subr.mxu0 0.0
    %v3170 = vand.u32 %v2823, 4294901760
    %3171 = vmatpush2.msra.mxu0 %v3170
    %3172 = vmatprep.subr.mxu0 0.0
    %v3173 = vand.u32 %v2822, 4294901760
    %3174 = vmatpush2.msra.mxu0 %v3173
    %3175 = vmatprep.subr.mxu0 0.0
    %v3176 = vand.u32 %v2821, 4294901760
    %3177 = vmatpush2.msra.mxu0 %v3176
    %3178 = vmatprep.subr.mxu0 0.0
    %v3179 = vand.u32 %v2820, 4294901760
    %3180 = vmatpush2.msra.mxu0 %v3179
    %v3181 = vand.u32 %v1253, 4294901760
    %v3182 = vsub.f32 %v1253, %v3181
    %v3183 = vand.u32 %v3182, 4294901760
    %v3184 = vsub.f32 %v3182, %v3183
    %v3185 = vand.u32 %v3184, 4294901760
    %3186 = vmatprep.mubr.f32.mxu0 %v3185
    %v3187 = vand.u32 %v1252, 4294901760
    %v3188 = vsub.f32 %v1252, %v3187
    %v3189 = vand.u32 %v3188, 4294901760
    %v3190 = vsub.f32 %v3188, %v3189
    %v3191 = vand.u32 %v3190, 4294901760
    %3192 = vmatmul.mubr.f32.gmra.mxu0 %v3191
    %v3193 = vpop.f32.mrf.mxu0
    %v3194 = vadd.f32 %v3071, %v3193
    %v3195 = vpop.f32.mrf.mxu0
    %v3196 = vand.u32 %v1256, 4294901760
    %v3197 = vsub.f32 %v1256, %v3196
    %v3198 = vand.u32 %v3197, 4294901760
    %v3199 = vsub.f32 %v3197, %v3198
    %v3200 = vand.u32 %v3199, 4294901760
    %3201 = vmatprep.mubr.f32.mxu0 %v3200
    %v3202 = vand.u32 %v1255, 4294901760
    %v3203 = vsub.f32 %v1255, %v3202
    %v3204 = vand.u32 %v3203, 4294901760
    %v3205 = vsub.f32 %v3203, %v3204
    %v3206 = vand.u32 %v3205, 4294901760
    %3207 = vmatmul.mubr.f32.gmra.mxu0 %v3206
    %v3208 = vpop.f32.mrf.mxu0
    %v3209 = vadd.f32 %v3076, %v3208
    %v3210 = vpop.f32.mrf.mxu0
    %3211 = vdwg.mxu0
    %3212 = vmatprep.subr.mxu0 0.0
    %v3213 = vand.u32 %v2787, 4294901760
    %v3214 = vsub.f32 %v2787, %v3213
    %v3215 = vand.u32 %v3214, 4294901760
    %v3216 = vsub.f32 %v3214, %v3215
    %v3217 = vand.u32 %v3216, 4294901760
    %3218 = vmatpush1.msra.mxu0 %v3217
    %3219 = vmatprep.subr.mxu0 0.0
    %v3220 = vand.u32 %v2786, 4294901760
    %v3221 = vsub.f32 %v2786, %v3220
    %v3222 = vand.u32 %v3221, 4294901760
    %v3223 = vsub.f32 %v3221, %v3222
    %v3224 = vand.u32 %v3223, 4294901760
    %3225 = vmatpush1.msra.mxu0 %v3224
    %3226 = vmatprep.subr.mxu0 0.0
    %v3227 = vand.u32 %v2785, 4294901760
    %v3228 = vsub.f32 %v2785, %v3227
    %v3229 = vand.u32 %v3228, 4294901760
    %v3230 = vsub.f32 %v3228, %v3229
    %v3231 = vand.u32 %v3230, 4294901760
    %3232 = vmatpush1.msra.mxu0 %v3231
    %3233 = vmatprep.subr.mxu0 0.0
    %v3234 = vand.u32 %v2784, 4294901760
    %v3235 = vsub.f32 %v2784, %v3234
    %v3236 = vand.u32 %v3235, 4294901760
    %v3237 = vsub.f32 %v3235, %v3236
    %v3238 = vand.u32 %v3237, 4294901760
    %3239 = vmatpush1.msra.mxu0 %v3238
    %3240 = vmatprep.subr.mxu0 0.0
    %v3241 = vand.u32 %v2751, 4294901760
    %v3242 = vsub.f32 %v2751, %v3241
    %v3243 = vand.u32 %v3242, 4294901760
    %v3244 = vsub.f32 %v3242, %v3243
    %v3245 = vand.u32 %v3244, 4294901760
    %3246 = vmatpush1.msra.mxu0 %v3245
    %3247 = vmatprep.subr.mxu0 0.0
    %v3248 = vand.u32 %v2750, 4294901760
    %v3249 = vsub.f32 %v2750, %v3248
    %v3250 = vand.u32 %v3249, 4294901760
    %v3251 = vsub.f32 %v3249, %v3250
    %v3252 = vand.u32 %v3251, 4294901760
    %3253 = vmatpush1.msra.mxu0 %v3252
    %3254 = vmatprep.subr.mxu0 0.0
    %v3255 = vand.u32 %v2749, 4294901760
    %v3256 = vsub.f32 %v2749, %v3255
    %v3257 = vand.u32 %v3256, 4294901760
    %v3258 = vsub.f32 %v3256, %v3257
    %v3259 = vand.u32 %v3258, 4294901760
    %3260 = vmatpush1.msra.mxu0 %v3259
    %3261 = vmatprep.subr.mxu0 0.0
    %v3262 = vand.u32 %v2748, 4294901760
    %v3263 = vsub.f32 %v2748, %v3262
    %v3264 = vand.u32 %v3263, 4294901760
    %v3265 = vsub.f32 %v3263, %v3264
    %v3266 = vand.u32 %v3265, 4294901760
    %3267 = vmatpush1.msra.mxu0 %v3266
    %3268 = vmatprep.subr.mxu0 0.0
    %v3269 = vand.u32 %v2715, 4294901760
    %v3270 = vsub.f32 %v2715, %v3269
    %v3271 = vand.u32 %v3270, 4294901760
    %v3272 = vsub.f32 %v3270, %v3271
    %v3273 = vand.u32 %v3272, 4294901760
    %3274 = vmatpush1.msra.mxu0 %v3273
    %3275 = vmatprep.subr.mxu0 0.0
    %v3276 = vand.u32 %v2714, 4294901760
    %v3277 = vsub.f32 %v2714, %v3276
    %v3278 = vand.u32 %v3277, 4294901760
    %v3279 = vsub.f32 %v3277, %v3278
    %v3280 = vand.u32 %v3279, 4294901760
    %3281 = vmatpush1.msra.mxu0 %v3280
    %3282 = vmatprep.subr.mxu0 0.0
    %v3283 = vand.u32 %v2713, 4294901760
    %v3284 = vsub.f32 %v2713, %v3283
    %v3285 = vand.u32 %v3284, 4294901760
    %v3286 = vsub.f32 %v3284, %v3285
    %v3287 = vand.u32 %v3286, 4294901760
    %3288 = vmatpush1.msra.mxu0 %v3287
    %3289 = vmatprep.subr.mxu0 0.0
    %v3290 = vand.u32 %v2712, 4294901760
    %v3291 = vsub.f32 %v2712, %v3290
    %v3292 = vand.u32 %v3291, 4294901760
    %v3293 = vsub.f32 %v3291, %v3292
    %v3294 = vand.u32 %v3293, 4294901760
    %3295 = vmatpush1.msra.mxu0 %v3294
    %3296 = vmatprep.subr.mxu0 0.0
    %v3297 = vand.u32 %v3067, 4294901760
    %v3298 = vsub.f32 %v3067, %v3297
    %v3299 = vand.u32 %v3298, 4294901760
    %v3300 = vsub.f32 %v3298, %v3299
    %v3301 = vand.u32 %v3300, 4294901760
    %3302 = vmatpush1.msra.mxu0 %v3301
    %3303 = vmatprep.subr.mxu0 0.0
    %v3304 = vand.u32 %v3066, 4294901760
    %v3305 = vsub.f32 %v3066, %v3304
    %v3306 = vand.u32 %v3305, 4294901760
    %v3307 = vsub.f32 %v3305, %v3306
    %v3308 = vand.u32 %v3307, 4294901760
    %3309 = vmatpush1.msra.mxu0 %v3308
    %3310 = vmatprep.subr.mxu0 0.0
    %v3311 = vand.u32 %v3065, 4294901760
    %v3312 = vsub.f32 %v3065, %v3311
    %v3313 = vand.u32 %v3312, 4294901760
    %v3314 = vsub.f32 %v3312, %v3313
    %v3315 = vand.u32 %v3314, 4294901760
    %3316 = vmatpush1.msra.mxu0 %v3315
    %3317 = vmatprep.subr.mxu0 0.0
    %v3318 = vand.u32 %v3064, 4294901760
    %v3319 = vsub.f32 %v3064, %v3318
    %v3320 = vand.u32 %v3319, 4294901760
    %v3321 = vsub.f32 %v3319, %v3320
    %v3322 = vand.u32 %v3321, 4294901760
    %3323 = vmatpush1.msra.mxu0 %v3322
    %3324 = vmatprep.subr.mxu0 0.0
    %v3325 = vand.u32 %v2931, 4294901760
    %v3326 = vsub.f32 %v2931, %v3325
    %v3327 = vand.u32 %v3326, 4294901760
    %v3328 = vsub.f32 %v3326, %v3327
    %v3329 = vand.u32 %v3328, 4294901760
    %3330 = vmatpush2.msra.mxu0 %v3329
    %3331 = vmatprep.subr.mxu0 0.0
    %v3332 = vand.u32 %v2930, 4294901760
    %v3333 = vsub.f32 %v2930, %v3332
    %v3334 = vand.u32 %v3333, 4294901760
    %v3335 = vsub.f32 %v3333, %v3334
    %v3336 = vand.u32 %v3335, 4294901760
    %3337 = vmatpush2.msra.mxu0 %v3336
    %3338 = vmatprep.subr.mxu0 0.0
    %v3339 = vand.u32 %v2929, 4294901760
    %v3340 = vsub.f32 %v2929, %v3339
    %v3341 = vand.u32 %v3340, 4294901760
    %v3342 = vsub.f32 %v3340, %v3341
    %v3343 = vand.u32 %v3342, 4294901760
    %3344 = vmatpush2.msra.mxu0 %v3343
    %3345 = vmatprep.subr.mxu0 0.0
    %v3346 = vand.u32 %v2928, 4294901760
    %v3347 = vsub.f32 %v2928, %v3346
    %v3348 = vand.u32 %v3347, 4294901760
    %v3349 = vsub.f32 %v3347, %v3348
    %v3350 = vand.u32 %v3349, 4294901760
    %3351 = vmatpush2.msra.mxu0 %v3350
    %3352 = vmatprep.subr.mxu0 0.0
    %v3353 = vand.u32 %v2895, 4294901760
    %v3354 = vsub.f32 %v2895, %v3353
    %v3355 = vand.u32 %v3354, 4294901760
    %v3356 = vsub.f32 %v3354, %v3355
    %v3357 = vand.u32 %v3356, 4294901760
    %3358 = vmatpush2.msra.mxu0 %v3357
    %3359 = vmatprep.subr.mxu0 0.0
    %v3360 = vand.u32 %v2894, 4294901760
    %v3361 = vsub.f32 %v2894, %v3360
    %v3362 = vand.u32 %v3361, 4294901760
    %v3363 = vsub.f32 %v3361, %v3362
    %v3364 = vand.u32 %v3363, 4294901760
    %3365 = vmatpush2.msra.mxu0 %v3364
    %3366 = vmatprep.subr.mxu0 0.0
    %v3367 = vand.u32 %v2893, 4294901760
    %v3368 = vsub.f32 %v2893, %v3367
    %v3369 = vand.u32 %v3368, 4294901760
    %v3370 = vsub.f32 %v3368, %v3369
    %v3371 = vand.u32 %v3370, 4294901760
    %3372 = vmatpush2.msra.mxu0 %v3371
    %3373 = vmatprep.subr.mxu0 0.0
    %v3374 = vand.u32 %v2892, 4294901760
    %v3375 = vsub.f32 %v2892, %v3374
    %v3376 = vand.u32 %v3375, 4294901760
    %v3377 = vsub.f32 %v3375, %v3376
    %v3378 = vand.u32 %v3377, 4294901760
    %3379 = vmatpush2.msra.mxu0 %v3378
    %3380 = vmatprep.subr.mxu0 0.0
    %v3381 = vand.u32 %v2859, 4294901760
    %v3382 = vsub.f32 %v2859, %v3381
    %v3383 = vand.u32 %v3382, 4294901760
    %v3384 = vsub.f32 %v3382, %v3383
    %v3385 = vand.u32 %v3384, 4294901760
    %3386 = vmatpush2.msra.mxu0 %v3385
    %3387 = vmatprep.subr.mxu0 0.0
    %v3388 = vand.u32 %v2858, 4294901760
    %v3389 = vsub.f32 %v2858, %v3388
    %v3390 = vand.u32 %v3389, 4294901760
    %v3391 = vsub.f32 %v3389, %v3390
    %v3392 = vand.u32 %v3391, 4294901760
    %3393 = vmatpush2.msra.mxu0 %v3392
    %3394 = vmatprep.subr.mxu0 0.0
    %v3395 = vand.u32 %v2857, 4294901760
    %v3396 = vsub.f32 %v2857, %v3395
    %v3397 = vand.u32 %v3396, 4294901760
    %v3398 = vsub.f32 %v3396, %v3397
    %v3399 = vand.u32 %v3398, 4294901760
    %3400 = vmatpush2.msra.mxu0 %v3399
    %3401 = vmatprep.subr.mxu0 0.0
    %v3402 = vand.u32 %v2856, 4294901760
    %v3403 = vsub.f32 %v2856, %v3402
    %v3404 = vand.u32 %v3403, 4294901760
    %v3405 = vsub.f32 %v3403, %v3404
    %v3406 = vand.u32 %v3405, 4294901760
    %3407 = vmatpush2.msra.mxu0 %v3406
    %3408 = vmatprep.subr.mxu0 0.0
    %v3409 = vand.u32 %v2823, 4294901760
    %v3410 = vsub.f32 %v2823, %v3409
    %v3411 = vand.u32 %v3410, 4294901760
    %v3412 = vsub.f32 %v3410, %v3411
    %v3413 = vand.u32 %v3412, 4294901760
    %3414 = vmatpush2.msra.mxu0 %v3413
    %3415 = vmatprep.subr.mxu0 0.0
    %v3416 = vand.u32 %v2822, 4294901760
    %v3417 = vsub.f32 %v2822, %v3416
    %v3418 = vand.u32 %v3417, 4294901760
    %v3419 = vsub.f32 %v3417, %v3418
    %v3420 = vand.u32 %v3419, 4294901760
    %3421 = vmatpush2.msra.mxu0 %v3420
    %3422 = vmatprep.subr.mxu0 0.0
    %v3423 = vand.u32 %v2821, 4294901760
    %v3424 = vsub.f32 %v2821, %v3423
    %v3425 = vand.u32 %v3424, 4294901760
    %v3426 = vsub.f32 %v3424, %v3425
    %v3427 = vand.u32 %v3426, 4294901760
    %3428 = vmatpush2.msra.mxu0 %v3427
    %3429 = vmatprep.subr.mxu0 0.0
    %v3430 = vand.u32 %v2820, 4294901760
    %v3431 = vsub.f32 %v2820, %v3430
    %v3432 = vand.u32 %v3431, 4294901760
    %v3433 = vsub.f32 %v3431, %v3432
    %v3434 = vand.u32 %v3433, 4294901760
    %3435 = vmatpush2.msra.mxu0 %v3434
    %v3436 = vand.u32 %v1253, 4294901760
    %3437 = vmatprep.mubr.f32.mxu0 %v3436
    %v3438 = vand.u32 %v1252, 4294901760
    %3439 = vmatmul.mubr.f32.gmra.mxu0 %v3438
    %v3440 = vpop.f32.mrf.mxu0
    %v3441 = vadd.f32 %v3194, %v3440
    %v3442 = vpop.f32.mrf.mxu0
    %v3443 = vand.u32 %v1256, 4294901760
    %3444 = vmatprep.mubr.f32.mxu0 %v3443
    %v3445 = vand.u32 %v1255, 4294901760
    %3446 = vmatmul.mubr.f32.gmra.mxu0 %v3445
    %v3447 = vpop.f32.mrf.mxu0
    %v3448 = vadd.f32 %v3209, %v3447
    %v3449 = vpop.f32.mrf.mxu0
    %3450 = vdwg.mxu0
    %3451 = vmatprep.subr.mxu0 0.0
    %v3452 = vand.u32 %v2787, 4294901760
    %v3453 = vsub.f32 %v2787, %v3452
    %3454 = vmatpush1.msra.mxu0 %v3453
    %3455 = vmatprep.subr.mxu0 0.0
    %v3456 = vand.u32 %v2786, 4294901760
    %v3457 = vsub.f32 %v2786, %v3456
    %3458 = vmatpush1.msra.mxu0 %v3457
    %3459 = vmatprep.subr.mxu0 0.0
    %v3460 = vand.u32 %v2785, 4294901760
    %v3461 = vsub.f32 %v2785, %v3460
    %3462 = vmatpush1.msra.mxu0 %v3461
    %3463 = vmatprep.subr.mxu0 0.0
    %v3464 = vand.u32 %v2784, 4294901760
    %v3465 = vsub.f32 %v2784, %v3464
    %3466 = vmatpush1.msra.mxu0 %v3465
    %3467 = vmatprep.subr.mxu0 0.0
    %v3468 = vand.u32 %v2751, 4294901760
    %v3469 = vsub.f32 %v2751, %v3468
    %3470 = vmatpush1.msra.mxu0 %v3469
    %3471 = vmatprep.subr.mxu0 0.0
    %v3472 = vand.u32 %v2750, 4294901760
    %v3473 = vsub.f32 %v2750, %v3472
    %3474 = vmatpush1.msra.mxu0 %v3473
    %3475 = vmatprep.subr.mxu0 0.0
    %v3476 = vand.u32 %v2749, 4294901760
    %v3477 = vsub.f32 %v2749, %v3476
    %3478 = vmatpush1.msra.mxu0 %v3477
    %3479 = vmatprep.subr.mxu0 0.0
    %v3480 = vand.u32 %v2748, 4294901760
    %v3481 = vsub.f32 %v2748, %v3480
    %3482 = vmatpush1.msra.mxu0 %v3481
    %3483 = vmatprep.subr.mxu0 0.0
    %v3484 = vand.u32 %v2715, 4294901760
    %v3485 = vsub.f32 %v2715, %v3484
    %3486 = vmatpush1.msra.mxu0 %v3485
    %3487 = vmatprep.subr.mxu0 0.0
    %v3488 = vand.u32 %v2714, 4294901760
    %v3489 = vsub.f32 %v2714, %v3488
    %3490 = vmatpush1.msra.mxu0 %v3489
    %3491 = vmatprep.subr.mxu0 0.0
    %v3492 = vand.u32 %v2713, 4294901760
    %v3493 = vsub.f32 %v2713, %v3492
    %3494 = vmatpush1.msra.mxu0 %v3493
    %3495 = vmatprep.subr.mxu0 0.0
    %v3496 = vand.u32 %v2712, 4294901760
    %v3497 = vsub.f32 %v2712, %v3496
    %3498 = vmatpush1.msra.mxu0 %v3497
    %3499 = vmatprep.subr.mxu0 0.0
    %v3500 = vand.u32 %v3067, 4294901760
    %v3501 = vsub.f32 %v3067, %v3500
    %3502 = vmatpush1.msra.mxu0 %v3501
    %3503 = vmatprep.subr.mxu0 0.0
    %v3504 = vand.u32 %v3066, 4294901760
    %v3505 = vsub.f32 %v3066, %v3504
    %3506 = vmatpush1.msra.mxu0 %v3505
    %3507 = vmatprep.subr.mxu0 0.0
    %v3508 = vand.u32 %v3065, 4294901760
    %v3509 = vsub.f32 %v3065, %v3508
    %3510 = vmatpush1.msra.mxu0 %v3509
    %3511 = vmatprep.subr.mxu0 0.0
    %v3512 = vand.u32 %v3064, 4294901760
    %v3513 = vsub.f32 %v3064, %v3512
    %3514 = vmatpush1.msra.mxu0 %v3513
    %3515 = vmatprep.subr.mxu0 0.0
    %v3516 = vand.u32 %v2931, 4294901760
    %v3517 = vsub.f32 %v2931, %v3516
    %3518 = vmatpush2.msra.mxu0 %v3517
    %3519 = vmatprep.subr.mxu0 0.0
    %v3520 = vand.u32 %v2930, 4294901760
    %v3521 = vsub.f32 %v2930, %v3520
    %3522 = vmatpush2.msra.mxu0 %v3521
    %3523 = vmatprep.subr.mxu0 0.0
    %v3524 = vand.u32 %v2929, 4294901760
    %v3525 = vsub.f32 %v2929, %v3524
    %3526 = vmatpush2.msra.mxu0 %v3525
    %3527 = vmatprep.subr.mxu0 0.0
    %v3528 = vand.u32 %v2928, 4294901760
    %v3529 = vsub.f32 %v2928, %v3528
    %3530 = vmatpush2.msra.mxu0 %v3529
    %3531 = vmatprep.subr.mxu0 0.0
    %v3532 = vand.u32 %v2895, 4294901760
    %v3533 = vsub.f32 %v2895, %v3532
    %3534 = vmatpush2.msra.mxu0 %v3533
    %3535 = vmatprep.subr.mxu0 0.0
    %v3536 = vand.u32 %v2894, 4294901760
    %v3537 = vsub.f32 %v2894, %v3536
    %3538 = vmatpush2.msra.mxu0 %v3537
    %3539 = vmatprep.subr.mxu0 0.0
    %v3540 = vand.u32 %v2893, 4294901760
    %v3541 = vsub.f32 %v2893, %v3540
    %3542 = vmatpush2.msra.mxu0 %v3541
    %3543 = vmatprep.subr.mxu0 0.0
    %v3544 = vand.u32 %v2892, 4294901760
    %v3545 = vsub.f32 %v2892, %v3544
    %3546 = vmatpush2.msra.mxu0 %v3545
    %3547 = vmatprep.subr.mxu0 0.0
    %v3548 = vand.u32 %v2859, 4294901760
    %v3549 = vsub.f32 %v2859, %v3548
    %3550 = vmatpush2.msra.mxu0 %v3549
    %3551 = vmatprep.subr.mxu0 0.0
    %v3552 = vand.u32 %v2858, 4294901760
    %v3553 = vsub.f32 %v2858, %v3552
    %3554 = vmatpush2.msra.mxu0 %v3553
    %3555 = vmatprep.subr.mxu0 0.0
    %v3556 = vand.u32 %v2857, 4294901760
    %v3557 = vsub.f32 %v2857, %v3556
    %3558 = vmatpush2.msra.mxu0 %v3557
    %3559 = vmatprep.subr.mxu0 0.0
    %v3560 = vand.u32 %v2856, 4294901760
    %v3561 = vsub.f32 %v2856, %v3560
    %3562 = vmatpush2.msra.mxu0 %v3561
    %3563 = vmatprep.subr.mxu0 0.0
    %v3564 = vand.u32 %v2823, 4294901760
    %v3565 = vsub.f32 %v2823, %v3564
    %3566 = vmatpush2.msra.mxu0 %v3565
    %3567 = vmatprep.subr.mxu0 0.0
    %v3568 = vand.u32 %v2822, 4294901760
    %v3569 = vsub.f32 %v2822, %v3568
    %3570 = vmatpush2.msra.mxu0 %v3569
    %3571 = vmatprep.subr.mxu0 0.0
    %v3572 = vand.u32 %v2821, 4294901760
    %v3573 = vsub.f32 %v2821, %v3572
    %3574 = vmatpush2.msra.mxu0 %v3573
    %3575 = vmatprep.subr.mxu0 0.0
    %v3576 = vand.u32 %v2820, 4294901760
    %v3577 = vsub.f32 %v2820, %v3576
    %3578 = vmatpush2.msra.mxu0 %v3577
    %v3579 = vand.u32 %v1253, 4294901760
    %v3580 = vsub.f32 %v1253, %v3579
    %3581 = vmatprep.mubr.f32.mxu0 %v3580
    %v3582 = vand.u32 %v1252, 4294901760
    %v3583 = vsub.f32 %v1252, %v3582
    %3584 = vmatmul.mubr.f32.gmra.mxu0 %v3583
    %v3585 = vpop.f32.mrf.mxu0
    %v3586 = vadd.f32 %v3441, %v3585
    %v3587 = vpop.f32.mrf.mxu0
    %v3588 = vand.u32 %v1256, 4294901760
    %v3589 = vsub.f32 %v1256, %v3588
    %3590 = vmatprep.mubr.f32.mxu0 %v3589
    %v3591 = vand.u32 %v1255, 4294901760
    %v3592 = vsub.f32 %v1255, %v3591
    %3593 = vmatmul.mubr.f32.gmra.mxu0 %v3592
    %v3594 = vpop.f32.mrf.mxu0
    %v3595 = vadd.f32 %v3448, %v3594
    %v3596 = vpop.f32.mrf.mxu0
    %3597 = vdwg.mxu0
    %3598 = vmatprep.subr.mxu0 0.0
    %v3599 = vand.u32 %v2787, 4294901760
    %3600 = vmatpush1.msra.mxu0 %v3599
    %3601 = vmatprep.subr.mxu0 0.0
    %v3602 = vand.u32 %v2786, 4294901760
    %3603 = vmatpush1.msra.mxu0 %v3602
    %3604 = vmatprep.subr.mxu0 0.0
    %v3605 = vand.u32 %v2785, 4294901760
    %3606 = vmatpush1.msra.mxu0 %v3605
    %3607 = vmatprep.subr.mxu0 0.0
    %v3608 = vand.u32 %v2784, 4294901760
    %3609 = vmatpush1.msra.mxu0 %v3608
    %3610 = vmatprep.subr.mxu0 0.0
    %v3611 = vand.u32 %v2751, 4294901760
    %3612 = vmatpush1.msra.mxu0 %v3611
    %3613 = vmatprep.subr.mxu0 0.0
    %v3614 = vand.u32 %v2750, 4294901760
    %3615 = vmatpush1.msra.mxu0 %v3614
    %3616 = vmatprep.subr.mxu0 0.0
    %v3617 = vand.u32 %v2749, 4294901760
    %3618 = vmatpush1.msra.mxu0 %v3617
    %3619 = vmatprep.subr.mxu0 0.0
    %v3620 = vand.u32 %v2748, 4294901760
    %3621 = vmatpush1.msra.mxu0 %v3620
    %3622 = vmatprep.subr.mxu0 0.0
    %v3623 = vand.u32 %v2715, 4294901760
    %3624 = vmatpush1.msra.mxu0 %v3623
    %3625 = vmatprep.subr.mxu0 0.0
    %v3626 = vand.u32 %v2714, 4294901760
    %3627 = vmatpush1.msra.mxu0 %v3626
    %3628 = vmatprep.subr.mxu0 0.0
    %v3629 = vand.u32 %v2713, 4294901760
    %3630 = vmatpush1.msra.mxu0 %v3629
    %3631 = vmatprep.subr.mxu0 0.0
    %v3632 = vand.u32 %v2712, 4294901760
    %3633 = vmatpush1.msra.mxu0 %v3632
    %3634 = vmatprep.subr.mxu0 0.0
    %v3635 = vand.u32 %v3067, 4294901760
    %3636 = vmatpush1.msra.mxu0 %v3635
    %3637 = vmatprep.subr.mxu0 0.0
    %v3638 = vand.u32 %v3066, 4294901760
    %3639 = vmatpush1.msra.mxu0 %v3638
    %3640 = vmatprep.subr.mxu0 0.0
    %v3641 = vand.u32 %v3065, 4294901760
    %3642 = vmatpush1.msra.mxu0 %v3641
    %3643 = vmatprep.subr.mxu0 0.0
    %v3644 = vand.u32 %v3064, 4294901760
    %3645 = vmatpush1.msra.mxu0 %v3644
    %3646 = vmatprep.subr.mxu0 0.0
    %v3647 = vand.u32 %v2931, 4294901760
    %3648 = vmatpush2.msra.mxu0 %v3647
    %3649 = vmatprep.subr.mxu0 0.0
    %v3650 = vand.u32 %v2930, 4294901760
    %3651 = vmatpush2.msra.mxu0 %v3650
    %3652 = vmatprep.subr.mxu0 0.0
    %v3653 = vand.u32 %v2929, 4294901760
    %3654 = vmatpush2.msra.mxu0 %v3653
    %3655 = vmatprep.subr.mxu0 0.0
    %v3656 = vand.u32 %v2928, 4294901760
    %3657 = vmatpush2.msra.mxu0 %v3656
    %3658 = vmatprep.subr.mxu0 0.0
    %v3659 = vand.u32 %v2895, 4294901760
    %3660 = vmatpush2.msra.mxu0 %v3659
    %3661 = vmatprep.subr.mxu0 0.0
    %v3662 = vand.u32 %v2894, 4294901760
    %3663 = vmatpush2.msra.mxu0 %v3662
    %3664 = vmatprep.subr.mxu0 0.0
    %v3665 = vand.u32 %v2893, 4294901760
    %3666 = vmatpush2.msra.mxu0 %v3665
    %3667 = vmatprep.subr.mxu0 0.0
    %v3668 = vand.u32 %v2892, 4294901760
    %3669 = vmatpush2.msra.mxu0 %v3668
    %3670 = vmatprep.subr.mxu0 0.0
    %v3671 = vand.u32 %v2859, 4294901760
    %3672 = vmatpush2.msra.mxu0 %v3671
    %3673 = vmatprep.subr.mxu0 0.0
    %v3674 = vand.u32 %v2858, 4294901760
    %3675 = vmatpush2.msra.mxu0 %v3674
    %3676 = vmatprep.subr.mxu0 0.0
    %v3677 = vand.u32 %v2857, 4294901760
    %3678 = vmatpush2.msra.mxu0 %v3677
    %3679 = vmatprep.subr.mxu0 0.0
    %v3680 = vand.u32 %v2856, 4294901760
    %3681 = vmatpush2.msra.mxu0 %v3680
    %3682 = vmatprep.subr.mxu0 0.0
    %v3683 = vand.u32 %v2823, 4294901760
    %3684 = vmatpush2.msra.mxu0 %v3683
    %3685 = vmatprep.subr.mxu0 0.0
    %v3686 = vand.u32 %v2822, 4294901760
    %3687 = vmatpush2.msra.mxu0 %v3686
    %3688 = vmatprep.subr.mxu0 0.0
    %v3689 = vand.u32 %v2821, 4294901760
    %3690 = vmatpush2.msra.mxu0 %v3689
    %3691 = vmatprep.subr.mxu0 0.0
    %v3692 = vand.u32 %v2820, 4294901760
    %3693 = vmatpush2.msra.mxu0 %v3692
    %v3694 = vand.u32 %v1253, 4294901760
    %v3695 = vsub.f32 %v1253, %v3694
    %v3696 = vand.u32 %v3695, 4294901760
    %3697 = vmatprep.mubr.f32.mxu0 %v3696
    %v3698 = vand.u32 %v1252, 4294901760
    %v3699 = vsub.f32 %v1252, %v3698
    %v3700 = vand.u32 %v3699, 4294901760
    %3701 = vmatmul.mubr.f32.gmra.mxu0 %v3700
    %v3702 = vpop.f32.mrf.mxu0
    %v3703 = vadd.f32 %v3586, %v3702
    %v3704 = vpop.f32.mrf.mxu0
    %v3705 = vand.u32 %v1256, 4294901760
    %v3706 = vsub.f32 %v1256, %v3705
    %v3707 = vand.u32 %v3706, 4294901760
    %3708 = vmatprep.mubr.f32.mxu0 %v3707
    %v3709 = vand.u32 %v1255, 4294901760
    %v3710 = vsub.f32 %v1255, %v3709
    %v3711 = vand.u32 %v3710, 4294901760
    %3712 = vmatmul.mubr.f32.gmra.mxu0 %v3711
    %v3713 = vpop.f32.mrf.mxu0
    %v3714 = vadd.f32 %v3595, %v3713
    %v3715 = vpop.f32.mrf.mxu0
    %3716 = vdwg.mxu0
    %3717 = vmatprep.subr.mxu0 0.0
    %v3718 = vand.u32 %v2787, 4294901760
    %v3719 = vsub.f32 %v2787, %v3718
    %v3720 = vand.u32 %v3719, 4294901760
    %3721 = vmatpush1.msra.mxu0 %v3720
    %3722 = vmatprep.subr.mxu0 0.0
    %v3723 = vand.u32 %v2786, 4294901760
    %v3724 = vsub.f32 %v2786, %v3723
    %v3725 = vand.u32 %v3724, 4294901760
    %3726 = vmatpush1.msra.mxu0 %v3725
    %3727 = vmatprep.subr.mxu0 0.0
    %v3728 = vand.u32 %v2785, 4294901760
    %v3729 = vsub.f32 %v2785, %v3728
    %v3730 = vand.u32 %v3729, 4294901760
    %3731 = vmatpush1.msra.mxu0 %v3730
    %3732 = vmatprep.subr.mxu0 0.0
    %v3733 = vand.u32 %v2784, 4294901760
    %v3734 = vsub.f32 %v2784, %v3733
    %v3735 = vand.u32 %v3734, 4294901760
    %3736 = vmatpush1.msra.mxu0 %v3735
    %3737 = vmatprep.subr.mxu0 0.0
    %v3738 = vand.u32 %v2751, 4294901760
    %v3739 = vsub.f32 %v2751, %v3738
    %v3740 = vand.u32 %v3739, 4294901760
    %3741 = vmatpush1.msra.mxu0 %v3740
    %3742 = vmatprep.subr.mxu0 0.0
    %v3743 = vand.u32 %v2750, 4294901760
    %v3744 = vsub.f32 %v2750, %v3743
    %v3745 = vand.u32 %v3744, 4294901760
    %3746 = vmatpush1.msra.mxu0 %v3745
    %3747 = vmatprep.subr.mxu0 0.0
    %v3748 = vand.u32 %v2749, 4294901760
    %v3749 = vsub.f32 %v2749, %v3748
    %v3750 = vand.u32 %v3749, 4294901760
    %3751 = vmatpush1.msra.mxu0 %v3750
    %3752 = vmatprep.subr.mxu0 0.0
    %v3753 = vand.u32 %v2748, 4294901760
    %v3754 = vsub.f32 %v2748, %v3753
    %v3755 = vand.u32 %v3754, 4294901760
    %3756 = vmatpush1.msra.mxu0 %v3755
    %3757 = vmatprep.subr.mxu0 0.0
    %v3758 = vand.u32 %v2715, 4294901760
    %v3759 = vsub.f32 %v2715, %v3758
    %v3760 = vand.u32 %v3759, 4294901760
    %3761 = vmatpush1.msra.mxu0 %v3760
    %3762 = vmatprep.subr.mxu0 0.0
    %v3763 = vand.u32 %v2714, 4294901760
    %v3764 = vsub.f32 %v2714, %v3763
    %v3765 = vand.u32 %v3764, 4294901760
    %3766 = vmatpush1.msra.mxu0 %v3765
    %3767 = vmatprep.subr.mxu0 0.0
    %v3768 = vand.u32 %v2713, 4294901760
    %v3769 = vsub.f32 %v2713, %v3768
    %v3770 = vand.u32 %v3769, 4294901760
    %3771 = vmatpush1.msra.mxu0 %v3770
    %3772 = vmatprep.subr.mxu0 0.0
    %v3773 = vand.u32 %v2712, 4294901760
    %v3774 = vsub.f32 %v2712, %v3773
    %v3775 = vand.u32 %v3774, 4294901760
    %3776 = vmatpush1.msra.mxu0 %v3775
    %3777 = vmatprep.subr.mxu0 0.0
    %v3778 = vand.u32 %v3067, 4294901760
    %v3779 = vsub.f32 %v3067, %v3778
    %v3780 = vand.u32 %v3779, 4294901760
    %3781 = vmatpush1.msra.mxu0 %v3780
    %3782 = vmatprep.subr.mxu0 0.0
    %v3783 = vand.u32 %v3066, 4294901760
    %v3784 = vsub.f32 %v3066, %v3783
    %v3785 = vand.u32 %v3784, 4294901760
    %3786 = vmatpush1.msra.mxu0 %v3785
    %3787 = vmatprep.subr.mxu0 0.0
    %v3788 = vand.u32 %v3065, 4294901760
    %v3789 = vsub.f32 %v3065, %v3788
    %v3790 = vand.u32 %v3789, 4294901760
    %3791 = vmatpush1.msra.mxu0 %v3790
    %3792 = vmatprep.subr.mxu0 0.0
    %v3793 = vand.u32 %v3064, 4294901760
    %v3794 = vsub.f32 %v3064, %v3793
    %v3795 = vand.u32 %v3794, 4294901760
    %3796 = vmatpush1.msra.mxu0 %v3795
    %3797 = vmatprep.subr.mxu0 0.0
    %v3798 = vand.u32 %v2931, 4294901760
    %v3799 = vsub.f32 %v2931, %v3798
    %v3800 = vand.u32 %v3799, 4294901760
    %3801 = vmatpush2.msra.mxu0 %v3800
    %3802 = vmatprep.subr.mxu0 0.0
    %v3803 = vand.u32 %v2930, 4294901760
    %v3804 = vsub.f32 %v2930, %v3803
    %v3805 = vand.u32 %v3804, 4294901760
    %3806 = vmatpush2.msra.mxu0 %v3805
    %3807 = vmatprep.subr.mxu0 0.0
    %v3808 = vand.u32 %v2929, 4294901760
    %v3809 = vsub.f32 %v2929, %v3808
    %v3810 = vand.u32 %v3809, 4294901760
    %3811 = vmatpush2.msra.mxu0 %v3810
    %3812 = vmatprep.subr.mxu0 0.0
    %v3813 = vand.u32 %v2928, 4294901760
    %v3814 = vsub.f32 %v2928, %v3813
    %v3815 = vand.u32 %v3814, 4294901760
    %3816 = vmatpush2.msra.mxu0 %v3815
    %3817 = vmatprep.subr.mxu0 0.0
    %v3818 = vand.u32 %v2895, 4294901760
    %v3819 = vsub.f32 %v2895, %v3818
    %v3820 = vand.u32 %v3819, 4294901760
    %3821 = vmatpush2.msra.mxu0 %v3820
    %3822 = vmatprep.subr.mxu0 0.0
    %v3823 = vand.u32 %v2894, 4294901760
    %v3824 = vsub.f32 %v2894, %v3823
    %v3825 = vand.u32 %v3824, 4294901760
    %3826 = vmatpush2.msra.mxu0 %v3825
    %3827 = vmatprep.subr.mxu0 0.0
    %v3828 = vand.u32 %v2893, 4294901760
    %v3829 = vsub.f32 %v2893, %v3828
    %v3830 = vand.u32 %v3829, 4294901760
    %3831 = vmatpush2.msra.mxu0 %v3830
    %3832 = vmatprep.subr.mxu0 0.0
    %v3833 = vand.u32 %v2892, 4294901760
    %v3834 = vsub.f32 %v2892, %v3833
    %v3835 = vand.u32 %v3834, 4294901760
    %3836 = vmatpush2.msra.mxu0 %v3835
    %3837 = vmatprep.subr.mxu0 0.0
    %v3838 = vand.u32 %v2859, 4294901760
    %v3839 = vsub.f32 %v2859, %v3838
    %v3840 = vand.u32 %v3839, 4294901760
    %3841 = vmatpush2.msra.mxu0 %v3840
    %3842 = vmatprep.subr.mxu0 0.0
    %v3843 = vand.u32 %v2858, 4294901760
    %v3844 = vsub.f32 %v2858, %v3843
    %v3845 = vand.u32 %v3844, 4294901760
    %3846 = vmatpush2.msra.mxu0 %v3845
    %3847 = vmatprep.subr.mxu0 0.0
    %v3848 = vand.u32 %v2857, 4294901760
    %v3849 = vsub.f32 %v2857, %v3848
    %v3850 = vand.u32 %v3849, 4294901760
    %3851 = vmatpush2.msra.mxu0 %v3850
    %3852 = vmatprep.subr.mxu0 0.0
    %v3853 = vand.u32 %v2856, 4294901760
    %v3854 = vsub.f32 %v2856, %v3853
    %v3855 = vand.u32 %v3854, 4294901760
    %3856 = vmatpush2.msra.mxu0 %v3855
    %3857 = vmatprep.subr.mxu0 0.0
    %v3858 = vand.u32 %v2823, 4294901760
    %v3859 = vsub.f32 %v2823, %v3858
    %v3860 = vand.u32 %v3859, 4294901760
    %3861 = vmatpush2.msra.mxu0 %v3860
    %3862 = vmatprep.subr.mxu0 0.0
    %v3863 = vand.u32 %v2822, 4294901760
    %v3864 = vsub.f32 %v2822, %v3863
    %v3865 = vand.u32 %v3864, 4294901760
    %3866 = vmatpush2.msra.mxu0 %v3865
    %3867 = vmatprep.subr.mxu0 0.0
    %v3868 = vand.u32 %v2821, 4294901760
    %v3869 = vsub.f32 %v2821, %v3868
    %v3870 = vand.u32 %v3869, 4294901760
    %3871 = vmatpush2.msra.mxu0 %v3870
    %3872 = vmatprep.subr.mxu0 0.0
    %v3873 = vand.u32 %v2820, 4294901760
    %v3874 = vsub.f32 %v2820, %v3873
    %v3875 = vand.u32 %v3874, 4294901760
    %3876 = vmatpush2.msra.mxu0 %v3875
    %v3877 = vand.u32 %v1253, 4294901760
    %3878 = vmatprep.mubr.f32.mxu0 %v3877
    %v3879 = vand.u32 %v1252, 4294901760
    %3880 = vmatmul.mubr.f32.gmra.mxu0 %v3879
    %v3881 = vpop.f32.mrf.mxu0
    %v3882 = vadd.f32 %v3703, %v3881
    %v3883 = vpop.f32.mrf.mxu0
    %v3884 = vand.u32 %v1256, 4294901760
    %3885 = vmatprep.mubr.f32.mxu0 %v3884
    %v3886 = vand.u32 %v1255, 4294901760
    %3887 = vmatmul.mubr.f32.gmra.mxu0 %v3886
    %v3888 = vpop.f32.mrf.mxu0
    %v3889 = vadd.f32 %v3714, %v3888
    %v3890 = vpop.f32.mrf.mxu0
    %3891 = vdwg.mxu0
    %3892 = vmatprep.subr.mxu0 0.0
    %v3893 = vand.u32 %v2787, 4294901760
    %3894 = vmatpush1.msra.mxu0 %v3893
    %3895 = vmatprep.subr.mxu0 0.0
    %v3896 = vand.u32 %v2786, 4294901760
    %3897 = vmatpush1.msra.mxu0 %v3896
    %3898 = vmatprep.subr.mxu0 0.0
    %v3899 = vand.u32 %v2785, 4294901760
    %3900 = vmatpush1.msra.mxu0 %v3899
    %3901 = vmatprep.subr.mxu0 0.0
    %v3902 = vand.u32 %v2784, 4294901760
    %3903 = vmatpush1.msra.mxu0 %v3902
    %3904 = vmatprep.subr.mxu0 0.0
    %v3905 = vand.u32 %v2751, 4294901760
    %3906 = vmatpush1.msra.mxu0 %v3905
    %3907 = vmatprep.subr.mxu0 0.0
    %v3908 = vand.u32 %v2750, 4294901760
    %3909 = vmatpush1.msra.mxu0 %v3908
    %3910 = vmatprep.subr.mxu0 0.0
    %v3911 = vand.u32 %v2749, 4294901760
    %3912 = vmatpush1.msra.mxu0 %v3911
    %3913 = vmatprep.subr.mxu0 0.0
    %v3914 = vand.u32 %v2748, 4294901760
    %3915 = vmatpush1.msra.mxu0 %v3914
    %3916 = vmatprep.subr.mxu0 0.0
    %v3917 = vand.u32 %v2715, 4294901760
    %3918 = vmatpush1.msra.mxu0 %v3917
    %3919 = vmatprep.subr.mxu0 0.0
    %v3920 = vand.u32 %v2714, 4294901760
    %3921 = vmatpush1.msra.mxu0 %v3920
    %3922 = vmatprep.subr.mxu0 0.0
    %v3923 = vand.u32 %v2713, 4294901760
    %3924 = vmatpush1.msra.mxu0 %v3923
    %3925 = vmatprep.subr.mxu0 0.0
    %v3926 = vand.u32 %v2712, 4294901760
    %3927 = vmatpush1.msra.mxu0 %v3926
    %3928 = vmatprep.subr.mxu0 0.0
    %v3929 = vand.u32 %v3067, 4294901760
    %3930 = vmatpush1.msra.mxu0 %v3929
    %3931 = vmatprep.subr.mxu0 0.0
    %v3932 = vand.u32 %v3066, 4294901760
    %3933 = vmatpush1.msra.mxu0 %v3932
    %3934 = vmatprep.subr.mxu0 0.0
    %v3935 = vand.u32 %v3065, 4294901760
    %3936 = vmatpush1.msra.mxu0 %v3935
    %3937 = vmatprep.subr.mxu0 0.0
    %v3938 = vand.u32 %v3064, 4294901760
    %3939 = vmatpush1.msra.mxu0 %v3938
    %3940 = vmatprep.subr.mxu0 0.0
    %v3941 = vand.u32 %v2931, 4294901760
    %3942 = vmatpush2.msra.mxu0 %v3941
    %3943 = vmatprep.subr.mxu0 0.0
    %v3944 = vand.u32 %v2930, 4294901760
    %3945 = vmatpush2.msra.mxu0 %v3944
    %3946 = vmatprep.subr.mxu0 0.0
    %v3947 = vand.u32 %v2929, 4294901760
    %3948 = vmatpush2.msra.mxu0 %v3947
    %3949 = vmatprep.subr.mxu0 0.0
    %v3950 = vand.u32 %v2928, 4294901760
    %3951 = vmatpush2.msra.mxu0 %v3950
    %3952 = vmatprep.subr.mxu0 0.0
    %v3953 = vand.u32 %v2895, 4294901760
    %3954 = vmatpush2.msra.mxu0 %v3953
    %3955 = vmatprep.subr.mxu0 0.0
    %v3956 = vand.u32 %v2894, 4294901760
    %3957 = vmatpush2.msra.mxu0 %v3956
    %3958 = vmatprep.subr.mxu0 0.0
    %v3959 = vand.u32 %v2893, 4294901760
    %3960 = vmatpush2.msra.mxu0 %v3959
    %3961 = vmatprep.subr.mxu0 0.0
    %v3962 = vand.u32 %v2892, 4294901760
    %3963 = vmatpush2.msra.mxu0 %v3962
    %3964 = vmatprep.subr.mxu0 0.0
    %v3965 = vand.u32 %v2859, 4294901760
    %3966 = vmatpush2.msra.mxu0 %v3965
    %3967 = vmatprep.subr.mxu0 0.0
    %v3968 = vand.u32 %v2858, 4294901760
    %3969 = vmatpush2.msra.mxu0 %v3968
    %3970 = vmatprep.subr.mxu0 0.0
    %v3971 = vand.u32 %v2857, 4294901760
    %3972 = vmatpush2.msra.mxu0 %v3971
    %3973 = vmatprep.subr.mxu0 0.0
    %v3974 = vand.u32 %v2856, 4294901760
    %3975 = vmatpush2.msra.mxu0 %v3974
    %3976 = vmatprep.subr.mxu0 0.0
    %v3977 = vand.u32 %v2823, 4294901760
    %3978 = vmatpush2.msra.mxu0 %v3977
    %3979 = vmatprep.subr.mxu0 0.0
    %v3980 = vand.u32 %v2822, 4294901760
    %3981 = vmatpush2.msra.mxu0 %v3980
    %3982 = vmatprep.subr.mxu0 0.0
    %v3983 = vand.u32 %v2821, 4294901760
    %3984 = vmatpush2.msra.mxu0 %v3983
    %3985 = vmatprep.subr.mxu0 0.0
    %v3986 = vand.u32 %v2820, 4294901760
    %3987 = vmatpush2.msra.mxu0 %v3986
    %v3988 = vand.u32 %v1253, 4294901760
    %3989 = vmatprep.mubr.f32.mxu0 %v3988
    %v3990 = vand.u32 %v1252, 4294901760
    %3991 = vmatmul.mubr.f32.gmra.mxu0 %v3990
    %v3992 = vpop.f32.mrf.mxu0
    %v3993 = vadd.f32 %v3882, %v3992
    %v3994 = vpop.f32.mrf.mxu0
    %v3995 = vand.u32 %v1256, 4294901760
    %3996 = vmatprep.mubr.f32.mxu0 %v3995
    %v3997 = vand.u32 %v1255, 4294901760
    %3998 = vmatmul.mubr.f32.gmra.mxu0 %v3997
    %v3999 = vpop.f32.mrf.mxu0
    %v4000 = vadd.f32 %v3889, %v3999
    %v4001 = vpop.f32.mrf.mxu0
    %4002 = vdwg.mxu0
    %4003 = vmatprep.subr.mxu0 0.0
    %4004 = vmatpush1.msra.mxu0 0.0
    %4005 = vmatprep.subr.mxu0 0.0
    %4006 = vmatpush1.msra.mxu0 0.0
    %4007 = vmatprep.subr.mxu0 0.0
    %4008 = vmatpush1.msra.mxu0 0.0
    %4009 = vmatprep.subr.mxu0 0.0
    %4010 = vmatpush1.msra.mxu0 0.0
    %4011 = vmatprep.subr.mxu0 0.0
    %v4012 = vand.u32 %v3039, 4294901760
    %4013 = vmatpush1.msra.mxu0 %v4012
    %4014 = vmatprep.subr.mxu0 0.0
    %v4015 = vand.u32 %v3038, 4294901760
    %4016 = vmatpush1.msra.mxu0 %v4015
    %4017 = vmatprep.subr.mxu0 0.0
    %v4018 = vand.u32 %v3037, 4294901760
    %4019 = vmatpush1.msra.mxu0 %v4018
    %4020 = vmatprep.subr.mxu0 0.0
    %v4021 = vand.u32 %v3036, 4294901760
    %4022 = vmatpush1.msra.mxu0 %v4021
    %4023 = vmatprep.subr.mxu0 0.0
    %v4024 = vand.u32 %v3003, 4294901760
    %4025 = vmatpush1.msra.mxu0 %v4024
    %4026 = vmatprep.subr.mxu0 0.0
    %v4027 = vand.u32 %v3002, 4294901760
    %4028 = vmatpush1.msra.mxu0 %v4027
    %4029 = vmatprep.subr.mxu0 0.0
    %v4030 = vand.u32 %v3001, 4294901760
    %4031 = vmatpush1.msra.mxu0 %v4030
    %4032 = vmatprep.subr.mxu0 0.0
    %v4033 = vand.u32 %v3000, 4294901760
    %4034 = vmatpush1.msra.mxu0 %v4033
    %4035 = vmatprep.subr.mxu0 0.0
    %v4036 = vand.u32 %v2967, 4294901760
    %4037 = vmatpush1.msra.mxu0 %v4036
    %4038 = vmatprep.subr.mxu0 0.0
    %v4039 = vand.u32 %v2966, 4294901760
    %4040 = vmatpush1.msra.mxu0 %v4039
    %4041 = vmatprep.subr.mxu0 0.0
    %v4042 = vand.u32 %v2965, 4294901760
    %4043 = vmatpush1.msra.mxu0 %v4042
    %4044 = vmatprep.subr.mxu0 0.0
    %v4045 = vand.u32 %v2964, 4294901760
    %4046 = vmatpush1.msra.mxu0 %v4045
    %4047 = vmatprep.subr.mxu0 0.0
    %4048 = vmatpush2.msra.mxu0 0.0
    %4049 = vmatprep.subr.mxu0 0.0
    %4050 = vmatpush2.msra.mxu0 0.0
    %4051 = vmatprep.subr.mxu0 0.0
    %4052 = vmatpush2.msra.mxu0 0.0
    %4053 = vmatprep.subr.mxu0 0.0
    %4054 = vmatpush2.msra.mxu0 0.0
    %4055 = vmatprep.subr.mxu0 0.0
    %4056 = vmatpush2.msra.mxu0 0.0
    %4057 = vmatprep.subr.mxu0 0.0
    %4058 = vmatpush2.msra.mxu0 0.0
    %4059 = vmatprep.subr.mxu0 0.0
    %4060 = vmatpush2.msra.mxu0 0.0
    %4061 = vmatprep.subr.mxu0 0.0
    %4062 = vmatpush2.msra.mxu0 0.0
    %4063 = vmatprep.subr.mxu0 0.0
    %4064 = vmatpush2.msra.mxu0 0.0
    %4065 = vmatprep.subr.mxu0 0.0
    %4066 = vmatpush2.msra.mxu0 0.0
    %4067 = vmatprep.subr.mxu0 0.0
    %4068 = vmatpush2.msra.mxu0 0.0
    %4069 = vmatprep.subr.mxu0 0.0
    %4070 = vmatpush2.msra.mxu0 0.0
    %4071 = vmatprep.subr.mxu0 0.0
    %4072 = vmatpush2.msra.mxu0 0.0
    %4073 = vmatprep.subr.mxu0 0.0
    %4074 = vmatpush2.msra.mxu0 0.0
    %4075 = vmatprep.subr.mxu0 0.0
    %4076 = vmatpush2.msra.mxu0 0.0
    %4077 = vmatprep.subr.mxu0 0.0
    %4078 = vmatpush2.msra.mxu0 0.0
    %4079 = vmatprep.mubr.f32.mxu0 0.0
    %v4080 = vand.u32 %v3080, 4294901760
    %v4081 = vsub.f32 %v3080, %v4080
    %v4082 = vand.u32 %v4081, 4294901760
    %v4083 = vsub.f32 %v4081, %v4082
    %v4084 = vand.u32 %v4083, 4294901760
    %4085 = vmatmul.mubr.f32.gmra.mxu0 %v4084
    %v4086 = vpop.f32.mrf.mxu0
    %v4087 = vadd.f32 %v3993, %v4086
    %v4088 = vpop.f32.mrf.mxu0
    %4089 = vmatprep.mubr.f32.mxu0 0.0
    %v4090 = vand.u32 %v3083, 4294901760
    %v4091 = vsub.f32 %v3083, %v4090
    %v4092 = vand.u32 %v4091, 4294901760
    %v4093 = vsub.f32 %v4091, %v4092
    %v4094 = vand.u32 %v4093, 4294901760
    %4095 = vmatmul.mubr.f32.gmra.mxu0 %v4094
    %v4096 = vpop.f32.mrf.mxu0
    %v4097 = vadd.f32 %v4000, %v4096
    %v4098 = vpop.f32.mrf.mxu0
    %4099 = vdwg.mxu0
    %4100 = vmatprep.subr.mxu0 0.0
    %4101 = vmatpush1.msra.mxu0 0.0
    %4102 = vmatprep.subr.mxu0 0.0
    %4103 = vmatpush1.msra.mxu0 0.0
    %4104 = vmatprep.subr.mxu0 0.0
    %4105 = vmatpush1.msra.mxu0 0.0
    %4106 = vmatprep.subr.mxu0 0.0
    %4107 = vmatpush1.msra.mxu0 0.0
    %4108 = vmatprep.subr.mxu0 0.0
    %v4109 = vand.u32 %v3039, 4294901760
    %v4110 = vsub.f32 %v3039, %v4109
    %v4111 = vand.u32 %v4110, 4294901760
    %v4112 = vsub.f32 %v4110, %v4111
    %v4113 = vand.u32 %v4112, 4294901760
    %4114 = vmatpush1.msra.mxu0 %v4113
    %4115 = vmatprep.subr.mxu0 0.0
    %v4116 = vand.u32 %v3038, 4294901760
    %v4117 = vsub.f32 %v3038, %v4116
    %v4118 = vand.u32 %v4117, 4294901760
    %v4119 = vsub.f32 %v4117, %v4118
    %v4120 = vand.u32 %v4119, 4294901760
    %4121 = vmatpush1.msra.mxu0 %v4120
    %4122 = vmatprep.subr.mxu0 0.0
    %v4123 = vand.u32 %v3037, 4294901760
    %v4124 = vsub.f32 %v3037, %v4123
    %v4125 = vand.u32 %v4124, 4294901760
    %v4126 = vsub.f32 %v4124, %v4125
    %v4127 = vand.u32 %v4126, 4294901760
    %4128 = vmatpush1.msra.mxu0 %v4127
    %4129 = vmatprep.subr.mxu0 0.0
    %v4130 = vand.u32 %v3036, 4294901760
    %v4131 = vsub.f32 %v3036, %v4130
    %v4132 = vand.u32 %v4131, 4294901760
    %v4133 = vsub.f32 %v4131, %v4132
    %v4134 = vand.u32 %v4133, 4294901760
    %4135 = vmatpush1.msra.mxu0 %v4134
    %4136 = vmatprep.subr.mxu0 0.0
    %v4137 = vand.u32 %v3003, 4294901760
    %v4138 = vsub.f32 %v3003, %v4137
    %v4139 = vand.u32 %v4138, 4294901760
    %v4140 = vsub.f32 %v4138, %v4139
    %v4141 = vand.u32 %v4140, 4294901760
    %4142 = vmatpush1.msra.mxu0 %v4141
    %4143 = vmatprep.subr.mxu0 0.0
    %v4144 = vand.u32 %v3002, 4294901760
    %v4145 = vsub.f32 %v3002, %v4144
    %v4146 = vand.u32 %v4145, 4294901760
    %v4147 = vsub.f32 %v4145, %v4146
    %v4148 = vand.u32 %v4147, 4294901760
    %4149 = vmatpush1.msra.mxu0 %v4148
    %4150 = vmatprep.subr.mxu0 0.0
    %v4151 = vand.u32 %v3001, 4294901760
    %v4152 = vsub.f32 %v3001, %v4151
    %v4153 = vand.u32 %v4152, 4294901760
    %v4154 = vsub.f32 %v4152, %v4153
    %v4155 = vand.u32 %v4154, 4294901760
    %4156 = vmatpush1.msra.mxu0 %v4155
    %4157 = vmatprep.subr.mxu0 0.0
    %v4158 = vand.u32 %v3000, 4294901760
    %v4159 = vsub.f32 %v3000, %v4158
    %v4160 = vand.u32 %v4159, 4294901760
    %v4161 = vsub.f32 %v4159, %v4160
    %v4162 = vand.u32 %v4161, 4294901760
    %4163 = vmatpush1.msra.mxu0 %v4162
    %4164 = vmatprep.subr.mxu0 0.0
    %v4165 = vand.u32 %v2967, 4294901760
    %v4166 = vsub.f32 %v2967, %v4165
    %v4167 = vand.u32 %v4166, 4294901760
    %v4168 = vsub.f32 %v4166, %v4167
    %v4169 = vand.u32 %v4168, 4294901760
    %4170 = vmatpush1.msra.mxu0 %v4169
    %4171 = vmatprep.subr.mxu0 0.0
    %v4172 = vand.u32 %v2966, 4294901760
    %v4173 = vsub.f32 %v2966, %v4172
    %v4174 = vand.u32 %v4173, 4294901760
    %v4175 = vsub.f32 %v4173, %v4174
    %v4176 = vand.u32 %v4175, 4294901760
    %4177 = vmatpush1.msra.mxu0 %v4176
    %4178 = vmatprep.subr.mxu0 0.0
    %v4179 = vand.u32 %v2965, 4294901760
    %v4180 = vsub.f32 %v2965, %v4179
    %v4181 = vand.u32 %v4180, 4294901760
    %v4182 = vsub.f32 %v4180, %v4181
    %v4183 = vand.u32 %v4182, 4294901760
    %4184 = vmatpush1.msra.mxu0 %v4183
    %4185 = vmatprep.subr.mxu0 0.0
    %v4186 = vand.u32 %v2964, 4294901760
    %v4187 = vsub.f32 %v2964, %v4186
    %v4188 = vand.u32 %v4187, 4294901760
    %v4189 = vsub.f32 %v4187, %v4188
    %v4190 = vand.u32 %v4189, 4294901760
    %4191 = vmatpush1.msra.mxu0 %v4190
    %4192 = vmatprep.subr.mxu0 0.0
    %4193 = vmatpush2.msra.mxu0 0.0
    %4194 = vmatprep.subr.mxu0 0.0
    %4195 = vmatpush2.msra.mxu0 0.0
    %4196 = vmatprep.subr.mxu0 0.0
    %4197 = vmatpush2.msra.mxu0 0.0
    %4198 = vmatprep.subr.mxu0 0.0
    %4199 = vmatpush2.msra.mxu0 0.0
    %4200 = vmatprep.subr.mxu0 0.0
    %4201 = vmatpush2.msra.mxu0 0.0
    %4202 = vmatprep.subr.mxu0 0.0
    %4203 = vmatpush2.msra.mxu0 0.0
    %4204 = vmatprep.subr.mxu0 0.0
    %4205 = vmatpush2.msra.mxu0 0.0
    %4206 = vmatprep.subr.mxu0 0.0
    %4207 = vmatpush2.msra.mxu0 0.0
    %4208 = vmatprep.subr.mxu0 0.0
    %4209 = vmatpush2.msra.mxu0 0.0
    %4210 = vmatprep.subr.mxu0 0.0
    %4211 = vmatpush2.msra.mxu0 0.0
    %4212 = vmatprep.subr.mxu0 0.0
    %4213 = vmatpush2.msra.mxu0 0.0
    %4214 = vmatprep.subr.mxu0 0.0
    %4215 = vmatpush2.msra.mxu0 0.0
    %4216 = vmatprep.subr.mxu0 0.0
    %4217 = vmatpush2.msra.mxu0 0.0
    %4218 = vmatprep.subr.mxu0 0.0
    %4219 = vmatpush2.msra.mxu0 0.0
    %4220 = vmatprep.subr.mxu0 0.0
    %4221 = vmatpush2.msra.mxu0 0.0
    %4222 = vmatprep.subr.mxu0 0.0
    %4223 = vmatpush2.msra.mxu0 0.0
    %4224 = vmatprep.mubr.f32.mxu0 0.0
    %v4225 = vand.u32 %v3080, 4294901760
    %4226 = vmatmul.mubr.f32.gmra.mxu0 %v4225
    %v4227 = vpop.f32.mrf.mxu0
    %v4228 = vadd.f32 %v4087, %v4227
    %v4229 = vpop.f32.mrf.mxu0
    %4230 = vmatprep.mubr.f32.mxu0 0.0
    %v4231 = vand.u32 %v3083, 4294901760
    %4232 = vmatmul.mubr.f32.gmra.mxu0 %v4231
    %v4233 = vpop.f32.mrf.mxu0
    %v4234 = vadd.f32 %v4097, %v4233
    %v4235 = vpop.f32.mrf.mxu0
    %4236 = vdwg.mxu0
    %4237 = vmatprep.subr.mxu0 0.0
    %4238 = vmatpush1.msra.mxu0 0.0
    %4239 = vmatprep.subr.mxu0 0.0
    %4240 = vmatpush1.msra.mxu0 0.0
    %4241 = vmatprep.subr.mxu0 0.0
    %4242 = vmatpush1.msra.mxu0 0.0
    %4243 = vmatprep.subr.mxu0 0.0
    %4244 = vmatpush1.msra.mxu0 0.0
    %4245 = vmatprep.subr.mxu0 0.0
    %v4246 = vand.u32 %v3039, 4294901760
    %v4247 = vsub.f32 %v3039, %v4246
    %4248 = vmatpush1.msra.mxu0 %v4247
    %4249 = vmatprep.subr.mxu0 0.0
    %v4250 = vand.u32 %v3038, 4294901760
    %v4251 = vsub.f32 %v3038, %v4250
    %4252 = vmatpush1.msra.mxu0 %v4251
    %4253 = vmatprep.subr.mxu0 0.0
    %v4254 = vand.u32 %v3037, 4294901760
    %v4255 = vsub.f32 %v3037, %v4254
    %4256 = vmatpush1.msra.mxu0 %v4255
    %4257 = vmatprep.subr.mxu0 0.0
    %v4258 = vand.u32 %v3036, 4294901760
    %v4259 = vsub.f32 %v3036, %v4258
    %4260 = vmatpush1.msra.mxu0 %v4259
    %4261 = vmatprep.subr.mxu0 0.0
    %v4262 = vand.u32 %v3003, 4294901760
    %v4263 = vsub.f32 %v3003, %v4262
    %4264 = vmatpush1.msra.mxu0 %v4263
    %4265 = vmatprep.subr.mxu0 0.0
    %v4266 = vand.u32 %v3002, 4294901760
    %v4267 = vsub.f32 %v3002, %v4266
    %4268 = vmatpush1.msra.mxu0 %v4267
    %4269 = vmatprep.subr.mxu0 0.0
    %v4270 = vand.u32 %v3001, 4294901760
    %v4271 = vsub.f32 %v3001, %v4270
    %4272 = vmatpush1.msra.mxu0 %v4271
    %4273 = vmatprep.subr.mxu0 0.0
    %v4274 = vand.u32 %v3000, 4294901760
    %v4275 = vsub.f32 %v3000, %v4274
    %4276 = vmatpush1.msra.mxu0 %v4275
    %4277 = vmatprep.subr.mxu0 0.0
    %v4278 = vand.u32 %v2967, 4294901760
    %v4279 = vsub.f32 %v2967, %v4278
    %4280 = vmatpush1.msra.mxu0 %v4279
    %4281 = vmatprep.subr.mxu0 0.0
    %v4282 = vand.u32 %v2966, 4294901760
    %v4283 = vsub.f32 %v2966, %v4282
    %4284 = vmatpush1.msra.mxu0 %v4283
    %4285 = vmatprep.subr.mxu0 0.0
    %v4286 = vand.u32 %v2965, 4294901760
    %v4287 = vsub.f32 %v2965, %v4286
    %4288 = vmatpush1.msra.mxu0 %v4287
    %4289 = vmatprep.subr.mxu0 0.0
    %v4290 = vand.u32 %v2964, 4294901760
    %v4291 = vsub.f32 %v2964, %v4290
    %4292 = vmatpush1.msra.mxu0 %v4291
    %4293 = vmatprep.subr.mxu0 0.0
    %4294 = vmatpush2.msra.mxu0 0.0
    %4295 = vmatprep.subr.mxu0 0.0
    %4296 = vmatpush2.msra.mxu0 0.0
    %4297 = vmatprep.subr.mxu0 0.0
    %4298 = vmatpush2.msra.mxu0 0.0
    %4299 = vmatprep.subr.mxu0 0.0
    %4300 = vmatpush2.msra.mxu0 0.0
    %4301 = vmatprep.subr.mxu0 0.0
    %4302 = vmatpush2.msra.mxu0 0.0
    %4303 = vmatprep.subr.mxu0 0.0
    %4304 = vmatpush2.msra.mxu0 0.0
    %4305 = vmatprep.subr.mxu0 0.0
    %4306 = vmatpush2.msra.mxu0 0.0
    %4307 = vmatprep.subr.mxu0 0.0
    %4308 = vmatpush2.msra.mxu0 0.0
    %4309 = vmatprep.subr.mxu0 0.0
    %4310 = vmatpush2.msra.mxu0 0.0
    %4311 = vmatprep.subr.mxu0 0.0
    %4312 = vmatpush2.msra.mxu0 0.0
    %4313 = vmatprep.subr.mxu0 0.0
    %4314 = vmatpush2.msra.mxu0 0.0
    %4315 = vmatprep.subr.mxu0 0.0
    %4316 = vmatpush2.msra.mxu0 0.0
    %4317 = vmatprep.subr.mxu0 0.0
    %4318 = vmatpush2.msra.mxu0 0.0
    %4319 = vmatprep.subr.mxu0 0.0
    %4320 = vmatpush2.msra.mxu0 0.0
    %4321 = vmatprep.subr.mxu0 0.0
    %4322 = vmatpush2.msra.mxu0 0.0
    %4323 = vmatprep.subr.mxu0 0.0
    %4324 = vmatpush2.msra.mxu0 0.0
    %4325 = vmatprep.mubr.f32.mxu0 0.0
    %v4326 = vand.u32 %v3080, 4294901760
    %v4327 = vsub.f32 %v3080, %v4326
    %4328 = vmatmul.mubr.f32.gmra.mxu0 %v4327
    %v4329 = vpop.f32.mrf.mxu0
    %v4330 = vadd.f32 %v4228, %v4329
    %v4331 = vpop.f32.mrf.mxu0
    %4332 = vmatprep.mubr.f32.mxu0 0.0
    %v4333 = vand.u32 %v3083, 4294901760
    %v4334 = vsub.f32 %v3083, %v4333
    %4335 = vmatmul.mubr.f32.gmra.mxu0 %v4334
    %v4336 = vpop.f32.mrf.mxu0
    %v4337 = vadd.f32 %v4234, %v4336
    %v4338 = vpop.f32.mrf.mxu0
    %4339 = vdwg.mxu0
    %4340 = vmatprep.subr.mxu0 0.0
    %4341 = vmatpush1.msra.mxu0 0.0
    %4342 = vmatprep.subr.mxu0 0.0
    %4343 = vmatpush1.msra.mxu0 0.0
    %4344 = vmatprep.subr.mxu0 0.0
    %4345 = vmatpush1.msra.mxu0 0.0
    %4346 = vmatprep.subr.mxu0 0.0
    %4347 = vmatpush1.msra.mxu0 0.0
    %4348 = vmatprep.subr.mxu0 0.0
    %v4349 = vand.u32 %v3039, 4294901760
    %4350 = vmatpush1.msra.mxu0 %v4349
    %4351 = vmatprep.subr.mxu0 0.0
    %v4352 = vand.u32 %v3038, 4294901760
    %4353 = vmatpush1.msra.mxu0 %v4352
    %4354 = vmatprep.subr.mxu0 0.0
    %v4355 = vand.u32 %v3037, 4294901760
    %4356 = vmatpush1.msra.mxu0 %v4355
    %4357 = vmatprep.subr.mxu0 0.0
    %v4358 = vand.u32 %v3036, 4294901760
    %4359 = vmatpush1.msra.mxu0 %v4358
    %4360 = vmatprep.subr.mxu0 0.0
    %v4361 = vand.u32 %v3003, 4294901760
    %4362 = vmatpush1.msra.mxu0 %v4361
    %4363 = vmatprep.subr.mxu0 0.0
    %v4364 = vand.u32 %v3002, 4294901760
    %4365 = vmatpush1.msra.mxu0 %v4364
    %4366 = vmatprep.subr.mxu0 0.0
    %v4367 = vand.u32 %v3001, 4294901760
    %4368 = vmatpush1.msra.mxu0 %v4367
    %4369 = vmatprep.subr.mxu0 0.0
    %v4370 = vand.u32 %v3000, 4294901760
    %4371 = vmatpush1.msra.mxu0 %v4370
    %4372 = vmatprep.subr.mxu0 0.0
    %v4373 = vand.u32 %v2967, 4294901760
    %4374 = vmatpush1.msra.mxu0 %v4373
    %4375 = vmatprep.subr.mxu0 0.0
    %v4376 = vand.u32 %v2966, 4294901760
    %4377 = vmatpush1.msra.mxu0 %v4376
    %4378 = vmatprep.subr.mxu0 0.0
    %v4379 = vand.u32 %v2965, 4294901760
    %4380 = vmatpush1.msra.mxu0 %v4379
    %4381 = vmatprep.subr.mxu0 0.0
    %v4382 = vand.u32 %v2964, 4294901760
    %4383 = vmatpush1.msra.mxu0 %v4382
    %4384 = vmatprep.subr.mxu0 0.0
    %4385 = vmatpush2.msra.mxu0 0.0
    %4386 = vmatprep.subr.mxu0 0.0
    %4387 = vmatpush2.msra.mxu0 0.0
    %4388 = vmatprep.subr.mxu0 0.0
    %4389 = vmatpush2.msra.mxu0 0.0
    %4390 = vmatprep.subr.mxu0 0.0
    %4391 = vmatpush2.msra.mxu0 0.0
    %4392 = vmatprep.subr.mxu0 0.0
    %4393 = vmatpush2.msra.mxu0 0.0
    %4394 = vmatprep.subr.mxu0 0.0
    %4395 = vmatpush2.msra.mxu0 0.0
    %4396 = vmatprep.subr.mxu0 0.0
    %4397 = vmatpush2.msra.mxu0 0.0
    %4398 = vmatprep.subr.mxu0 0.0
    %4399 = vmatpush2.msra.mxu0 0.0
    %4400 = vmatprep.subr.mxu0 0.0
    %4401 = vmatpush2.msra.mxu0 0.0
    %4402 = vmatprep.subr.mxu0 0.0
    %4403 = vmatpush2.msra.mxu0 0.0
    %4404 = vmatprep.subr.mxu0 0.0
    %4405 = vmatpush2.msra.mxu0 0.0
    %4406 = vmatprep.subr.mxu0 0.0
    %4407 = vmatpush2.msra.mxu0 0.0
    %4408 = vmatprep.subr.mxu0 0.0
    %4409 = vmatpush2.msra.mxu0 0.0
    %4410 = vmatprep.subr.mxu0 0.0
    %4411 = vmatpush2.msra.mxu0 0.0
    %4412 = vmatprep.subr.mxu0 0.0
    %4413 = vmatpush2.msra.mxu0 0.0
    %4414 = vmatprep.subr.mxu0 0.0
    %4415 = vmatpush2.msra.mxu0 0.0
    %4416 = vmatprep.mubr.f32.mxu0 0.0
    %v4417 = vand.u32 %v3080, 4294901760
    %v4418 = vsub.f32 %v3080, %v4417
    %v4419 = vand.u32 %v4418, 4294901760
    %4420 = vmatmul.mubr.f32.gmra.mxu0 %v4419
    %v4421 = vpop.f32.mrf.mxu0
    %v4422 = vadd.f32 %v4330, %v4421
    %v4423 = vpop.f32.mrf.mxu0
    %4424 = vmatprep.mubr.f32.mxu0 0.0
    %v4425 = vand.u32 %v3083, 4294901760
    %v4426 = vsub.f32 %v3083, %v4425
    %v4427 = vand.u32 %v4426, 4294901760
    %4428 = vmatmul.mubr.f32.gmra.mxu0 %v4427
    %v4429 = vpop.f32.mrf.mxu0
    %v4430 = vadd.f32 %v4337, %v4429
    %v4431 = vpop.f32.mrf.mxu0
    %4432 = vdwg.mxu0
    %4433 = vmatprep.subr.mxu0 0.0
    %4434 = vmatpush1.msra.mxu0 0.0
    %4435 = vmatprep.subr.mxu0 0.0
    %4436 = vmatpush1.msra.mxu0 0.0
    %4437 = vmatprep.subr.mxu0 0.0
    %4438 = vmatpush1.msra.mxu0 0.0
    %4439 = vmatprep.subr.mxu0 0.0
    %4440 = vmatpush1.msra.mxu0 0.0
    %4441 = vmatprep.subr.mxu0 0.0
    %v4442 = vand.u32 %v3039, 4294901760
    %v4443 = vsub.f32 %v3039, %v4442
    %v4444 = vand.u32 %v4443, 4294901760
    %4445 = vmatpush1.msra.mxu0 %v4444
    %4446 = vmatprep.subr.mxu0 0.0
    %v4447 = vand.u32 %v3038, 4294901760
    %v4448 = vsub.f32 %v3038, %v4447
    %v4449 = vand.u32 %v4448, 4294901760
    %4450 = vmatpush1.msra.mxu0 %v4449
    %4451 = vmatprep.subr.mxu0 0.0
    %v4452 = vand.u32 %v3037, 4294901760
    %v4453 = vsub.f32 %v3037, %v4452
    %v4454 = vand.u32 %v4453, 4294901760
    %4455 = vmatpush1.msra.mxu0 %v4454
    %4456 = vmatprep.subr.mxu0 0.0
    %v4457 = vand.u32 %v3036, 4294901760
    %v4458 = vsub.f32 %v3036, %v4457
    %v4459 = vand.u32 %v4458, 4294901760
    %4460 = vmatpush1.msra.mxu0 %v4459
    %4461 = vmatprep.subr.mxu0 0.0
    %v4462 = vand.u32 %v3003, 4294901760
    %v4463 = vsub.f32 %v3003, %v4462
    %v4464 = vand.u32 %v4463, 4294901760
    %4465 = vmatpush1.msra.mxu0 %v4464
    %4466 = vmatprep.subr.mxu0 0.0
    %v4467 = vand.u32 %v3002, 4294901760
    %v4468 = vsub.f32 %v3002, %v4467
    %v4469 = vand.u32 %v4468, 4294901760
    %4470 = vmatpush1.msra.mxu0 %v4469
    %4471 = vmatprep.subr.mxu0 0.0
    %v4472 = vand.u32 %v3001, 4294901760
    %v4473 = vsub.f32 %v3001, %v4472
    %v4474 = vand.u32 %v4473, 4294901760
    %4475 = vmatpush1.msra.mxu0 %v4474
    %4476 = vmatprep.subr.mxu0 0.0
    %v4477 = vand.u32 %v3000, 4294901760
    %v4478 = vsub.f32 %v3000, %v4477
    %v4479 = vand.u32 %v4478, 4294901760
    %4480 = vmatpush1.msra.mxu0 %v4479
    %4481 = vmatprep.subr.mxu0 0.0
    %v4482 = vand.u32 %v2967, 4294901760
    %v4483 = vsub.f32 %v2967, %v4482
    %v4484 = vand.u32 %v4483, 4294901760
    %4485 = vmatpush1.msra.mxu0 %v4484
    %4486 = vmatprep.subr.mxu0 0.0
    %v4487 = vand.u32 %v2966, 4294901760
    %v4488 = vsub.f32 %v2966, %v4487
    %v4489 = vand.u32 %v4488, 4294901760
    %4490 = vmatpush1.msra.mxu0 %v4489
    %4491 = vmatprep.subr.mxu0 0.0
    %v4492 = vand.u32 %v2965, 4294901760
    %v4493 = vsub.f32 %v2965, %v4492
    %v4494 = vand.u32 %v4493, 4294901760
    %4495 = vmatpush1.msra.mxu0 %v4494
    %4496 = vmatprep.subr.mxu0 0.0
    %v4497 = vand.u32 %v2964, 4294901760
    %v4498 = vsub.f32 %v2964, %v4497
    %v4499 = vand.u32 %v4498, 4294901760
    %4500 = vmatpush1.msra.mxu0 %v4499
    %4501 = vmatprep.subr.mxu0 0.0
    %4502 = vmatpush2.msra.mxu0 0.0
    %4503 = vmatprep.subr.mxu0 0.0
    %4504 = vmatpush2.msra.mxu0 0.0
    %4505 = vmatprep.subr.mxu0 0.0
    %4506 = vmatpush2.msra.mxu0 0.0
    %4507 = vmatprep.subr.mxu0 0.0
    %4508 = vmatpush2.msra.mxu0 0.0
    %4509 = vmatprep.subr.mxu0 0.0
    %4510 = vmatpush2.msra.mxu0 0.0
    %4511 = vmatprep.subr.mxu0 0.0
    %4512 = vmatpush2.msra.mxu0 0.0
    %4513 = vmatprep.subr.mxu0 0.0
    %4514 = vmatpush2.msra.mxu0 0.0
    %4515 = vmatprep.subr.mxu0 0.0
    %4516 = vmatpush2.msra.mxu0 0.0
    %4517 = vmatprep.subr.mxu0 0.0
    %4518 = vmatpush2.msra.mxu0 0.0
    %4519 = vmatprep.subr.mxu0 0.0
    %4520 = vmatpush2.msra.mxu0 0.0
    %4521 = vmatprep.subr.mxu0 0.0
    %4522 = vmatpush2.msra.mxu0 0.0
    %4523 = vmatprep.subr.mxu0 0.0
    %4524 = vmatpush2.msra.mxu0 0.0
    %4525 = vmatprep.subr.mxu0 0.0
    %4526 = vmatpush2.msra.mxu0 0.0
    %4527 = vmatprep.subr.mxu0 0.0
    %4528 = vmatpush2.msra.mxu0 0.0
    %4529 = vmatprep.subr.mxu0 0.0
    %4530 = vmatpush2.msra.mxu0 0.0
    %4531 = vmatprep.subr.mxu0 0.0
    %4532 = vmatpush2.msra.mxu0 0.0
    %4533 = vmatprep.mubr.f32.mxu0 0.0
    %v4534 = vand.u32 %v3080, 4294901760
    %4535 = vmatmul.mubr.f32.gmra.mxu0 %v4534
    %v4536 = vpop.f32.mrf.mxu0
    %v4537 = vadd.f32 %v4422, %v4536
    %v4538 = vpop.f32.mrf.mxu0
    %4539 = vmatprep.mubr.f32.mxu0 0.0
    %v4540 = vand.u32 %v3083, 4294901760
    %4541 = vmatmul.mubr.f32.gmra.mxu0 %v4540
    %v4542 = vpop.f32.mrf.mxu0
    %v4543 = vadd.f32 %v4430, %v4542
    %v4544 = vpop.f32.mrf.mxu0
    %4545 = vdwg.mxu0
    %4546 = vmatprep.subr.mxu0 0.0
    %4547 = vmatpush1.msra.mxu0 0.0
    %4548 = vmatprep.subr.mxu0 0.0
    %4549 = vmatpush1.msra.mxu0 0.0
    %4550 = vmatprep.subr.mxu0 0.0
    %4551 = vmatpush1.msra.mxu0 0.0
    %4552 = vmatprep.subr.mxu0 0.0
    %4553 = vmatpush1.msra.mxu0 0.0
    %4554 = vmatprep.subr.mxu0 0.0
    %v4555 = vand.u32 %v3039, 4294901760
    %4556 = vmatpush1.msra.mxu0 %v4555
    %4557 = vmatprep.subr.mxu0 0.0
    %v4558 = vand.u32 %v3038, 4294901760
    %4559 = vmatpush1.msra.mxu0 %v4558
    %4560 = vmatprep.subr.mxu0 0.0
    %v4561 = vand.u32 %v3037, 4294901760
    %4562 = vmatpush1.msra.mxu0 %v4561
    %4563 = vmatprep.subr.mxu0 0.0
    %v4564 = vand.u32 %v3036, 4294901760
    %4565 = vmatpush1.msra.mxu0 %v4564
    %4566 = vmatprep.subr.mxu0 0.0
    %v4567 = vand.u32 %v3003, 4294901760
    %4568 = vmatpush1.msra.mxu0 %v4567
    %4569 = vmatprep.subr.mxu0 0.0
    %v4570 = vand.u32 %v3002, 4294901760
    %4571 = vmatpush1.msra.mxu0 %v4570
    %4572 = vmatprep.subr.mxu0 0.0
    %v4573 = vand.u32 %v3001, 4294901760
    %4574 = vmatpush1.msra.mxu0 %v4573
    %4575 = vmatprep.subr.mxu0 0.0
    %v4576 = vand.u32 %v3000, 4294901760
    %4577 = vmatpush1.msra.mxu0 %v4576
    %4578 = vmatprep.subr.mxu0 0.0
    %v4579 = vand.u32 %v2967, 4294901760
    %4580 = vmatpush1.msra.mxu0 %v4579
    %4581 = vmatprep.subr.mxu0 0.0
    %v4582 = vand.u32 %v2966, 4294901760
    %4583 = vmatpush1.msra.mxu0 %v4582
    %4584 = vmatprep.subr.mxu0 0.0
    %v4585 = vand.u32 %v2965, 4294901760
    %4586 = vmatpush1.msra.mxu0 %v4585
    %4587 = vmatprep.subr.mxu0 0.0
    %v4588 = vand.u32 %v2964, 4294901760
    %4589 = vmatpush1.msra.mxu0 %v4588
    %4590 = vmatprep.subr.mxu0 0.0
    %4591 = vmatpush2.msra.mxu0 0.0
    %4592 = vmatprep.subr.mxu0 0.0
    %4593 = vmatpush2.msra.mxu0 0.0
    %4594 = vmatprep.subr.mxu0 0.0
    %4595 = vmatpush2.msra.mxu0 0.0
    %4596 = vmatprep.subr.mxu0 0.0
    %4597 = vmatpush2.msra.mxu0 0.0
    %4598 = vmatprep.subr.mxu0 0.0
    %4599 = vmatpush2.msra.mxu0 0.0
    %4600 = vmatprep.subr.mxu0 0.0
    %4601 = vmatpush2.msra.mxu0 0.0
    %4602 = vmatprep.subr.mxu0 0.0
    %4603 = vmatpush2.msra.mxu0 0.0
    %4604 = vmatprep.subr.mxu0 0.0
    %4605 = vmatpush2.msra.mxu0 0.0
    %4606 = vmatprep.subr.mxu0 0.0
    %4607 = vmatpush2.msra.mxu0 0.0
    %4608 = vmatprep.subr.mxu0 0.0
    %4609 = vmatpush2.msra.mxu0 0.0
    %4610 = vmatprep.subr.mxu0 0.0
    %4611 = vmatpush2.msra.mxu0 0.0
    %4612 = vmatprep.subr.mxu0 0.0
    %4613 = vmatpush2.msra.mxu0 0.0
    %4614 = vmatprep.subr.mxu0 0.0
    %4615 = vmatpush2.msra.mxu0 0.0
    %4616 = vmatprep.subr.mxu0 0.0
    %4617 = vmatpush2.msra.mxu0 0.0
    %4618 = vmatprep.subr.mxu0 0.0
    %4619 = vmatpush2.msra.mxu0 0.0
    %4620 = vmatprep.subr.mxu0 0.0
    %4621 = vmatpush2.msra.mxu0 0.0
    %4622 = vmatprep.mubr.f32.mxu0 0.0
    %v4623 = vand.u32 %v3080, 4294901760
    %4624 = vmatmul.mubr.f32.gmra.mxu0 %v4623
    %v4625 = vpop.f32.mrf.mxu0
    %v4626 = vadd.f32 %v4537, %v4625
    %v4627 = vpop.f32.mrf.mxu0
    %4628 = vmatprep.mubr.f32.mxu0 0.0
    %v4629 = vand.u32 %v3083, 4294901760
    %4630 = vmatmul.mubr.f32.gmra.mxu0 %v4629
    %v4631 = vpop.f32.mrf.mxu0
    %v4632 = vadd.f32 %v4543, %v4631
    %v4633 = vpop.f32.mrf.mxu0
    %4634 = vdwg.mxu0
    %4635 = vst [vmem:[#allocation2] sm:$0xff] %v4626
    %4636 = vst [vmem:[#allocation2 + $0x8] sm:$0xff] %v4632
    // Predicated region
    $region38: #{tpu_custom_call.1} parent=1 // pred_check
      _
    $region39: #{tpu_custom_call.1} parent=1 // pred_check_branch
      %4638 = sbr.rel (0) target = $region41
    $region40: #{tpu_custom_call.1} parent=1 // pred_region
      %s4640 = ssub.s32 256, 256
      %4641 = vsyncadd [#allocation3], %s4640
      %s4642 = sshll.u32 [#allocation2], 4
      %s4643 = int_to_ptr.vmem [resolvable:$true] %s4642
      %4648 = dma.vmem_to_hbm [thread:$0]  %s4643, 256, %s9, [#allocation3], 128, 128, 8
    $region41: #{tpu_custom_call.1} parent=1 // pred_fallthru
      _
    // Predicated region
    $region42: #{tpu_custom_call.1} parent=1 // pred_check
      _
    $region43: #{tpu_custom_call.1} parent=1 // pred_check_branch
      %4650 = sbr.rel (0) target = $region45
    $region44: #{tpu_custom_call.1} parent=1 // pred_region
      %4651 = dma.done [#allocation3], 256
    $region45: #{tpu_custom_call.1} parent=1 // pred_fallthru
      _
    %4652 = vsyncpa [#allocation3], 1

</llo_original>
